<compile_context>
chip_gen: v5e
topology: v5e:2x2
jax: 0.10.0
libtpu: 0.0.40
codegen_flags: <defaults>
</compile_context>

<pallas_src>
import jax
import jax.numpy as jnp
from jax.experimental import pallas as pl
from jax.experimental.pallas import tpu as pltpu

OBS_DIM = 8        # input_shape = (8,)
FC1_DIMS = 1024
FC2_DIMS = 512
OUT_DIMS = 1
TILE_B = 256       # fills the 256-wide v6e/v7x MXU; default batch -> grid=(1,)


def critic_kernel(x_ref, w1_ref, b1_ref, w2_ref, b2_ref, w3_ref, b3_ref, out_ref):
    # fc1 + ReLU (bf16 x bf16 MXU matmul, f32 accumulation).  K=8 underfills the MXU
    # but fc1 is <2% of the FLOPs and the MXU slot has slack -> keep it there.
    x = x_ref[...].astype(jnp.bfloat16)
    h1 = jnp.dot(x, w1_ref[...], preferred_element_type=jnp.float32)
    h1 = jnp.maximum(h1 + b1_ref[...], 0.0)
    # fc2 + ReLU
    h2 = jnp.dot(h1.astype(jnp.bfloat16), w2_ref[...],
                 preferred_element_type=jnp.float32)
    h2 = jnp.maximum(h2 + b2_ref[...], 0.0)
    # fc3 (value head, no activation): (1, 512) @ (512, tile_b) -> (1, tile_b) f32 row,
    # written lane-dense (unmasked vst) instead of a (tile_b, 1) masked column.
    v = jnp.dot(w3_ref[...], h2.T, preferred_element_type=jnp.float32)
    out_ref[...] = (v + b3_ref[...]).astype(out_ref.dtype)


def critic_forward(x, w1, b1, w2, b2, w3, b3, *, tile_b=TILE_B):
    B = x.shape[0]
    # v7x: keep f32 intermediates (h1: tile_b*1024*4 B, h2: tile_b*512*4 B) comfortably
    # inside the 32 MiB scoped / 64 MiB physical VMEM budget.
    tile_b = min(tile_b, 2048)
    assert tile_b % 128 == 0, "tile_b must be lane-aligned (multiple of 128)"

    n_tiles = pl.cdiv(B, tile_b)
    if n_tiles > 1 and n_tiles % 2 == 1:
        n_tiles += 1            # even tile count -> v7x's 2 TCs split the grid evenly
    Bp = n_tiles * tile_b
    if Bp != B:
        x = jnp.pad(x, ((0, Bp - B), (0, 0)))

    def resident(shape):
        # Whole array as a single block, same block index every grid step -> stays
        # VMEM-resident.  Buffered(1): no second (dead) pipeline buffer for these.
        return pl.BlockSpec(shape, lambda i: tuple(0 for _ in shape),
                            pipeline_mode=pl.Buffered(1))

    flops = 2 * Bp * (OBS_DIM * FC1_DIMS + FC1_DIMS * FC2_DIMS + FC2_DIMS * OUT_DIMS)
    bytes_accessed = (Bp * OBS_DIM * 4                            # x (f32)
                      + OBS_DIM * FC1_DIMS * 2 + FC1_DIMS * 4     # w1 bf16 + b1 f32
                      + FC1_DIMS * FC2_DIMS * 2 + FC2_DIMS * 4    # w2 bf16 + b2 f32
                      + FC2_DIMS * 4 + 4                          # w3 + b3 f32
                      + Bp * 4)                                   # out f32

    out_row = pl.pallas_call(
        critic_kernel,
        out_shape=jax.ShapeDtypeStruct((1, Bp), jnp.float32),
        grid_spec=pltpu.PrefetchScalarGridSpec(
            num_scalar_prefetch=0,
            grid=(n_tiles,),
            in_specs=[
                pl.BlockSpec((tile_b, OBS_DIM), lambda i: (i, 0)),   # x tile (pipelined)
                resident(w1.shape),                                  # (8, 1024)   bf16
                resident(b1.shape),                                  # (1, 1024)   f32
                resident(w2.shape),                                  # (1024, 512) bf16
                resident(b2.shape),                                  # (1, 512)    f32
                resident(w3.shape),                                  # (1, 512)    f32
                resident(b3.shape),                                  # (1, 1)      f32
            ],
            out_specs=pl.BlockSpec((1, tile_b), lambda i: (0, i)),   # lane-dense row
        ),
        compiler_params=pltpu.CompilerParams(
            # parallel batch axis: sharded across both TensorCores on v7x when
            # n_tiles > 1; harmless (single TC) on v5e/v6e.
            dimension_semantics=("parallel",),
        ),
        cost_estimate=pl.CostEstimate(flops=flops, transcendentals=0,
                                      bytes_accessed=bytes_accessed),
    )(x, w1, b1, w2, b2, w3, b3)
    # TODO(synk): if accuracy allows, store w2 as int8 (+ per-column f32 scales) on
    # v5e/v6e or fp8-e4m3 on v7x to halve the dominant weight-DMA bytes.
    return out_row.reshape(Bp, 1)[:B]


def init_linear(key, fan_in, fan_out):
    # PyTorch nn.Linear default init: U(-1/sqrt(fan_in), 1/sqrt(fan_in))
    kw, kb = jax.random.split(key)
    bound = 1.0 / jnp.sqrt(fan_in)
    # stored as [in, out] (transposed vs torch's [out, in])
    w = jax.random.uniform(kw, (fan_in, fan_out), jnp.float32, -bound, bound)
    b = jax.random.uniform(kb, (1, fan_out), jnp.float32, -bound, bound)
    return w, b


def ref_forward(x, w1_bf16, b1, w2_bf16, b2, w3_row, b3):
    # plain-JAX reference mirroring the kernel's bf16-weight / f32-accumulate math
    h1 = jnp.dot(x.astype(jnp.bfloat16), w1_bf16, preferred_element_type=jnp.float32)
    h1 = jnp.maximum(h1 + b1, 0.0)
    h2 = jnp.dot(h1.astype(jnp.bfloat16), w2_bf16, preferred_element_type=jnp.float32)
    h2 = jnp.maximum(h2 + b2, 0.0)
    return jnp.sum(h2 * w3_row, axis=-1, keepdims=True) + b3


if __name__ == "__main__":
    key = jax.random.PRNGKey(0)
    kx, k1, k2, k3 = jax.random.split(key, 4)

    BATCH = 4  # small test batch; hidden dims are fixed by the module spec
    x = jax.random.normal(kx, (BATCH, OBS_DIM), jnp.float32)
    w1, b1 = init_linear(k1, OBS_DIM, FC1_DIMS)
    w2, b2 = init_linear(k2, FC1_DIMS, FC2_DIMS)
    w3, b3 = init_linear(k3, FC2_DIMS, OUT_DIMS)

    # stream the two large weight matrices in bf16 (kernel is HBM-DMA bound)
    w1_bf16 = w1.astype(jnp.bfloat16)
    w2_bf16 = w2.astype(jnp.bfloat16)
    # value-head weights as a (1, 512) row; tiny, keep f32 for the 512-term reduce
    w3_row = w3.reshape(1, FC2_DIMS)

    out = critic_forward(x, w1_bf16, b1, w2_bf16, b2, w3_row, b3)
    out = jax.block_until_ready(out)

    # reference with matching bf16-weight math
    ref = ref_forward(x, w1_bf16, b1, w2_bf16, b2, w3_row, b3)
    # full-f32 torch-like reference (relative-error check; bf16 weights differ slightly)
    h = jnp.maximum(x @ w1 + b1, 0.0)
    h = jnp.maximum(h @ w2 + b2, 0.0)
    ref_f32 = h @ w3 + b3

    assert out.shape == (BATCH, OUT_DIMS)
    assert jnp.allclose(out, ref, atol=1e-2, rtol=1e-2), "mismatch vs bf16-matched ref"
    rel_err = jnp.max(jnp.abs(out - ref_f32)) / (jnp.max(jnp.abs(ref_f32)) + 1e-6)
    assert rel_err < 5e-2, f"relative error vs f32 reference too large: {rel_err}"

    print("KERNEL_OK")
</pallas_src>

<mosaic_0001>
module attributes {stable_mosaic.version = 11 : i64} {
  func.func @critic_kernel(%arg0: i32, %arg1: memref<256x8xf32, #tpu.memory_space<vmem>>, %arg2: memref<8x1024xbf16, #tpu.memory_space<vmem>>, %arg3: memref<1x1024xf32, #tpu.memory_space<vmem>>, %arg4: memref<1024x512xbf16, #tpu.memory_space<vmem>>, %arg5: memref<1x512xf32, #tpu.memory_space<vmem>>, %arg6: memref<1x512xf32, #tpu.memory_space<vmem>>, %arg7: memref<1x1xf32, #tpu.memory_space<vmem>>, %arg8: memref<1x256xf32, #tpu.memory_space<vmem>>) attributes {dimension_semantics = [#tpu.dimension_semantics<parallel>], iteration_bounds = array<i64: 1>, scalar_prefetch = 0 : i64, scratch_operands = 0 : i64, tpu.core_type = #tpu.core_type<tc>, window_params = [{transform_indices = @transform_0, window_bounds = array<i64: 256, 8>}, {pipeline_mode = #tpu.pipeline_mode<synchronous>, transform_indices = @transform_1, window_bounds = array<i64: 8, 1024>}, {pipeline_mode = #tpu.pipeline_mode<synchronous>, transform_indices = @transform_2, window_bounds = array<i64: 1, 1024>}, {pipeline_mode = #tpu.pipeline_mode<synchronous>, transform_indices = @transform_3, window_bounds = array<i64: 1024, 512>}, {pipeline_mode = #tpu.pipeline_mode<synchronous>, transform_indices = @transform_4, window_bounds = array<i64: 1, 512>}, {pipeline_mode = #tpu.pipeline_mode<synchronous>, transform_indices = @transform_5, window_bounds = array<i64: 1, 512>}, {pipeline_mode = #tpu.pipeline_mode<synchronous>, transform_indices = @transform_6, window_bounds = array<i64: 1, 1>}, {transform_indices = @transform_7, window_bounds = array<i64: 1, 256>}]} {
    %c0 = arith.constant 0 : index
    %c0_0 = arith.constant 0 : index
    %0 = vector.load %arg1[%c0, %c0_0] : memref<256x8xf32, #tpu.memory_space<vmem>>, vector<256x8xf32>
    %1 = arith.truncf %0 : vector<256x8xf32> to vector<256x8xbf16>
    %c0_1 = arith.constant 0 : index
    %c0_2 = arith.constant 0 : index
    %2 = vector.load %arg2[%c0_1, %c0_2] : memref<8x1024xbf16, #tpu.memory_space<vmem>>, vector<8x1024xbf16>
    %cst = arith.constant dense<0.000000e+00> : vector<256x1024xf32>
    %3 = tpu.matmul %1, %2, %cst {dimension_numbers = #tpu.dot_dimension_numbers<[1], [0], [0], [1], [0, 0, 1, 1], [], []>} : vector<256x8xbf16>, vector<8x1024xbf16>, vector<256x1024xf32> -> vector<256x1024xf32>
    %c0_3 = arith.constant 0 : index
    %c0_4 = arith.constant 0 : index
    %4 = vector.load %arg3[%c0_3, %c0_4] : memref<1x1024xf32, #tpu.memory_space<vmem>>, vector<1x1024xf32>
    %5 = vector.broadcast %4 : vector<1x1024xf32> to vector<256x1024xf32>
    %6 = arith.addf %3, %5 : vector<256x1024xf32>
    %cst_5 = arith.constant 0.000000e+00 : f32
    %7 = vector.broadcast %cst_5 : f32 to vector<256x1024xf32>
    %8 = arith.maximumf %6, %7 : vector<256x1024xf32>
    %9 = arith.truncf %8 : vector<256x1024xf32> to vector<256x1024xbf16>
    %c0_6 = arith.constant 0 : index
    %c0_7 = arith.constant 0 : index
    %10 = vector.load %arg4[%c0_6, %c0_7] : memref<1024x512xbf16, #tpu.memory_space<vmem>>, vector<1024x512xbf16>
    %cst_8 = arith.constant dense<0.000000e+00> : vector<256x512xf32>
    %11 = tpu.matmul %9, %10, %cst_8 {dimension_numbers = #tpu.dot_dimension_numbers<[1], [0], [0], [1], [0, 0, 1, 1], [], []>} : vector<256x1024xbf16>, vector<1024x512xbf16>, vector<256x512xf32> -> vector<256x512xf32>
    %c0_9 = arith.constant 0 : index
    %c0_10 = arith.constant 0 : index
    %12 = vector.load %arg5[%c0_9, %c0_10] : memref<1x512xf32, #tpu.memory_space<vmem>>, vector<1x512xf32>
    %13 = vector.broadcast %12 : vector<1x512xf32> to vector<256x512xf32>
    %14 = arith.addf %11, %13 : vector<256x512xf32>
    %cst_11 = arith.constant 0.000000e+00 : f32
    %15 = vector.broadcast %cst_11 : f32 to vector<256x512xf32>
    %16 = arith.maximumf %14, %15 : vector<256x512xf32>
    %c0_12 = arith.constant 0 : index
    %c0_13 = arith.constant 0 : index
    %17 = vector.load %arg6[%c0_12, %c0_13] : memref<1x512xf32, #tpu.memory_space<vmem>>, vector<1x512xf32>
    %18 = tpu.transpose %16, [1, 0] : vector<256x512xf32> -> vector<512x256xf32>
    %cst_14 = arith.constant dense<0.000000e+00> : vector<1x256xf32>
    %19 = tpu.matmul %17, %18, %cst_14 {dimension_numbers = #tpu.dot_dimension_numbers<[1], [0], [0], [1], [0, 0, 1, 1], [], []>} : vector<1x512xf32>, vector<512x256xf32>, vector<1x256xf32> -> vector<1x256xf32>
    %c0_15 = arith.constant 0 : index
    %c0_16 = arith.constant 0 : index
    %20 = vector.load %arg7[%c0_15, %c0_16] : memref<1x1xf32, #tpu.memory_space<vmem>>, vector<1x1xf32>
    %21 = vector.broadcast %20 : vector<1x1xf32> to vector<1x256xf32>
    %22 = arith.addf %19, %21 : vector<1x256xf32>
    %c0_17 = arith.constant 0 : index
    %c0_18 = arith.constant 0 : index
    %23 = vector.load %arg8[%c0_17, %c0_18] : memref<1x256xf32, #tpu.memory_space<vmem>>, vector<1x256xf32>
    tpu.vector_store %arg8[%c0_17, %c0_18], %22 {strides = array<i32>} : memref<1x256xf32, #tpu.memory_space<vmem>>, vector<1x256xf32>,
    return
  }
  func.func @transform_0(%arg0: i32) -> (i32, i32) {
    %c0_i32 = arith.constant 0 : i32
    %c0_i32_0 = arith.constant 0 : i32
    return %arg0, %c0_i32 : i32, i32
  }
  func.func @transform_1(%arg0: i32) -> (i32, i32) {
    %c0_i32 = arith.constant 0 : i32
    %c0_i32_0 = arith.constant 0 : i32
    %c0_i32_1 = arith.constant 0 : i32
    return %c0_i32, %c0_i32_0 : i32, i32
  }
  func.func @transform_2(%arg0: i32) -> (i32, i32) {
    %c0_i32 = arith.constant 0 : i32
    %c0_i32_0 = arith.constant 0 : i32
    %c0_i32_1 = arith.constant 0 : i32
    return %c0_i32, %c0_i32_0 : i32, i32
  }
  func.func @transform_3(%arg0: i32) -> (i32, i32) {
    %c0_i32 = arith.constant 0 : i32
    %c0_i32_0 = arith.constant 0 : i32
    %c0_i32_1 = arith.constant 0 : i32
    return %c0_i32, %c0_i32_0 : i32, i32
  }
  func.func @transform_4(%arg0: i32) -> (i32, i32) {
    %c0_i32 = arith.constant 0 : i32
    %c0_i32_0 = arith.constant 0 : i32
    %c0_i32_1 = arith.constant 0 : i32
    return %c0_i32, %c0_i32_0 : i32, i32
  }
  func.func @transform_5(%arg0: i32) -> (i32, i32) {
    %c0_i32 = arith.constant 0 : i32
    %c0_i32_0 = arith.constant 0 : i32
    %c0_i32_1 = arith.constant 0 : i32
    return %c0_i32, %c0_i32_0 : i32, i32
  }
  func.func @transform_6(%arg0: i32) -> (i32, i32) {
    %c0_i32 = arith.constant 0 : i32
    %c0_i32_0 = arith.constant 0 : i32
    %c0_i32_1 = arith.constant 0 : i32
    return %c0_i32, %c0_i32_0 : i32, i32
  }
  func.func @transform_7(%arg0: i32) -> (i32, i32) {
    %c0_i32 = arith.constant 0 : i32
    %c0_i32_0 = arith.constant 0 : i32
    return %c0_i32, %arg0 : i32, i32
  }
}

</mosaic_0001>

<llo_original>
// kernel: tpu_custom_call.1
$region0: #{tpu_custom_call.1}
  #allocation0 [shape = 'u32[]', space=smem, size = 0x4, offset = 0x4, fixed_abs, tag = 'smem constant byte address 0x4 - core index']
  #allocation1 [shape = 'u32[72,128]{1,0:T(1,128)}', space=vmem, size = 0x9000, scoped, tag = 'internal scratch']
  #allocation2 [shape = 'f32[1,1]{1,0:T(1,128)S(1)}', space=vmem, size = 0x200, scoped, tag = 'scoped memory for tpu_custom_call.1']
  %s0 = inlined_call_operand.vmem [shape: f32[256,8], index: 0, kind: input, shape index: {}]
  %s1 = inlined_call_operand.vmem [shape: bf16[8,1024], index: 1, kind: input, shape index: {}]
  %s2 = inlined_call_operand.vmem [shape: f32[1,1024], index: 2, kind: input, shape index: {}]
  %s3 = inlined_call_operand.hbm [shape: bf16[1024,512], index: 3, kind: input, shape index: {}]
  %s4 = inlined_call_operand.vmem [shape: f32[1,512], index: 4, kind: input, shape index: {}]
  %s5 = inlined_call_operand.vmem [shape: f32[1,512], index: 5, kind: input, shape index: {}]
  %s6 = inlined_call_operand.<no memory space> [shape: f32[1,1], index: 6, kind: input, shape index: {}]
  %s7 = inlined_call_operand.hbm [shape: f32[1,256], index: 7, kind: output, shape index: {}]
  %s8 = sld [smem:[#allocation0]]
  $region42: #{tpu_custom_call.1} parent=0
    _
  %s10 = ssub.s32 1, %s8
  %s11 = scalar_select 0, %s10, %s8
  %v12 = vstv %s6
  %13 = vst [vmem:[#allocation2] sm:$0x1] %v12
  $region1: #{tpu_custom_call.1} parent=0
    #allocation3 [shape = 'u8[1048576]{0}', space=vmem, size = 0x100000, scoped, tag = 'input window, operand 3, single buffered']
    #allocation4 [shape = 's32[1]{0}', space=sflag, size = 0x4, scoped, tag = 'scoped memory for tpu_custom_call.1']
    #allocation5 [shape = 's32[1]{0}', space=sflag, size = 0x4, scoped, tag = 'scoped memory for tpu_custom_call.1']
    #allocation6 [shape = 'u8[1024]{0}', space=vmem, size = 0x400, scoped, tag = 'output window, operand 0, single buffered']
    %14 = vsyncpa [#allocation4], 0
    %15 = vsyncpa [#allocation5], 0
    // Predicated region
    $region2: #{tpu_custom_call.1} parent=1 // pred_check
      _
    $region3: #{tpu_custom_call.1} parent=1 // pred_check_branch
      %17 = sbr.rel (0) target = $region5
    $region4: #{tpu_custom_call.1} parent=1 // pred_region
      _
    $region5: #{tpu_custom_call.1} parent=1 // pred_fallthru
      _
    // Predicated region
    $region6: #{tpu_custom_call.1} parent=1 // pred_check
      _
    $region7: #{tpu_custom_call.1} parent=1 // pred_check_branch
      %19 = sbr.rel (0) target = $region9
    $region8: #{tpu_custom_call.1} parent=1 // pred_region
      _
    $region9: #{tpu_custom_call.1} parent=1 // pred_fallthru
      _
    // Predicated region
    $region10: #{tpu_custom_call.1} parent=1 // pred_check
      _
    $region11: #{tpu_custom_call.1} parent=1 // pred_check_branch
      %21 = sbr.rel (0) target = $region13
    $region12: #{tpu_custom_call.1} parent=1 // pred_region
      _
    $region13: #{tpu_custom_call.1} parent=1 // pred_fallthru
      _
    // Predicated region
    $region14: #{tpu_custom_call.1} parent=1 // pred_check
      _
    $region15: #{tpu_custom_call.1} parent=1 // pred_check_branch
      %23 = sbr.rel (0) target = $region17
    $region16: #{tpu_custom_call.1} parent=1 // pred_region
      %25 = vsyncadd [#allocation4], 0
      %s26 = sshll.u32 %s3, 4
      %s27 = int_to_ptr.hbm [resolvable:$true] %s26
      %s28 = sshll.u32 [#allocation3], 4
      %s29 = int_to_ptr.vmem [resolvable:$true] %s28
      %34 = dma.hbm_to_vmem [thread:$0]  %s27, 32768, %s29, [#allocation4], 256, 256, 16
    $region17: #{tpu_custom_call.1} parent=1 // pred_fallthru
      _
    // Predicated region
    $region18: #{tpu_custom_call.1} parent=1 // pred_check
      _
    $region19: #{tpu_custom_call.1} parent=1 // pred_check_branch
      %36 = sbr.rel (0) target = $region21
    $region20: #{tpu_custom_call.1} parent=1 // pred_region
      _
    $region21: #{tpu_custom_call.1} parent=1 // pred_fallthru
      _
    // Predicated region
    $region22: #{tpu_custom_call.1} parent=1 // pred_check
      _
    $region23: #{tpu_custom_call.1} parent=1 // pred_check_branch
      %38 = sbr.rel (0) target = $region25
    $region24: #{tpu_custom_call.1} parent=1 // pred_region
      _
    $region25: #{tpu_custom_call.1} parent=1 // pred_fallthru
      _
    // Predicated region
    $region26: #{tpu_custom_call.1} parent=1 // pred_check
      _
    $region27: #{tpu_custom_call.1} parent=1 // pred_check_branch
      %40 = sbr.rel (0) target = $region29
    $region28: #{tpu_custom_call.1} parent=1 // pred_region
      _
    $region29: #{tpu_custom_call.1} parent=1 // pred_fallthru
      _
    // Predicated region
    $region30: #{tpu_custom_call.1} parent=1 // pred_check
      _
    $region31: #{tpu_custom_call.1} parent=1 // pred_check_branch
      %42 = sbr.rel (0) target = $region33
    $region32: #{tpu_custom_call.1} parent=1 // pred_region
      %44 = dma.done [#allocation4], 32768
    $region33: #{tpu_custom_call.1} parent=1 // pred_fallthru
      _
    %v46 = vld [vmem:[%s0] sm:$0xff]
    %v47 = vld [vmem:[%s0 + $0x8] sm:$0xff]
    %v48 = vld [vmem:[%s0 + $0x10] sm:$0xff]
    %v49 = vld [vmem:[%s0 + $0x18] sm:$0xff]
    %v50 = vld [vmem:[%s0 + $0x20] sm:$0xff]
    %v51 = vld [vmem:[%s0 + $0x28] sm:$0xff]
    %v52 = vld [vmem:[%s0 + $0x30] sm:$0xff]
    %v53 = vld [vmem:[%s0 + $0x38] sm:$0xff]
    %v54 = vld [vmem:[%s0 + $0x40] sm:$0xff]
    %v55 = vld [vmem:[%s0 + $0x48] sm:$0xff]
    %v56 = vld [vmem:[%s0 + $0x50] sm:$0xff]
    %v57 = vld [vmem:[%s0 + $0x58] sm:$0xff]
    %v58 = vld [vmem:[%s0 + $0x60] sm:$0xff]
    %v59 = vld [vmem:[%s0 + $0x68] sm:$0xff]
    %v60 = vld [vmem:[%s0 + $0x70] sm:$0xff]
    %v61 = vld [vmem:[%s0 + $0x78] sm:$0xff]
    %v62 = vld [vmem:[%s0 + $0x80] sm:$0xff]
    %v63 = vld [vmem:[%s0 + $0x88] sm:$0xff]
    %v64 = vld [vmem:[%s0 + $0x90] sm:$0xff]
    %v65 = vld [vmem:[%s0 + $0x98] sm:$0xff]
    %v66 = vld [vmem:[%s0 + $0xa0] sm:$0xff]
    %v67 = vld [vmem:[%s0 + $0xa8] sm:$0xff]
    %v68 = vld [vmem:[%s0 + $0xb0] sm:$0xff]
    %v69 = vld [vmem:[%s0 + $0xb8] sm:$0xff]
    %v70 = vld [vmem:[%s0 + $0xc0] sm:$0xff]
    %v71 = vld [vmem:[%s0 + $0xc8] sm:$0xff]
    %v72 = vld [vmem:[%s0 + $0xd0] sm:$0xff]
    %v73 = vld [vmem:[%s0 + $0xd8] sm:$0xff]
    %v74 = vld [vmem:[%s0 + $0xe0] sm:$0xff]
    %v75 = vld [vmem:[%s0 + $0xe8] sm:$0xff]
    %v76 = vld [vmem:[%s0 + $0xf0] sm:$0xff]
    %v77 = vld [vmem:[%s0 + $0xf8] sm:$0xff]
    %v78 = vpack.c.bf16 %v47, %v46
    %v79 = vpack.c.bf16 %v49, %v48
    %v80 = vpack.c.bf16 %v51, %v50
    %v81 = vpack.c.bf16 %v53, %v52
    %v82 = vpack.c.bf16 %v55, %v54
    %v83 = vpack.c.bf16 %v57, %v56
    %v84 = vpack.c.bf16 %v59, %v58
    %v85 = vpack.c.bf16 %v61, %v60
    %v86 = vpack.c.bf16 %v63, %v62
    %v87 = vpack.c.bf16 %v65, %v64
    %v88 = vpack.c.bf16 %v67, %v66
    %v89 = vpack.c.bf16 %v69, %v68
    %v90 = vpack.c.bf16 %v71, %v70
    %v91 = vpack.c.bf16 %v73, %v72
    %v92 = vpack.c.bf16 %v75, %v74
    %v93 = vpack.c.bf16 %v77, %v76
    %v94 = vld [vmem:[%s1] sm:$0xff]
    %v95 = vld [vmem:[%s1 + $0x8] sm:$0xff]
    %v96 = vld [vmem:[%s1 + $0x10] sm:$0xff]
    %v97 = vld [vmem:[%s1 + $0x18] sm:$0xff]
    %v98 = vld [vmem:[%s2] sm:$0xff]
    %v100 = vperm.slane %v98, 0
    %v101 = vperm.slane %v98, 1
    %v102 = vperm.slane %v98, 2
    %v103 = vperm.slane %v98, 3
    %v104 = vperm.slane %v98, 4
    %v105 = vperm.slane %v98, 5
    %v106 = vperm.slane %v98, 6
    %v107 = vperm.slane %v98, 7
    %v120 = vunpack.c.l.b16 %v94
    %v121 = vunpack.c.h.b16 %v94
    %v122 = vunpack.c.l.b16 %v95
    %v123 = vunpack.c.h.b16 %v95
    %v124 = vunpack.c.l.b16 %v96
    %v125 = vunpack.c.h.b16 %v96
    %v126 = vunpack.c.l.b16 %v97
    %v127 = vunpack.c.h.b16 %v97
    %v128 = vpack.c.b16 %v120, %v120
    %v129 = vpack.c.b16 %v121, %v121
    %v130 = vpack.c.b16 %v122, %v122
    %v131 = vpack.c.b16 %v123, %v123
    %v132 = vpack.c.b16 %v124, %v124
    %v133 = vpack.c.b16 %v125, %v125
    %v134 = vpack.c.b16 %v126, %v126
    %v135 = vpack.c.b16 %v127, %v127
    %vm136 = vcmask 64512
    %v138 = vsel %vm136, %v78, 0
    %v141 = vsel %vm136, %v79, 0
    %v144 = vsel %vm136, %v80, 0
    %v147 = vsel %vm136, %v81, 0
    %v150 = vsel %vm136, %v82, 0
    %v153 = vsel %vm136, %v83, 0
    %v156 = vsel %vm136, %v84, 0
    %v159 = vsel %vm136, %v85, 0
    %v162 = vsel %vm136, %v86, 0
    %v165 = vsel %vm136, %v87, 0
    %v168 = vsel %vm136, %v88, 0
    %v171 = vsel %vm136, %v89, 0
    %v174 = vsel %vm136, %v90, 0
    %v177 = vsel %vm136, %v91, 0
    %v180 = vsel %vm136, %v92, 0
    %v183 = vsel %vm136, %v93, 0
    %vm185 = vcmask 1043456
    %v187 = vsel %vm185, %v128, 0
    %v190 = vsel %vm185, %v129, 0
    %v193 = vsel %vm185, %v130, 0
    %v196 = vsel %vm185, %v131, 0
    %v199 = vsel %vm185, %v132, 0
    %v202 = vsel %vm185, %v133, 0
    %v205 = vsel %vm185, %v134, 0
    %v208 = vsel %vm185, %v135, 0
    %210 = vmatpush.bf16.msra.mxu0 0
    %211 = vmatpush.bf16.msra.mxu0 0
    %212 = vmatpush.bf16.msra.mxu0 0
    %213 = vmatpush.bf16.msra.mxu0 0
    %214 = vmatpush.bf16.msra.mxu0 0
    %215 = vmatpush.bf16.msra.mxu0 0
    %216 = vmatpush.bf16.msra.mxu0 0
    %217 = vmatpush.bf16.msra.mxu0 %v187
    %218 = vmatmul.bf16.gmra.mxu0 %v138
    %v219 = vpop.f32.mrf.mxu0
    %v220 = vadd.f32 %v100, %v219
    %v221 = vpop.f32.mrf.mxu0
    %v222 = vadd.f32 %v100, %v221
    %223 = vmatmul.bf16.gmra.mxu0 %v141
    %v224 = vpop.f32.mrf.mxu0
    %v225 = vadd.f32 %v100, %v224
    %v226 = vpop.f32.mrf.mxu0
    %v227 = vadd.f32 %v100, %v226
    %228 = vmatmul.bf16.gmra.mxu0 %v144
    %v229 = vpop.f32.mrf.mxu0
    %v230 = vadd.f32 %v100, %v229
    %v231 = vpop.f32.mrf.mxu0
    %v232 = vadd.f32 %v100, %v231
    %233 = vmatmul.bf16.gmra.mxu0 %v147
    %v234 = vpop.f32.mrf.mxu0
    %v235 = vadd.f32 %v100, %v234
    %v236 = vpop.f32.mrf.mxu0
    %v237 = vadd.f32 %v100, %v236
    %238 = vmatmul.bf16.gmra.mxu0 %v150
    %v239 = vpop.f32.mrf.mxu0
    %v240 = vadd.f32 %v100, %v239
    %v241 = vpop.f32.mrf.mxu0
    %v242 = vadd.f32 %v100, %v241
    %243 = vmatmul.bf16.gmra.mxu0 %v153
    %v244 = vpop.f32.mrf.mxu0
    %v245 = vadd.f32 %v100, %v244
    %v246 = vpop.f32.mrf.mxu0
    %v247 = vadd.f32 %v100, %v246
    %248 = vmatmul.bf16.gmra.mxu0 %v156
    %v249 = vpop.f32.mrf.mxu0
    %v250 = vadd.f32 %v100, %v249
    %v251 = vpop.f32.mrf.mxu0
    %v252 = vadd.f32 %v100, %v251
    %253 = vmatmul.bf16.gmra.mxu0 %v159
    %v254 = vpop.f32.mrf.mxu0
    %v255 = vadd.f32 %v100, %v254
    %v256 = vpop.f32.mrf.mxu0
    %v257 = vadd.f32 %v100, %v256
    %258 = vmatmul.bf16.gmra.mxu0 %v162
    %v259 = vpop.f32.mrf.mxu0
    %v260 = vadd.f32 %v100, %v259
    %v261 = vpop.f32.mrf.mxu0
    %v262 = vadd.f32 %v100, %v261
    %263 = vmatmul.bf16.gmra.mxu0 %v165
    %v264 = vpop.f32.mrf.mxu0
    %v265 = vadd.f32 %v100, %v264
    %v266 = vpop.f32.mrf.mxu0
    %v267 = vadd.f32 %v100, %v266
    %268 = vmatmul.bf16.gmra.mxu0 %v168
    %v269 = vpop.f32.mrf.mxu0
    %v270 = vadd.f32 %v100, %v269
    %v271 = vpop.f32.mrf.mxu0
    %v272 = vadd.f32 %v100, %v271
    %273 = vmatmul.bf16.gmra.mxu0 %v171
    %v274 = vpop.f32.mrf.mxu0
    %v275 = vadd.f32 %v100, %v274
    %v276 = vpop.f32.mrf.mxu0
    %v277 = vadd.f32 %v100, %v276
    %278 = vmatmul.bf16.gmra.mxu0 %v174
    %v279 = vpop.f32.mrf.mxu0
    %v280 = vadd.f32 %v100, %v279
    %v281 = vpop.f32.mrf.mxu0
    %v282 = vadd.f32 %v100, %v281
    %283 = vmatmul.bf16.gmra.mxu0 %v177
    %v284 = vpop.f32.mrf.mxu0
    %v285 = vadd.f32 %v100, %v284
    %v286 = vpop.f32.mrf.mxu0
    %v287 = vadd.f32 %v100, %v286
    %288 = vmatmul.bf16.gmra.mxu0 %v180
    %v289 = vpop.f32.mrf.mxu0
    %v290 = vadd.f32 %v100, %v289
    %v291 = vpop.f32.mrf.mxu0
    %v292 = vadd.f32 %v100, %v291
    %293 = vmatmul.bf16.gmra.mxu0 %v183
    %v294 = vpop.f32.mrf.mxu0
    %v295 = vadd.f32 %v100, %v294
    %v296 = vpop.f32.mrf.mxu0
    %v297 = vadd.f32 %v100, %v296
    %298 = vdwg.mxu0
    %299 = vmatpush.bf16.msra.mxu0 0
    %300 = vmatpush.bf16.msra.mxu0 0
    %301 = vmatpush.bf16.msra.mxu0 0
    %302 = vmatpush.bf16.msra.mxu0 0
    %303 = vmatpush.bf16.msra.mxu0 0
    %304 = vmatpush.bf16.msra.mxu0 0
    %305 = vmatpush.bf16.msra.mxu0 0
    %306 = vmatpush.bf16.msra.mxu0 %v190
    %307 = vmatmul.bf16.gmra.mxu0 %v138
    %v308 = vpop.f32.mrf.mxu0
    %v309 = vadd.f32 %v101, %v308
    %v310 = vpop.f32.mrf.mxu0
    %v311 = vadd.f32 %v101, %v310
    %312 = vmatmul.bf16.gmra.mxu0 %v141
    %v313 = vpop.f32.mrf.mxu0
    %v314 = vadd.f32 %v101, %v313
    %v315 = vpop.f32.mrf.mxu0
    %v316 = vadd.f32 %v101, %v315
    %317 = vmatmul.bf16.gmra.mxu0 %v144
    %v318 = vpop.f32.mrf.mxu0
    %v319 = vadd.f32 %v101, %v318
    %v320 = vpop.f32.mrf.mxu0
    %v321 = vadd.f32 %v101, %v320
    %322 = vmatmul.bf16.gmra.mxu0 %v147
    %v323 = vpop.f32.mrf.mxu0
    %v324 = vadd.f32 %v101, %v323
    %v325 = vpop.f32.mrf.mxu0
    %v326 = vadd.f32 %v101, %v325
    %327 = vmatmul.bf16.gmra.mxu0 %v150
    %v328 = vpop.f32.mrf.mxu0
    %v329 = vadd.f32 %v101, %v328
    %v330 = vpop.f32.mrf.mxu0
    %v331 = vadd.f32 %v101, %v330
    %332 = vmatmul.bf16.gmra.mxu0 %v153
    %v333 = vpop.f32.mrf.mxu0
    %v334 = vadd.f32 %v101, %v333
    %v335 = vpop.f32.mrf.mxu0
    %v336 = vadd.f32 %v101, %v335
    %337 = vmatmul.bf16.gmra.mxu0 %v156
    %v338 = vpop.f32.mrf.mxu0
    %v339 = vadd.f32 %v101, %v338
    %v340 = vpop.f32.mrf.mxu0
    %v341 = vadd.f32 %v101, %v340
    %342 = vmatmul.bf16.gmra.mxu0 %v159
    %v343 = vpop.f32.mrf.mxu0
    %v344 = vadd.f32 %v101, %v343
    %v345 = vpop.f32.mrf.mxu0
    %v346 = vadd.f32 %v101, %v345
    %347 = vmatmul.bf16.gmra.mxu0 %v162
    %v348 = vpop.f32.mrf.mxu0
    %v349 = vadd.f32 %v101, %v348
    %v350 = vpop.f32.mrf.mxu0
    %v351 = vadd.f32 %v101, %v350
    %352 = vmatmul.bf16.gmra.mxu0 %v165
    %v353 = vpop.f32.mrf.mxu0
    %v354 = vadd.f32 %v101, %v353
    %v355 = vpop.f32.mrf.mxu0
    %v356 = vadd.f32 %v101, %v355
    %357 = vmatmul.bf16.gmra.mxu0 %v168
    %v358 = vpop.f32.mrf.mxu0
    %v359 = vadd.f32 %v101, %v358
    %v360 = vpop.f32.mrf.mxu0
    %v361 = vadd.f32 %v101, %v360
    %362 = vmatmul.bf16.gmra.mxu0 %v171
    %v363 = vpop.f32.mrf.mxu0
    %v364 = vadd.f32 %v101, %v363
    %v365 = vpop.f32.mrf.mxu0
    %v366 = vadd.f32 %v101, %v365
    %367 = vmatmul.bf16.gmra.mxu0 %v174
    %v368 = vpop.f32.mrf.mxu0
    %v369 = vadd.f32 %v101, %v368
    %v370 = vpop.f32.mrf.mxu0
    %v371 = vadd.f32 %v101, %v370
    %372 = vmatmul.bf16.gmra.mxu0 %v177
    %v373 = vpop.f32.mrf.mxu0
    %v374 = vadd.f32 %v101, %v373
    %v375 = vpop.f32.mrf.mxu0
    %v376 = vadd.f32 %v101, %v375
    %377 = vmatmul.bf16.gmra.mxu0 %v180
    %v378 = vpop.f32.mrf.mxu0
    %v379 = vadd.f32 %v101, %v378
    %v380 = vpop.f32.mrf.mxu0
    %v381 = vadd.f32 %v101, %v380
    %382 = vmatmul.bf16.gmra.mxu0 %v183
    %v383 = vpop.f32.mrf.mxu0
    %v384 = vadd.f32 %v101, %v383
    %v385 = vpop.f32.mrf.mxu0
    %v386 = vadd.f32 %v101, %v385
    %387 = vdwg.mxu0
    %388 = vmatpush.bf16.msra.mxu0 0
    %389 = vmatpush.bf16.msra.mxu0 0
    %390 = vmatpush.bf16.msra.mxu0 0
    %391 = vmatpush.bf16.msra.mxu0 0
    %392 = vmatpush.bf16.msra.mxu0 0
    %393 = vmatpush.bf16.msra.mxu0 0
    %394 = vmatpush.bf16.msra.mxu0 0
    %395 = vmatpush.bf16.msra.mxu0 %v193
    %396 = vmatmul.bf16.gmra.mxu0 %v138
    %v397 = vpop.f32.mrf.mxu0
    %v398 = vadd.f32 %v102, %v397
    %v399 = vpop.f32.mrf.mxu0
    %v400 = vadd.f32 %v102, %v399
    %401 = vmatmul.bf16.gmra.mxu0 %v141
    %v402 = vpop.f32.mrf.mxu0
    %v403 = vadd.f32 %v102, %v402
    %v404 = vpop.f32.mrf.mxu0
    %v405 = vadd.f32 %v102, %v404
    %406 = vmatmul.bf16.gmra.mxu0 %v144
    %v407 = vpop.f32.mrf.mxu0
    %v408 = vadd.f32 %v102, %v407
    %v409 = vpop.f32.mrf.mxu0
    %v410 = vadd.f32 %v102, %v409
    %411 = vmatmul.bf16.gmra.mxu0 %v147
    %v412 = vpop.f32.mrf.mxu0
    %v413 = vadd.f32 %v102, %v412
    %v414 = vpop.f32.mrf.mxu0
    %v415 = vadd.f32 %v102, %v414
    %416 = vmatmul.bf16.gmra.mxu0 %v150
    %v417 = vpop.f32.mrf.mxu0
    %v418 = vadd.f32 %v102, %v417
    %v419 = vpop.f32.mrf.mxu0
    %v420 = vadd.f32 %v102, %v419
    %421 = vmatmul.bf16.gmra.mxu0 %v153
    %v422 = vpop.f32.mrf.mxu0
    %v423 = vadd.f32 %v102, %v422
    %v424 = vpop.f32.mrf.mxu0
    %v425 = vadd.f32 %v102, %v424
    %426 = vmatmul.bf16.gmra.mxu0 %v156
    %v427 = vpop.f32.mrf.mxu0
    %v428 = vadd.f32 %v102, %v427
    %v429 = vpop.f32.mrf.mxu0
    %v430 = vadd.f32 %v102, %v429
    %431 = vmatmul.bf16.gmra.mxu0 %v159
    %v432 = vpop.f32.mrf.mxu0
    %v433 = vadd.f32 %v102, %v432
    %v434 = vpop.f32.mrf.mxu0
    %v435 = vadd.f32 %v102, %v434
    %436 = vmatmul.bf16.gmra.mxu0 %v162
    %v437 = vpop.f32.mrf.mxu0
    %v438 = vadd.f32 %v102, %v437
    %v439 = vpop.f32.mrf.mxu0
    %v440 = vadd.f32 %v102, %v439
    %441 = vmatmul.bf16.gmra.mxu0 %v165
    %v442 = vpop.f32.mrf.mxu0
    %v443 = vadd.f32 %v102, %v442
    %v444 = vpop.f32.mrf.mxu0
    %v445 = vadd.f32 %v102, %v444
    %446 = vmatmul.bf16.gmra.mxu0 %v168
    %v447 = vpop.f32.mrf.mxu0
    %v448 = vadd.f32 %v102, %v447
    %v449 = vpop.f32.mrf.mxu0
    %v450 = vadd.f32 %v102, %v449
    %451 = vmatmul.bf16.gmra.mxu0 %v171
    %v452 = vpop.f32.mrf.mxu0
    %v453 = vadd.f32 %v102, %v452
    %v454 = vpop.f32.mrf.mxu0
    %v455 = vadd.f32 %v102, %v454
    %456 = vmatmul.bf16.gmra.mxu0 %v174
    %v457 = vpop.f32.mrf.mxu0
    %v458 = vadd.f32 %v102, %v457
    %v459 = vpop.f32.mrf.mxu0
    %v460 = vadd.f32 %v102, %v459
    %461 = vmatmul.bf16.gmra.mxu0 %v177
    %v462 = vpop.f32.mrf.mxu0
    %v463 = vadd.f32 %v102, %v462
    %v464 = vpop.f32.mrf.mxu0
    %v465 = vadd.f32 %v102, %v464
    %466 = vmatmul.bf16.gmra.mxu0 %v180
    %v467 = vpop.f32.mrf.mxu0
    %v468 = vadd.f32 %v102, %v467
    %v469 = vpop.f32.mrf.mxu0
    %v470 = vadd.f32 %v102, %v469
    %471 = vmatmul.bf16.gmra.mxu0 %v183
    %v472 = vpop.f32.mrf.mxu0
    %v473 = vadd.f32 %v102, %v472
    %v474 = vpop.f32.mrf.mxu0
    %v475 = vadd.f32 %v102, %v474
    %476 = vdwg.mxu0
    %477 = vmatpush.bf16.msra.mxu0 0
    %478 = vmatpush.bf16.msra.mxu0 0
    %479 = vmatpush.bf16.msra.mxu0 0
    %480 = vmatpush.bf16.msra.mxu0 0
    %481 = vmatpush.bf16.msra.mxu0 0
    %482 = vmatpush.bf16.msra.mxu0 0
    %483 = vmatpush.bf16.msra.mxu0 0
    %484 = vmatpush.bf16.msra.mxu0 %v196
    %485 = vmatmul.bf16.gmra.mxu0 %v138
    %v486 = vpop.f32.mrf.mxu0
    %v487 = vadd.f32 %v103, %v486
    %v488 = vpop.f32.mrf.mxu0
    %v489 = vadd.f32 %v103, %v488
    %490 = vmatmul.bf16.gmra.mxu0 %v141
    %v491 = vpop.f32.mrf.mxu0
    %v492 = vadd.f32 %v103, %v491
    %v493 = vpop.f32.mrf.mxu0
    %v494 = vadd.f32 %v103, %v493
    %495 = vmatmul.bf16.gmra.mxu0 %v144
    %v496 = vpop.f32.mrf.mxu0
    %v497 = vadd.f32 %v103, %v496
    %v498 = vpop.f32.mrf.mxu0
    %v499 = vadd.f32 %v103, %v498
    %500 = vmatmul.bf16.gmra.mxu0 %v147
    %v501 = vpop.f32.mrf.mxu0
    %v502 = vadd.f32 %v103, %v501
    %v503 = vpop.f32.mrf.mxu0
    %v504 = vadd.f32 %v103, %v503
    %505 = vmatmul.bf16.gmra.mxu0 %v150
    %v506 = vpop.f32.mrf.mxu0
    %v507 = vadd.f32 %v103, %v506
    %v508 = vpop.f32.mrf.mxu0
    %v509 = vadd.f32 %v103, %v508
    %510 = vmatmul.bf16.gmra.mxu0 %v153
    %v511 = vpop.f32.mrf.mxu0
    %v512 = vadd.f32 %v103, %v511
    %v513 = vpop.f32.mrf.mxu0
    %v514 = vadd.f32 %v103, %v513
    %515 = vmatmul.bf16.gmra.mxu0 %v156
    %v516 = vpop.f32.mrf.mxu0
    %v517 = vadd.f32 %v103, %v516
    %v518 = vpop.f32.mrf.mxu0
    %v519 = vadd.f32 %v103, %v518
    %520 = vmatmul.bf16.gmra.mxu0 %v159
    %v521 = vpop.f32.mrf.mxu0
    %v522 = vadd.f32 %v103, %v521
    %v523 = vpop.f32.mrf.mxu0
    %v524 = vadd.f32 %v103, %v523
    %525 = vmatmul.bf16.gmra.mxu0 %v162
    %v526 = vpop.f32.mrf.mxu0
    %v527 = vadd.f32 %v103, %v526
    %v528 = vpop.f32.mrf.mxu0
    %v529 = vadd.f32 %v103, %v528
    %530 = vmatmul.bf16.gmra.mxu0 %v165
    %v531 = vpop.f32.mrf.mxu0
    %v532 = vadd.f32 %v103, %v531
    %v533 = vpop.f32.mrf.mxu0
    %v534 = vadd.f32 %v103, %v533
    %535 = vmatmul.bf16.gmra.mxu0 %v168
    %v536 = vpop.f32.mrf.mxu0
    %v537 = vadd.f32 %v103, %v536
    %v538 = vpop.f32.mrf.mxu0
    %v539 = vadd.f32 %v103, %v538
    %540 = vmatmul.bf16.gmra.mxu0 %v171
    %v541 = vpop.f32.mrf.mxu0
    %v542 = vadd.f32 %v103, %v541
    %v543 = vpop.f32.mrf.mxu0
    %v544 = vadd.f32 %v103, %v543
    %545 = vmatmul.bf16.gmra.mxu0 %v174
    %v546 = vpop.f32.mrf.mxu0
    %v547 = vadd.f32 %v103, %v546
    %v548 = vpop.f32.mrf.mxu0
    %v549 = vadd.f32 %v103, %v548
    %550 = vmatmul.bf16.gmra.mxu0 %v177
    %v551 = vpop.f32.mrf.mxu0
    %v552 = vadd.f32 %v103, %v551
    %v553 = vpop.f32.mrf.mxu0
    %v554 = vadd.f32 %v103, %v553
    %555 = vmatmul.bf16.gmra.mxu0 %v180
    %v556 = vpop.f32.mrf.mxu0
    %v557 = vadd.f32 %v103, %v556
    %v558 = vpop.f32.mrf.mxu0
    %v559 = vadd.f32 %v103, %v558
    %560 = vmatmul.bf16.gmra.mxu0 %v183
    %v561 = vpop.f32.mrf.mxu0
    %v562 = vadd.f32 %v103, %v561
    %v563 = vpop.f32.mrf.mxu0
    %v564 = vadd.f32 %v103, %v563
    %565 = vdwg.mxu0
    %566 = vmatpush.bf16.msra.mxu0 0
    %567 = vmatpush.bf16.msra.mxu0 0
    %568 = vmatpush.bf16.msra.mxu0 0
    %569 = vmatpush.bf16.msra.mxu0 0
    %570 = vmatpush.bf16.msra.mxu0 0
    %571 = vmatpush.bf16.msra.mxu0 0
    %572 = vmatpush.bf16.msra.mxu0 0
    %573 = vmatpush.bf16.msra.mxu0 %v199
    %574 = vmatmul.bf16.gmra.mxu0 %v138
    %v575 = vpop.f32.mrf.mxu0
    %v576 = vadd.f32 %v104, %v575
    %v577 = vpop.f32.mrf.mxu0
    %v578 = vadd.f32 %v104, %v577
    %579 = vmatmul.bf16.gmra.mxu0 %v141
    %v580 = vpop.f32.mrf.mxu0
    %v581 = vadd.f32 %v104, %v580
    %v582 = vpop.f32.mrf.mxu0
    %v583 = vadd.f32 %v104, %v582
    %584 = vmatmul.bf16.gmra.mxu0 %v144
    %v585 = vpop.f32.mrf.mxu0
    %v586 = vadd.f32 %v104, %v585
    %v587 = vpop.f32.mrf.mxu0
    %v588 = vadd.f32 %v104, %v587
    %589 = vmatmul.bf16.gmra.mxu0 %v147
    %v590 = vpop.f32.mrf.mxu0
    %v591 = vadd.f32 %v104, %v590
    %v592 = vpop.f32.mrf.mxu0
    %v593 = vadd.f32 %v104, %v592
    %594 = vmatmul.bf16.gmra.mxu0 %v150
    %v595 = vpop.f32.mrf.mxu0
    %v596 = vadd.f32 %v104, %v595
    %v597 = vpop.f32.mrf.mxu0
    %v598 = vadd.f32 %v104, %v597
    %599 = vmatmul.bf16.gmra.mxu0 %v153
    %v600 = vpop.f32.mrf.mxu0
    %v601 = vadd.f32 %v104, %v600
    %v602 = vpop.f32.mrf.mxu0
    %v603 = vadd.f32 %v104, %v602
    %604 = vmatmul.bf16.gmra.mxu0 %v156
    %v605 = vpop.f32.mrf.mxu0
    %v606 = vadd.f32 %v104, %v605
    %v607 = vpop.f32.mrf.mxu0
    %v608 = vadd.f32 %v104, %v607
    %609 = vmatmul.bf16.gmra.mxu0 %v159
    %v610 = vpop.f32.mrf.mxu0
    %v611 = vadd.f32 %v104, %v610
    %v612 = vpop.f32.mrf.mxu0
    %v613 = vadd.f32 %v104, %v612
    %614 = vmatmul.bf16.gmra.mxu0 %v162
    %v615 = vpop.f32.mrf.mxu0
    %v616 = vadd.f32 %v104, %v615
    %v617 = vpop.f32.mrf.mxu0
    %v618 = vadd.f32 %v104, %v617
    %619 = vmatmul.bf16.gmra.mxu0 %v165
    %v620 = vpop.f32.mrf.mxu0
    %v621 = vadd.f32 %v104, %v620
    %v622 = vpop.f32.mrf.mxu0
    %v623 = vadd.f32 %v104, %v622
    %624 = vmatmul.bf16.gmra.mxu0 %v168
    %v625 = vpop.f32.mrf.mxu0
    %v626 = vadd.f32 %v104, %v625
    %v627 = vpop.f32.mrf.mxu0
    %v628 = vadd.f32 %v104, %v627
    %629 = vmatmul.bf16.gmra.mxu0 %v171
    %v630 = vpop.f32.mrf.mxu0
    %v631 = vadd.f32 %v104, %v630
    %v632 = vpop.f32.mrf.mxu0
    %v633 = vadd.f32 %v104, %v632
    %634 = vmatmul.bf16.gmra.mxu0 %v174
    %v635 = vpop.f32.mrf.mxu0
    %v636 = vadd.f32 %v104, %v635
    %v637 = vpop.f32.mrf.mxu0
    %v638 = vadd.f32 %v104, %v637
    %639 = vmatmul.bf16.gmra.mxu0 %v177
    %v640 = vpop.f32.mrf.mxu0
    %v641 = vadd.f32 %v104, %v640
    %v642 = vpop.f32.mrf.mxu0
    %v643 = vadd.f32 %v104, %v642
    %644 = vmatmul.bf16.gmra.mxu0 %v180
    %v645 = vpop.f32.mrf.mxu0
    %v646 = vadd.f32 %v104, %v645
    %v647 = vpop.f32.mrf.mxu0
    %v648 = vadd.f32 %v104, %v647
    %649 = vmatmul.bf16.gmra.mxu0 %v183
    %v650 = vpop.f32.mrf.mxu0
    %v651 = vadd.f32 %v104, %v650
    %v652 = vpop.f32.mrf.mxu0
    %v653 = vadd.f32 %v104, %v652
    %654 = vdwg.mxu0
    %655 = vmatpush.bf16.msra.mxu0 0
    %656 = vmatpush.bf16.msra.mxu0 0
    %657 = vmatpush.bf16.msra.mxu0 0
    %658 = vmatpush.bf16.msra.mxu0 0
    %659 = vmatpush.bf16.msra.mxu0 0
    %660 = vmatpush.bf16.msra.mxu0 0
    %661 = vmatpush.bf16.msra.mxu0 0
    %662 = vmatpush.bf16.msra.mxu0 %v202
    %663 = vmatmul.bf16.gmra.mxu0 %v138
    %v664 = vpop.f32.mrf.mxu0
    %v665 = vadd.f32 %v105, %v664
    %v666 = vpop.f32.mrf.mxu0
    %v667 = vadd.f32 %v105, %v666
    %668 = vmatmul.bf16.gmra.mxu0 %v141
    %v669 = vpop.f32.mrf.mxu0
    %v670 = vadd.f32 %v105, %v669
    %v671 = vpop.f32.mrf.mxu0
    %v672 = vadd.f32 %v105, %v671
    %673 = vmatmul.bf16.gmra.mxu0 %v144
    %v674 = vpop.f32.mrf.mxu0
    %v675 = vadd.f32 %v105, %v674
    %v676 = vpop.f32.mrf.mxu0
    %v677 = vadd.f32 %v105, %v676
    %678 = vmatmul.bf16.gmra.mxu0 %v147
    %v679 = vpop.f32.mrf.mxu0
    %v680 = vadd.f32 %v105, %v679
    %v681 = vpop.f32.mrf.mxu0
    %v682 = vadd.f32 %v105, %v681
    %683 = vmatmul.bf16.gmra.mxu0 %v150
    %v684 = vpop.f32.mrf.mxu0
    %v685 = vadd.f32 %v105, %v684
    %v686 = vpop.f32.mrf.mxu0
    %v687 = vadd.f32 %v105, %v686
    %688 = vmatmul.bf16.gmra.mxu0 %v153
    %v689 = vpop.f32.mrf.mxu0
    %v690 = vadd.f32 %v105, %v689
    %v691 = vpop.f32.mrf.mxu0
    %v692 = vadd.f32 %v105, %v691
    %693 = vmatmul.bf16.gmra.mxu0 %v156
    %v694 = vpop.f32.mrf.mxu0
    %v695 = vadd.f32 %v105, %v694
    %v696 = vpop.f32.mrf.mxu0
    %v697 = vadd.f32 %v105, %v696
    %698 = vmatmul.bf16.gmra.mxu0 %v159
    %v699 = vpop.f32.mrf.mxu0
    %v700 = vadd.f32 %v105, %v699
    %v701 = vpop.f32.mrf.mxu0
    %v702 = vadd.f32 %v105, %v701
    %703 = vmatmul.bf16.gmra.mxu0 %v162
    %v704 = vpop.f32.mrf.mxu0
    %v705 = vadd.f32 %v105, %v704
    %v706 = vpop.f32.mrf.mxu0
    %v707 = vadd.f32 %v105, %v706
    %708 = vmatmul.bf16.gmra.mxu0 %v165
    %v709 = vpop.f32.mrf.mxu0
    %v710 = vadd.f32 %v105, %v709
    %v711 = vpop.f32.mrf.mxu0
    %v712 = vadd.f32 %v105, %v711
    %713 = vmatmul.bf16.gmra.mxu0 %v168
    %v714 = vpop.f32.mrf.mxu0
    %v715 = vadd.f32 %v105, %v714
    %v716 = vpop.f32.mrf.mxu0
    %v717 = vadd.f32 %v105, %v716
    %718 = vmatmul.bf16.gmra.mxu0 %v171
    %v719 = vpop.f32.mrf.mxu0
    %v720 = vadd.f32 %v105, %v719
    %v721 = vpop.f32.mrf.mxu0
    %v722 = vadd.f32 %v105, %v721
    %723 = vmatmul.bf16.gmra.mxu0 %v174
    %v724 = vpop.f32.mrf.mxu0
    %v725 = vadd.f32 %v105, %v724
    %v726 = vpop.f32.mrf.mxu0
    %v727 = vadd.f32 %v105, %v726
    %728 = vmatmul.bf16.gmra.mxu0 %v177
    %v729 = vpop.f32.mrf.mxu0
    %v730 = vadd.f32 %v105, %v729
    %v731 = vpop.f32.mrf.mxu0
    %v732 = vadd.f32 %v105, %v731
    %733 = vmatmul.bf16.gmra.mxu0 %v180
    %v734 = vpop.f32.mrf.mxu0
    %v735 = vadd.f32 %v105, %v734
    %v736 = vpop.f32.mrf.mxu0
    %v737 = vadd.f32 %v105, %v736
    %738 = vmatmul.bf16.gmra.mxu0 %v183
    %v739 = vpop.f32.mrf.mxu0
    %v740 = vadd.f32 %v105, %v739
    %v741 = vpop.f32.mrf.mxu0
    %v742 = vadd.f32 %v105, %v741
    %743 = vdwg.mxu0
    %744 = vmatpush.bf16.msra.mxu0 0
    %745 = vmatpush.bf16.msra.mxu0 0
    %746 = vmatpush.bf16.msra.mxu0 0
    %747 = vmatpush.bf16.msra.mxu0 0
    %748 = vmatpush.bf16.msra.mxu0 0
    %749 = vmatpush.bf16.msra.mxu0 0
    %750 = vmatpush.bf16.msra.mxu0 0
    %751 = vmatpush.bf16.msra.mxu0 %v205
    %752 = vmatmul.bf16.gmra.mxu0 %v138
    %v753 = vpop.f32.mrf.mxu0
    %v754 = vadd.f32 %v106, %v753
    %v755 = vpop.f32.mrf.mxu0
    %v756 = vadd.f32 %v106, %v755
    %757 = vmatmul.bf16.gmra.mxu0 %v141
    %v758 = vpop.f32.mrf.mxu0
    %v759 = vadd.f32 %v106, %v758
    %v760 = vpop.f32.mrf.mxu0
    %v761 = vadd.f32 %v106, %v760
    %762 = vmatmul.bf16.gmra.mxu0 %v144
    %v763 = vpop.f32.mrf.mxu0
    %v764 = vadd.f32 %v106, %v763
    %v765 = vpop.f32.mrf.mxu0
    %v766 = vadd.f32 %v106, %v765
    %767 = vmatmul.bf16.gmra.mxu0 %v147
    %v768 = vpop.f32.mrf.mxu0
    %v769 = vadd.f32 %v106, %v768
    %v770 = vpop.f32.mrf.mxu0
    %v771 = vadd.f32 %v106, %v770
    %772 = vmatmul.bf16.gmra.mxu0 %v150
    %v773 = vpop.f32.mrf.mxu0
    %v774 = vadd.f32 %v106, %v773
    %v775 = vpop.f32.mrf.mxu0
    %v776 = vadd.f32 %v106, %v775
    %777 = vmatmul.bf16.gmra.mxu0 %v153
    %v778 = vpop.f32.mrf.mxu0
    %v779 = vadd.f32 %v106, %v778
    %v780 = vpop.f32.mrf.mxu0
    %v781 = vadd.f32 %v106, %v780
    %782 = vmatmul.bf16.gmra.mxu0 %v156
    %v783 = vpop.f32.mrf.mxu0
    %v784 = vadd.f32 %v106, %v783
    %v785 = vpop.f32.mrf.mxu0
    %v786 = vadd.f32 %v106, %v785
    %787 = vmatmul.bf16.gmra.mxu0 %v159
    %v788 = vpop.f32.mrf.mxu0
    %v789 = vadd.f32 %v106, %v788
    %v790 = vpop.f32.mrf.mxu0
    %v791 = vadd.f32 %v106, %v790
    %792 = vmatmul.bf16.gmra.mxu0 %v162
    %v793 = vpop.f32.mrf.mxu0
    %v794 = vadd.f32 %v106, %v793
    %v795 = vpop.f32.mrf.mxu0
    %v796 = vadd.f32 %v106, %v795
    %797 = vmatmul.bf16.gmra.mxu0 %v165
    %v798 = vpop.f32.mrf.mxu0
    %v799 = vadd.f32 %v106, %v798
    %v800 = vpop.f32.mrf.mxu0
    %v801 = vadd.f32 %v106, %v800
    %802 = vmatmul.bf16.gmra.mxu0 %v168
    %v803 = vpop.f32.mrf.mxu0
    %v804 = vadd.f32 %v106, %v803
    %v805 = vpop.f32.mrf.mxu0
    %v806 = vadd.f32 %v106, %v805
    %807 = vmatmul.bf16.gmra.mxu0 %v171
    %v808 = vpop.f32.mrf.mxu0
    %v809 = vadd.f32 %v106, %v808
    %v810 = vpop.f32.mrf.mxu0
    %v811 = vadd.f32 %v106, %v810
    %812 = vmatmul.bf16.gmra.mxu0 %v174
    %v813 = vpop.f32.mrf.mxu0
    %v814 = vadd.f32 %v106, %v813
    %v815 = vpop.f32.mrf.mxu0
    %v816 = vadd.f32 %v106, %v815
    %817 = vmatmul.bf16.gmra.mxu0 %v177
    %v818 = vpop.f32.mrf.mxu0
    %v819 = vadd.f32 %v106, %v818
    %v820 = vpop.f32.mrf.mxu0
    %v821 = vadd.f32 %v106, %v820
    %822 = vmatmul.bf16.gmra.mxu0 %v180
    %v823 = vpop.f32.mrf.mxu0
    %v824 = vadd.f32 %v106, %v823
    %v825 = vpop.f32.mrf.mxu0
    %v826 = vadd.f32 %v106, %v825
    %827 = vmatmul.bf16.gmra.mxu0 %v183
    %v828 = vpop.f32.mrf.mxu0
    %v829 = vadd.f32 %v106, %v828
    %v830 = vpop.f32.mrf.mxu0
    %v831 = vadd.f32 %v106, %v830
    %832 = vdwg.mxu0
    %833 = vmatpush.bf16.msra.mxu0 0
    %834 = vmatpush.bf16.msra.mxu0 0
    %835 = vmatpush.bf16.msra.mxu0 0
    %836 = vmatpush.bf16.msra.mxu0 0
    %837 = vmatpush.bf16.msra.mxu0 0
    %838 = vmatpush.bf16.msra.mxu0 0
    %839 = vmatpush.bf16.msra.mxu0 0
    %840 = vmatpush.bf16.msra.mxu0 %v208
    %841 = vmatmul.bf16.gmra.mxu0 %v138
    %v842 = vpop.f32.mrf.mxu0
    %v843 = vadd.f32 %v107, %v842
    %v844 = vpop.f32.mrf.mxu0
    %v845 = vadd.f32 %v107, %v844
    %846 = vmatmul.bf16.gmra.mxu0 %v141
    %v847 = vpop.f32.mrf.mxu0
    %v848 = vadd.f32 %v107, %v847
    %v849 = vpop.f32.mrf.mxu0
    %v850 = vadd.f32 %v107, %v849
    %851 = vmatmul.bf16.gmra.mxu0 %v144
    %v852 = vpop.f32.mrf.mxu0
    %v853 = vadd.f32 %v107, %v852
    %v854 = vpop.f32.mrf.mxu0
    %v855 = vadd.f32 %v107, %v854
    %856 = vmatmul.bf16.gmra.mxu0 %v147
    %v857 = vpop.f32.mrf.mxu0
    %v858 = vadd.f32 %v107, %v857
    %v859 = vpop.f32.mrf.mxu0
    %v860 = vadd.f32 %v107, %v859
    %861 = vmatmul.bf16.gmra.mxu0 %v150
    %v862 = vpop.f32.mrf.mxu0
    %v863 = vadd.f32 %v107, %v862
    %v864 = vpop.f32.mrf.mxu0
    %v865 = vadd.f32 %v107, %v864
    %866 = vmatmul.bf16.gmra.mxu0 %v153
    %v867 = vpop.f32.mrf.mxu0
    %v868 = vadd.f32 %v107, %v867
    %v869 = vpop.f32.mrf.mxu0
    %v870 = vadd.f32 %v107, %v869
    %871 = vmatmul.bf16.gmra.mxu0 %v156
    %v872 = vpop.f32.mrf.mxu0
    %v873 = vadd.f32 %v107, %v872
    %v874 = vpop.f32.mrf.mxu0
    %v875 = vadd.f32 %v107, %v874
    %876 = vmatmul.bf16.gmra.mxu0 %v159
    %v877 = vpop.f32.mrf.mxu0
    %v878 = vadd.f32 %v107, %v877
    %v879 = vpop.f32.mrf.mxu0
    %v880 = vadd.f32 %v107, %v879
    %881 = vmatmul.bf16.gmra.mxu0 %v162
    %v882 = vpop.f32.mrf.mxu0
    %v883 = vadd.f32 %v107, %v882
    %v884 = vpop.f32.mrf.mxu0
    %v885 = vadd.f32 %v107, %v884
    %886 = vmatmul.bf16.gmra.mxu0 %v165
    %v887 = vpop.f32.mrf.mxu0
    %v888 = vadd.f32 %v107, %v887
    %v889 = vpop.f32.mrf.mxu0
    %v890 = vadd.f32 %v107, %v889
    %891 = vmatmul.bf16.gmra.mxu0 %v168
    %v892 = vpop.f32.mrf.mxu0
    %v893 = vadd.f32 %v107, %v892
    %v894 = vpop.f32.mrf.mxu0
    %v895 = vadd.f32 %v107, %v894
    %896 = vmatmul.bf16.gmra.mxu0 %v171
    %v897 = vpop.f32.mrf.mxu0
    %v898 = vadd.f32 %v107, %v897
    %v899 = vpop.f32.mrf.mxu0
    %v900 = vadd.f32 %v107, %v899
    %901 = vmatmul.bf16.gmra.mxu0 %v174
    %v902 = vpop.f32.mrf.mxu0
    %v903 = vadd.f32 %v107, %v902
    %v904 = vpop.f32.mrf.mxu0
    %v905 = vadd.f32 %v107, %v904
    %906 = vmatmul.bf16.gmra.mxu0 %v177
    %v907 = vpop.f32.mrf.mxu0
    %v908 = vadd.f32 %v107, %v907
    %v909 = vpop.f32.mrf.mxu0
    %v910 = vadd.f32 %v107, %v909
    %911 = vmatmul.bf16.gmra.mxu0 %v180
    %v912 = vpop.f32.mrf.mxu0
    %v913 = vadd.f32 %v107, %v912
    %v914 = vpop.f32.mrf.mxu0
    %v915 = vadd.f32 %v107, %v914
    %916 = vmatmul.bf16.gmra.mxu0 %v183
    %v917 = vpop.f32.mrf.mxu0
    %v918 = vadd.f32 %v107, %v917
    %v919 = vpop.f32.mrf.mxu0
    %v920 = vadd.f32 %v107, %v919
    %921 = vdwg.mxu0
    %v922 = vmax.f32 %v220, 0.0
    %v923 = vmax.f32 %v309, 0.0
    %v924 = vmax.f32 %v398, 0.0
    %v925 = vmax.f32 %v487, 0.0
    %v926 = vmax.f32 %v576, 0.0
    %v927 = vmax.f32 %v665, 0.0
    %v928 = vmax.f32 %v754, 0.0
    %v929 = vmax.f32 %v843, 0.0
    %v930 = vmax.f32 %v222, 0.0
    %v931 = vmax.f32 %v311, 0.0
    %v932 = vmax.f32 %v400, 0.0
    %v933 = vmax.f32 %v489, 0.0
    %v934 = vmax.f32 %v578, 0.0
    %v935 = vmax.f32 %v667, 0.0
    %v936 = vmax.f32 %v756, 0.0
    %v937 = vmax.f32 %v845, 0.0
    %v938 = vmax.f32 %v225, 0.0
    %v939 = vmax.f32 %v314, 0.0
    %v940 = vmax.f32 %v403, 0.0
    %v941 = vmax.f32 %v492, 0.0
    %v942 = vmax.f32 %v581, 0.0
    %v943 = vmax.f32 %v670, 0.0
    %v944 = vmax.f32 %v759, 0.0
    %v945 = vmax.f32 %v848, 0.0
    %v946 = vmax.f32 %v227, 0.0
    %v947 = vmax.f32 %v316, 0.0
    %v948 = vmax.f32 %v405, 0.0
    %v949 = vmax.f32 %v494, 0.0
    %v950 = vmax.f32 %v583, 0.0
    %v951 = vmax.f32 %v672, 0.0
    %v952 = vmax.f32 %v761, 0.0
    %v953 = vmax.f32 %v850, 0.0
    %v954 = vmax.f32 %v230, 0.0
    %v955 = vmax.f32 %v319, 0.0
    %v956 = vmax.f32 %v408, 0.0
    %v957 = vmax.f32 %v497, 0.0
    %v958 = vmax.f32 %v586, 0.0
    %v959 = vmax.f32 %v675, 0.0
    %v960 = vmax.f32 %v764, 0.0
    %v961 = vmax.f32 %v853, 0.0
    %v962 = vmax.f32 %v232, 0.0
    %v963 = vmax.f32 %v321, 0.0
    %v964 = vmax.f32 %v410, 0.0
    %v965 = vmax.f32 %v499, 0.0
    %v966 = vmax.f32 %v588, 0.0
    %v967 = vmax.f32 %v677, 0.0
    %v968 = vmax.f32 %v766, 0.0
    %v969 = vmax.f32 %v855, 0.0
    %v970 = vmax.f32 %v235, 0.0
    %v971 = vmax.f32 %v324, 0.0
    %v972 = vmax.f32 %v413, 0.0
    %v973 = vmax.f32 %v502, 0.0
    %v974 = vmax.f32 %v591, 0.0
    %v975 = vmax.f32 %v680, 0.0
    %v976 = vmax.f32 %v769, 0.0
    %v977 = vmax.f32 %v858, 0.0
    %v978 = vmax.f32 %v237, 0.0
    %v979 = vmax.f32 %v326, 0.0
    %v980 = vmax.f32 %v415, 0.0
    %v981 = vmax.f32 %v504, 0.0
    %v982 = vmax.f32 %v593, 0.0
    %v983 = vmax.f32 %v682, 0.0
    %v984 = vmax.f32 %v771, 0.0
    %v985 = vmax.f32 %v860, 0.0
    %v986 = vmax.f32 %v240, 0.0
    %v987 = vmax.f32 %v329, 0.0
    %v988 = vmax.f32 %v418, 0.0
    %v989 = vmax.f32 %v507, 0.0
    %v990 = vmax.f32 %v596, 0.0
    %v991 = vmax.f32 %v685, 0.0
    %v992 = vmax.f32 %v774, 0.0
    %v993 = vmax.f32 %v863, 0.0
    %v994 = vmax.f32 %v242, 0.0
    %v995 = vmax.f32 %v331, 0.0
    %v996 = vmax.f32 %v420, 0.0
    %v997 = vmax.f32 %v509, 0.0
    %v998 = vmax.f32 %v598, 0.0
    %v999 = vmax.f32 %v687, 0.0
    %v1000 = vmax.f32 %v776, 0.0
    %v1001 = vmax.f32 %v865, 0.0
    %v1002 = vmax.f32 %v245, 0.0
    %v1003 = vmax.f32 %v334, 0.0
    %v1004 = vmax.f32 %v423, 0.0
    %v1005 = vmax.f32 %v512, 0.0
    %v1006 = vmax.f32 %v601, 0.0
    %v1007 = vmax.f32 %v690, 0.0
    %v1008 = vmax.f32 %v779, 0.0
    %v1009 = vmax.f32 %v868, 0.0
    %v1010 = vmax.f32 %v247, 0.0
    %v1011 = vmax.f32 %v336, 0.0
    %v1012 = vmax.f32 %v425, 0.0
    %v1013 = vmax.f32 %v514, 0.0
    %v1014 = vmax.f32 %v603, 0.0
    %v1015 = vmax.f32 %v692, 0.0
    %v1016 = vmax.f32 %v781, 0.0
    %v1017 = vmax.f32 %v870, 0.0
    %v1018 = vmax.f32 %v250, 0.0
    %v1019 = vmax.f32 %v339, 0.0
    %v1020 = vmax.f32 %v428, 0.0
    %v1021 = vmax.f32 %v517, 0.0
    %v1022 = vmax.f32 %v606, 0.0
    %v1023 = vmax.f32 %v695, 0.0
    %v1024 = vmax.f32 %v784, 0.0
    %v1025 = vmax.f32 %v873, 0.0
    %v1026 = vmax.f32 %v252, 0.0
    %v1027 = vmax.f32 %v341, 0.0
    %v1028 = vmax.f32 %v430, 0.0
    %v1029 = vmax.f32 %v519, 0.0
    %v1030 = vmax.f32 %v608, 0.0
    %v1031 = vmax.f32 %v697, 0.0
    %v1032 = vmax.f32 %v786, 0.0
    %v1033 = vmax.f32 %v875, 0.0
    %v1034 = vmax.f32 %v255, 0.0
    %v1035 = vmax.f32 %v344, 0.0
    %v1036 = vmax.f32 %v433, 0.0
    %v1037 = vmax.f32 %v522, 0.0
    %v1038 = vmax.f32 %v611, 0.0
    %v1039 = vmax.f32 %v700, 0.0
    %v1040 = vmax.f32 %v789, 0.0
    %v1041 = vmax.f32 %v878, 0.0
    %v1042 = vmax.f32 %v257, 0.0
    %v1043 = vmax.f32 %v346, 0.0
    %v1044 = vmax.f32 %v435, 0.0
    %v1045 = vmax.f32 %v524, 0.0
    %v1046 = vmax.f32 %v613, 0.0
    %v1047 = vmax.f32 %v702, 0.0
    %v1048 = vmax.f32 %v791, 0.0
    %v1049 = vmax.f32 %v880, 0.0
    %v1050 = vmax.f32 %v260, 0.0
    %v1051 = vmax.f32 %v349, 0.0
    %v1052 = vmax.f32 %v438, 0.0
    %v1053 = vmax.f32 %v527, 0.0
    %v1054 = vmax.f32 %v616, 0.0
    %v1055 = vmax.f32 %v705, 0.0
    %v1056 = vmax.f32 %v794, 0.0
    %v1057 = vmax.f32 %v883, 0.0
    %v1058 = vmax.f32 %v262, 0.0
    %v1059 = vmax.f32 %v351, 0.0
    %v1060 = vmax.f32 %v440, 0.0
    %v1061 = vmax.f32 %v529, 0.0
    %v1062 = vmax.f32 %v618, 0.0
    %v1063 = vmax.f32 %v707, 0.0
    %v1064 = vmax.f32 %v796, 0.0
    %v1065 = vmax.f32 %v885, 0.0
    %v1066 = vmax.f32 %v265, 0.0
    %v1067 = vmax.f32 %v354, 0.0
    %v1068 = vmax.f32 %v443, 0.0
    %v1069 = vmax.f32 %v532, 0.0
    %v1070 = vmax.f32 %v621, 0.0
    %v1071 = vmax.f32 %v710, 0.0
    %v1072 = vmax.f32 %v799, 0.0
    %v1073 = vmax.f32 %v888, 0.0
    %v1074 = vmax.f32 %v267, 0.0
    %v1075 = vmax.f32 %v356, 0.0
    %v1076 = vmax.f32 %v445, 0.0
    %v1077 = vmax.f32 %v534, 0.0
    %v1078 = vmax.f32 %v623, 0.0
    %v1079 = vmax.f32 %v712, 0.0
    %v1080 = vmax.f32 %v801, 0.0
    %v1081 = vmax.f32 %v890, 0.0
    %v1082 = vmax.f32 %v270, 0.0
    %v1083 = vmax.f32 %v359, 0.0
    %v1084 = vmax.f32 %v448, 0.0
    %v1085 = vmax.f32 %v537, 0.0
    %v1086 = vmax.f32 %v626, 0.0
    %v1087 = vmax.f32 %v715, 0.0
    %v1088 = vmax.f32 %v804, 0.0
    %v1089 = vmax.f32 %v893, 0.0
    %v1090 = vmax.f32 %v272, 0.0
    %v1091 = vmax.f32 %v361, 0.0
    %v1092 = vmax.f32 %v450, 0.0
    %v1093 = vmax.f32 %v539, 0.0
    %v1094 = vmax.f32 %v628, 0.0
    %v1095 = vmax.f32 %v717, 0.0
    %v1096 = vmax.f32 %v806, 0.0
    %v1097 = vmax.f32 %v895, 0.0
    %v1098 = vmax.f32 %v275, 0.0
    %v1099 = vmax.f32 %v364, 0.0
    %v1100 = vmax.f32 %v453, 0.0
    %v1101 = vmax.f32 %v542, 0.0
    %v1102 = vmax.f32 %v631, 0.0
    %v1103 = vmax.f32 %v720, 0.0
    %v1104 = vmax.f32 %v809, 0.0
    %v1105 = vmax.f32 %v898, 0.0
    %v1106 = vmax.f32 %v277, 0.0
    %v1107 = vmax.f32 %v366, 0.0
    %v1108 = vmax.f32 %v455, 0.0
    %v1109 = vmax.f32 %v544, 0.0
    %v1110 = vmax.f32 %v633, 0.0
    %v1111 = vmax.f32 %v722, 0.0
    %v1112 = vmax.f32 %v811, 0.0
    %v1113 = vmax.f32 %v900, 0.0
    %v1114 = vmax.f32 %v280, 0.0
    %v1115 = vmax.f32 %v369, 0.0
    %v1116 = vmax.f32 %v458, 0.0
    %v1117 = vmax.f32 %v547, 0.0
    %v1118 = vmax.f32 %v636, 0.0
    %v1119 = vmax.f32 %v725, 0.0
    %v1120 = vmax.f32 %v814, 0.0
    %v1121 = vmax.f32 %v903, 0.0
    %v1122 = vmax.f32 %v282, 0.0
    %v1123 = vmax.f32 %v371, 0.0
    %v1124 = vmax.f32 %v460, 0.0
    %v1125 = vmax.f32 %v549, 0.0
    %v1126 = vmax.f32 %v638, 0.0
    %v1127 = vmax.f32 %v727, 0.0
    %v1128 = vmax.f32 %v816, 0.0
    %v1129 = vmax.f32 %v905, 0.0
    %v1130 = vmax.f32 %v285, 0.0
    %v1131 = vmax.f32 %v374, 0.0
    %v1132 = vmax.f32 %v463, 0.0
    %v1133 = vmax.f32 %v552, 0.0
    %v1134 = vmax.f32 %v641, 0.0
    %v1135 = vmax.f32 %v730, 0.0
    %v1136 = vmax.f32 %v819, 0.0
    %v1137 = vmax.f32 %v908, 0.0
    %v1138 = vmax.f32 %v287, 0.0
    %v1139 = vmax.f32 %v376, 0.0
    %v1140 = vmax.f32 %v465, 0.0
    %v1141 = vmax.f32 %v554, 0.0
    %v1142 = vmax.f32 %v643, 0.0
    %v1143 = vmax.f32 %v732, 0.0
    %v1144 = vmax.f32 %v821, 0.0
    %v1145 = vmax.f32 %v910, 0.0
    %v1146 = vmax.f32 %v290, 0.0
    %v1147 = vmax.f32 %v379, 0.0
    %v1148 = vmax.f32 %v468, 0.0
    %v1149 = vmax.f32 %v557, 0.0
    %v1150 = vmax.f32 %v646, 0.0
    %v1151 = vmax.f32 %v735, 0.0
    %v1152 = vmax.f32 %v824, 0.0
    %v1153 = vmax.f32 %v913, 0.0
    %v1154 = vmax.f32 %v292, 0.0
    %v1155 = vmax.f32 %v381, 0.0
    %v1156 = vmax.f32 %v470, 0.0
    %v1157 = vmax.f32 %v559, 0.0
    %v1158 = vmax.f32 %v648, 0.0
    %v1159 = vmax.f32 %v737, 0.0
    %v1160 = vmax.f32 %v826, 0.0
    %v1161 = vmax.f32 %v915, 0.0
    %v1162 = vmax.f32 %v295, 0.0
    %v1163 = vmax.f32 %v384, 0.0
    %v1164 = vmax.f32 %v473, 0.0
    %v1165 = vmax.f32 %v562, 0.0
    %v1166 = vmax.f32 %v651, 0.0
    %v1167 = vmax.f32 %v740, 0.0
    %v1168 = vmax.f32 %v829, 0.0
    %v1169 = vmax.f32 %v918, 0.0
    %v1170 = vmax.f32 %v297, 0.0
    %v1171 = vmax.f32 %v386, 0.0
    %v1172 = vmax.f32 %v475, 0.0
    %v1173 = vmax.f32 %v564, 0.0
    %v1174 = vmax.f32 %v653, 0.0
    %v1175 = vmax.f32 %v742, 0.0
    %v1176 = vmax.f32 %v831, 0.0
    %v1177 = vmax.f32 %v920, 0.0
    %v1178 = vpack.c.bf16 %v930, %v922
    %v1179 = vpack.c.bf16 %v931, %v923
    %v1180 = vpack.c.bf16 %v932, %v924
    %v1181 = vpack.c.bf16 %v933, %v925
    %v1182 = vpack.c.bf16 %v934, %v926
    %v1183 = vpack.c.bf16 %v935, %v927
    %v1184 = vpack.c.bf16 %v936, %v928
    %v1185 = vpack.c.bf16 %v937, %v929
    %v1186 = vpack.c.bf16 %v946, %v938
    %v1187 = vpack.c.bf16 %v947, %v939
    %v1188 = vpack.c.bf16 %v948, %v940
    %v1189 = vpack.c.bf16 %v949, %v941
    %v1190 = vpack.c.bf16 %v950, %v942
    %v1191 = vpack.c.bf16 %v951, %v943
    %v1192 = vpack.c.bf16 %v952, %v944
    %v1193 = vpack.c.bf16 %v953, %v945
    %v1194 = vpack.c.bf16 %v962, %v954
    %v1195 = vpack.c.bf16 %v963, %v955
    %v1196 = vpack.c.bf16 %v964, %v956
    %v1197 = vpack.c.bf16 %v965, %v957
    %v1198 = vpack.c.bf16 %v966, %v958
    %v1199 = vpack.c.bf16 %v967, %v959
    %v1200 = vpack.c.bf16 %v968, %v960
    %v1201 = vpack.c.bf16 %v969, %v961
    %v1202 = vpack.c.bf16 %v978, %v970
    %v1203 = vpack.c.bf16 %v979, %v971
    %v1204 = vpack.c.bf16 %v980, %v972
    %v1205 = vpack.c.bf16 %v981, %v973
    %v1206 = vpack.c.bf16 %v982, %v974
    %v1207 = vpack.c.bf16 %v983, %v975
    %v1208 = vpack.c.bf16 %v984, %v976
    %v1209 = vpack.c.bf16 %v985, %v977
    %v1210 = vpack.c.bf16 %v994, %v986
    %v1211 = vpack.c.bf16 %v995, %v987
    %v1212 = vpack.c.bf16 %v996, %v988
    %v1213 = vpack.c.bf16 %v997, %v989
    %v1214 = vpack.c.bf16 %v998, %v990
    %v1215 = vpack.c.bf16 %v999, %v991
    %v1216 = vpack.c.bf16 %v1000, %v992
    %v1217 = vpack.c.bf16 %v1001, %v993
    %v1218 = vpack.c.bf16 %v1010, %v1002
    %v1219 = vpack.c.bf16 %v1011, %v1003
    %v1220 = vpack.c.bf16 %v1012, %v1004
    %v1221 = vpack.c.bf16 %v1013, %v1005
    %v1222 = vpack.c.bf16 %v1014, %v1006
    %v1223 = vpack.c.bf16 %v1015, %v1007
    %v1224 = vpack.c.bf16 %v1016, %v1008
    %v1225 = vpack.c.bf16 %v1017, %v1009
    %v1226 = vpack.c.bf16 %v1026, %v1018
    %v1227 = vpack.c.bf16 %v1027, %v1019
    %v1228 = vpack.c.bf16 %v1028, %v1020
    %v1229 = vpack.c.bf16 %v1029, %v1021
    %v1230 = vpack.c.bf16 %v1030, %v1022
    %v1231 = vpack.c.bf16 %v1031, %v1023
    %v1232 = vpack.c.bf16 %v1032, %v1024
    %v1233 = vpack.c.bf16 %v1033, %v1025
    %v1234 = vpack.c.bf16 %v1042, %v1034
    %v1235 = vpack.c.bf16 %v1043, %v1035
    %v1236 = vpack.c.bf16 %v1044, %v1036
    %v1237 = vpack.c.bf16 %v1045, %v1037
    %v1238 = vpack.c.bf16 %v1046, %v1038
    %v1239 = vpack.c.bf16 %v1047, %v1039
    %v1240 = vpack.c.bf16 %v1048, %v1040
    %v1241 = vpack.c.bf16 %v1049, %v1041
    %v1242 = vpack.c.bf16 %v1058, %v1050
    %v1243 = vpack.c.bf16 %v1059, %v1051
    %v1244 = vpack.c.bf16 %v1060, %v1052
    %v1245 = vpack.c.bf16 %v1061, %v1053
    %v1246 = vpack.c.bf16 %v1062, %v1054
    %v1247 = vpack.c.bf16 %v1063, %v1055
    %v1248 = vpack.c.bf16 %v1064, %v1056
    %v1249 = vpack.c.bf16 %v1065, %v1057
    %v1250 = vpack.c.bf16 %v1074, %v1066
    %v1251 = vpack.c.bf16 %v1075, %v1067
    %v1252 = vpack.c.bf16 %v1076, %v1068
    %v1253 = vpack.c.bf16 %v1077, %v1069
    %v1254 = vpack.c.bf16 %v1078, %v1070
    %v1255 = vpack.c.bf16 %v1079, %v1071
    %v1256 = vpack.c.bf16 %v1080, %v1072
    %v1257 = vpack.c.bf16 %v1081, %v1073
    %v1258 = vpack.c.bf16 %v1090, %v1082
    %v1259 = vpack.c.bf16 %v1091, %v1083
    %v1260 = vpack.c.bf16 %v1092, %v1084
    %v1261 = vpack.c.bf16 %v1093, %v1085
    %v1262 = vpack.c.bf16 %v1094, %v1086
    %v1263 = vpack.c.bf16 %v1095, %v1087
    %v1264 = vpack.c.bf16 %v1096, %v1088
    %v1265 = vpack.c.bf16 %v1097, %v1089
    %v1266 = vpack.c.bf16 %v1106, %v1098
    %v1267 = vpack.c.bf16 %v1107, %v1099
    %v1268 = vpack.c.bf16 %v1108, %v1100
    %v1269 = vpack.c.bf16 %v1109, %v1101
    %v1270 = vpack.c.bf16 %v1110, %v1102
    %v1271 = vpack.c.bf16 %v1111, %v1103
    %v1272 = vpack.c.bf16 %v1112, %v1104
    %v1273 = vpack.c.bf16 %v1113, %v1105
    %v1274 = vpack.c.bf16 %v1122, %v1114
    %v1275 = vpack.c.bf16 %v1123, %v1115
    %v1276 = vpack.c.bf16 %v1124, %v1116
    %v1277 = vpack.c.bf16 %v1125, %v1117
    %v1278 = vpack.c.bf16 %v1126, %v1118
    %v1279 = vpack.c.bf16 %v1127, %v1119
    %v1280 = vpack.c.bf16 %v1128, %v1120
    %v1281 = vpack.c.bf16 %v1129, %v1121
    %v1282 = vpack.c.bf16 %v1138, %v1130
    %v1283 = vpack.c.bf16 %v1139, %v1131
    %v1284 = vpack.c.bf16 %v1140, %v1132
    %v1285 = vpack.c.bf16 %v1141, %v1133
    %v1286 = vpack.c.bf16 %v1142, %v1134
    %v1287 = vpack.c.bf16 %v1143, %v1135
    %v1288 = vpack.c.bf16 %v1144, %v1136
    %v1289 = vpack.c.bf16 %v1145, %v1137
    %v1290 = vpack.c.bf16 %v1154, %v1146
    %v1291 = vpack.c.bf16 %v1155, %v1147
    %v1292 = vpack.c.bf16 %v1156, %v1148
    %v1293 = vpack.c.bf16 %v1157, %v1149
    %v1294 = vpack.c.bf16 %v1158, %v1150
    %v1295 = vpack.c.bf16 %v1159, %v1151
    %v1296 = vpack.c.bf16 %v1160, %v1152
    %v1297 = vpack.c.bf16 %v1161, %v1153
    %v1298 = vpack.c.bf16 %v1170, %v1162
    %v1299 = vpack.c.bf16 %v1171, %v1163
    %v1300 = vpack.c.bf16 %v1172, %v1164
    %v1301 = vpack.c.bf16 %v1173, %v1165
    %v1302 = vpack.c.bf16 %v1174, %v1166
    %v1303 = vpack.c.bf16 %v1175, %v1167
    %v1304 = vpack.c.bf16 %v1176, %v1168
    %v1305 = vpack.c.bf16 %v1177, %v1169
    %v1306 = vld [vmem:[#allocation3] sm:$0xff]
    %v1307 = vld [vmem:[#allocation3 + $0x8] sm:$0xff]
    %v1308 = vld [vmem:[#allocation3 + $0x10] sm:$0xff]
    %v1309 = vld [vmem:[#allocation3 + $0x18] sm:$0xff]
    %v1310 = vld [vmem:[#allocation3 + $0x20] sm:$0xff]
    %v1311 = vld [vmem:[#allocation3 + $0x28] sm:$0xff]
    %v1312 = vld [vmem:[#allocation3 + $0x30] sm:$0xff]
    %v1313 = vld [vmem:[#allocation3 + $0x38] sm:$0xff]
    %v1314 = vld [vmem:[#allocation3 + $0x40] sm:$0xff]
    %v1315 = vld [vmem:[#allocation3 + $0x48] sm:$0xff]
    %v1316 = vld [vmem:[#allocation3 + $0x50] sm:$0xff]
    %v1317 = vld [vmem:[#allocation3 + $0x58] sm:$0xff]
    %v1318 = vld [vmem:[#allocation3 + $0x60] sm:$0xff]
    %v1319 = vld [vmem:[#allocation3 + $0x68] sm:$0xff]
    %v1320 = vld [vmem:[#allocation3 + $0x70] sm:$0xff]
    %v1321 = vld [vmem:[#allocation3 + $0x78] sm:$0xff]
    %v1322 = vld [vmem:[#allocation3 + $0x80] sm:$0xff]
    %v1323 = vld [vmem:[#allocation3 + $0x88] sm:$0xff]
    %v1324 = vld [vmem:[#allocation3 + $0x90] sm:$0xff]
    %v1325 = vld [vmem:[#allocation3 + $0x98] sm:$0xff]
    %v1326 = vld [vmem:[#allocation3 + $0xa0] sm:$0xff]
    %v1327 = vld [vmem:[#allocation3 + $0xa8] sm:$0xff]
    %v1328 = vld [vmem:[#allocation3 + $0xb0] sm:$0xff]
    %v1329 = vld [vmem:[#allocation3 + $0xb8] sm:$0xff]
    %v1330 = vld [vmem:[#allocation3 + $0xc0] sm:$0xff]
    %v1331 = vld [vmem:[#allocation3 + $0xc8] sm:$0xff]
    %v1332 = vld [vmem:[#allocation3 + $0xd0] sm:$0xff]
    %v1333 = vld [vmem:[#allocation3 + $0xd8] sm:$0xff]
    %v1334 = vld [vmem:[#allocation3 + $0xe0] sm:$0xff]
    %v1335 = vld [vmem:[#allocation3 + $0xe8] sm:$0xff]
    %v1336 = vld [vmem:[#allocation3 + $0xf0] sm:$0xff]
    %v1337 = vld [vmem:[#allocation3 + $0xf8] sm:$0xff]
    %v1338 = vld [vmem:[#allocation3 + $0x100] sm:$0xff]
    %v1339 = vld [vmem:[#allocation3 + $0x108] sm:$0xff]
    %v1340 = vld [vmem:[#allocation3 + $0x110] sm:$0xff]
    %v1341 = vld [vmem:[#allocation3 + $0x118] sm:$0xff]
    %v1342 = vld [vmem:[#allocation3 + $0x120] sm:$0xff]
    %v1343 = vld [vmem:[#allocation3 + $0x128] sm:$0xff]
    %v1344 = vld [vmem:[#allocation3 + $0x130] sm:$0xff]
    %v1345 = vld [vmem:[#allocation3 + $0x138] sm:$0xff]
    %v1346 = vld [vmem:[#allocation3 + $0x140] sm:$0xff]
    %v1347 = vld [vmem:[#allocation3 + $0x148] sm:$0xff]
    %v1348 = vld [vmem:[#allocation3 + $0x150] sm:$0xff]
    %v1349 = vld [vmem:[#allocation3 + $0x158] sm:$0xff]
    %v1350 = vld [vmem:[#allocation3 + $0x160] sm:$0xff]
    %v1351 = vld [vmem:[#allocation3 + $0x168] sm:$0xff]
    %v1352 = vld [vmem:[#allocation3 + $0x170] sm:$0xff]
    %v1353 = vld [vmem:[#allocation3 + $0x178] sm:$0xff]
    %v1354 = vld [vmem:[#allocation3 + $0x180] sm:$0xff]
    %v1355 = vld [vmem:[#allocation3 + $0x188] sm:$0xff]
    %v1356 = vld [vmem:[#allocation3 + $0x190] sm:$0xff]
    %v1357 = vld [vmem:[#allocation3 + $0x198] sm:$0xff]
    %v1358 = vld [vmem:[#allocation3 + $0x1a0] sm:$0xff]
    %v1359 = vld [vmem:[#allocation3 + $0x1a8] sm:$0xff]
    %v1360 = vld [vmem:[#allocation3 + $0x1b0] sm:$0xff]
    %v1361 = vld [vmem:[#allocation3 + $0x1b8] sm:$0xff]
    %v1362 = vld [vmem:[#allocation3 + $0x1c0] sm:$0xff]
    %v1363 = vld [vmem:[#allocation3 + $0x1c8] sm:$0xff]
    %v1364 = vld [vmem:[#allocation3 + $0x1d0] sm:$0xff]
    %v1365 = vld [vmem:[#allocation3 + $0x1d8] sm:$0xff]
    %v1366 = vld [vmem:[#allocation3 + $0x1e0] sm:$0xff]
    %v1367 = vld [vmem:[#allocation3 + $0x1e8] sm:$0xff]
    %v1368 = vld [vmem:[#allocation3 + $0x1f0] sm:$0xff]
    %v1369 = vld [vmem:[#allocation3 + $0x1f8] sm:$0xff]
    %v1370 = vld [vmem:[#allocation3 + $0x200] sm:$0xff]
    %v1371 = vld [vmem:[#allocation3 + $0x208] sm:$0xff]
    %v1372 = vld [vmem:[#allocation3 + $0x210] sm:$0xff]
    %v1373 = vld [vmem:[#allocation3 + $0x218] sm:$0xff]
    %v1374 = vld [vmem:[#allocation3 + $0x220] sm:$0xff]
    %v1375 = vld [vmem:[#allocation3 + $0x228] sm:$0xff]
    %v1376 = vld [vmem:[#allocation3 + $0x230] sm:$0xff]
    %v1377 = vld [vmem:[#allocation3 + $0x238] sm:$0xff]
    %v1378 = vld [vmem:[#allocation3 + $0x240] sm:$0xff]
    %v1379 = vld [vmem:[#allocation3 + $0x248] sm:$0xff]
    %v1380 = vld [vmem:[#allocation3 + $0x250] sm:$0xff]
    %v1381 = vld [vmem:[#allocation3 + $0x258] sm:$0xff]
    %v1382 = vld [vmem:[#allocation3 + $0x260] sm:$0xff]
    %v1383 = vld [vmem:[#allocation3 + $0x268] sm:$0xff]
    %v1384 = vld [vmem:[#allocation3 + $0x270] sm:$0xff]
    %v1385 = vld [vmem:[#allocation3 + $0x278] sm:$0xff]
    %v1386 = vld [vmem:[#allocation3 + $0x280] sm:$0xff]
    %v1387 = vld [vmem:[#allocation3 + $0x288] sm:$0xff]
    %v1388 = vld [vmem:[#allocation3 + $0x290] sm:$0xff]
    %v1389 = vld [vmem:[#allocation3 + $0x298] sm:$0xff]
    %v1390 = vld [vmem:[#allocation3 + $0x2a0] sm:$0xff]
    %v1391 = vld [vmem:[#allocation3 + $0x2a8] sm:$0xff]
    %v1392 = vld [vmem:[#allocation3 + $0x2b0] sm:$0xff]
    %v1393 = vld [vmem:[#allocation3 + $0x2b8] sm:$0xff]
    %v1394 = vld [vmem:[#allocation3 + $0x2c0] sm:$0xff]
    %v1395 = vld [vmem:[#allocation3 + $0x2c8] sm:$0xff]
    %v1396 = vld [vmem:[#allocation3 + $0x2d0] sm:$0xff]
    %v1397 = vld [vmem:[#allocation3 + $0x2d8] sm:$0xff]
    %v1398 = vld [vmem:[#allocation3 + $0x2e0] sm:$0xff]
    %v1399 = vld [vmem:[#allocation3 + $0x2e8] sm:$0xff]
    %v1400 = vld [vmem:[#allocation3 + $0x2f0] sm:$0xff]
    %v1401 = vld [vmem:[#allocation3 + $0x2f8] sm:$0xff]
    %v1402 = vld [vmem:[#allocation3 + $0x300] sm:$0xff]
    %v1403 = vld [vmem:[#allocation3 + $0x308] sm:$0xff]
    %v1404 = vld [vmem:[#allocation3 + $0x310] sm:$0xff]
    %v1405 = vld [vmem:[#allocation3 + $0x318] sm:$0xff]
    %v1406 = vld [vmem:[#allocation3 + $0x320] sm:$0xff]
    %v1407 = vld [vmem:[#allocation3 + $0x328] sm:$0xff]
    %v1408 = vld [vmem:[#allocation3 + $0x330] sm:$0xff]
    %v1409 = vld [vmem:[#allocation3 + $0x338] sm:$0xff]
    %v1410 = vld [vmem:[#allocation3 + $0x340] sm:$0xff]
    %v1411 = vld [vmem:[#allocation3 + $0x348] sm:$0xff]
    %v1412 = vld [vmem:[#allocation3 + $0x350] sm:$0xff]
    %v1413 = vld [vmem:[#allocation3 + $0x358] sm:$0xff]
    %v1414 = vld [vmem:[#allocation3 + $0x360] sm:$0xff]
    %v1415 = vld [vmem:[#allocation3 + $0x368] sm:$0xff]
    %v1416 = vld [vmem:[#allocation3 + $0x370] sm:$0xff]
    %v1417 = vld [vmem:[#allocation3 + $0x378] sm:$0xff]
    %v1418 = vld [vmem:[#allocation3 + $0x380] sm:$0xff]
    %v1419 = vld [vmem:[#allocation3 + $0x388] sm:$0xff]
    %v1420 = vld [vmem:[#allocation3 + $0x390] sm:$0xff]
    %v1421 = vld [vmem:[#allocation3 + $0x398] sm:$0xff]
    %v1422 = vld [vmem:[#allocation3 + $0x3a0] sm:$0xff]
    %v1423 = vld [vmem:[#allocation3 + $0x3a8] sm:$0xff]
    %v1424 = vld [vmem:[#allocation3 + $0x3b0] sm:$0xff]
    %v1425 = vld [vmem:[#allocation3 + $0x3b8] sm:$0xff]
    %v1426 = vld [vmem:[#allocation3 + $0x3c0] sm:$0xff]
    %v1427 = vld [vmem:[#allocation3 + $0x3c8] sm:$0xff]
    %v1428 = vld [vmem:[#allocation3 + $0x3d0] sm:$0xff]
    %v1429 = vld [vmem:[#allocation3 + $0x3d8] sm:$0xff]
    %v1430 = vld [vmem:[#allocation3 + $0x3e0] sm:$0xff]
    %v1431 = vld [vmem:[#allocation3 + $0x3e8] sm:$0xff]
    %v1432 = vld [vmem:[#allocation3 + $0x3f0] sm:$0xff]
    %v1433 = vld [vmem:[#allocation3 + $0x3f8] sm:$0xff]
    %v1434 = vld [vmem:[#allocation3 + $0x400] sm:$0xff]
    %v1435 = vld [vmem:[#allocation3 + $0x408] sm:$0xff]
    %v1436 = vld [vmem:[#allocation3 + $0x410] sm:$0xff]
    %v1437 = vld [vmem:[#allocation3 + $0x418] sm:$0xff]
    %v1438 = vld [vmem:[#allocation3 + $0x420] sm:$0xff]
    %v1439 = vld [vmem:[#allocation3 + $0x428] sm:$0xff]
    %v1440 = vld [vmem:[#allocation3 + $0x430] sm:$0xff]
    %v1441 = vld [vmem:[#allocation3 + $0x438] sm:$0xff]
    %v1442 = vld [vmem:[#allocation3 + $0x440] sm:$0xff]
    %v1443 = vld [vmem:[#allocation3 + $0x448] sm:$0xff]
    %v1444 = vld [vmem:[#allocation3 + $0x450] sm:$0xff]
    %v1445 = vld [vmem:[#allocation3 + $0x458] sm:$0xff]
    %v1446 = vld [vmem:[#allocation3 + $0x460] sm:$0xff]
    %v1447 = vld [vmem:[#allocation3 + $0x468] sm:$0xff]
    %v1448 = vld [vmem:[#allocation3 + $0x470] sm:$0xff]
    %v1449 = vld [vmem:[#allocation3 + $0x478] sm:$0xff]
    %v1450 = vld [vmem:[#allocation3 + $0x480] sm:$0xff]
    %v1451 = vld [vmem:[#allocation3 + $0x488] sm:$0xff]
    %v1452 = vld [vmem:[#allocation3 + $0x490] sm:$0xff]
    %v1453 = vld [vmem:[#allocation3 + $0x498] sm:$0xff]
    %v1454 = vld [vmem:[#allocation3 + $0x4a0] sm:$0xff]
    %v1455 = vld [vmem:[#allocation3 + $0x4a8] sm:$0xff]
    %v1456 = vld [vmem:[#allocation3 + $0x4b0] sm:$0xff]
    %v1457 = vld [vmem:[#allocation3 + $0x4b8] sm:$0xff]
    %v1458 = vld [vmem:[#allocation3 + $0x4c0] sm:$0xff]
    %v1459 = vld [vmem:[#allocation3 + $0x4c8] sm:$0xff]
    %v1460 = vld [vmem:[#allocation3 + $0x4d0] sm:$0xff]
    %v1461 = vld [vmem:[#allocation3 + $0x4d8] sm:$0xff]
    %v1462 = vld [vmem:[#allocation3 + $0x4e0] sm:$0xff]
    %v1463 = vld [vmem:[#allocation3 + $0x4e8] sm:$0xff]
    %v1464 = vld [vmem:[#allocation3 + $0x4f0] sm:$0xff]
    %v1465 = vld [vmem:[#allocation3 + $0x4f8] sm:$0xff]
    %v1466 = vld [vmem:[#allocation3 + $0x500] sm:$0xff]
    %v1467 = vld [vmem:[#allocation3 + $0x508] sm:$0xff]
    %v1468 = vld [vmem:[#allocation3 + $0x510] sm:$0xff]
    %v1469 = vld [vmem:[#allocation3 + $0x518] sm:$0xff]
    %v1470 = vld [vmem:[#allocation3 + $0x520] sm:$0xff]
    %v1471 = vld [vmem:[#allocation3 + $0x528] sm:$0xff]
    %v1472 = vld [vmem:[#allocation3 + $0x530] sm:$0xff]
    %v1473 = vld [vmem:[#allocation3 + $0x538] sm:$0xff]
    %v1474 = vld [vmem:[#allocation3 + $0x540] sm:$0xff]
    %v1475 = vld [vmem:[#allocation3 + $0x548] sm:$0xff]
    %v1476 = vld [vmem:[#allocation3 + $0x550] sm:$0xff]
    %v1477 = vld [vmem:[#allocation3 + $0x558] sm:$0xff]
    %v1478 = vld [vmem:[#allocation3 + $0x560] sm:$0xff]
    %v1479 = vld [vmem:[#allocation3 + $0x568] sm:$0xff]
    %v1480 = vld [vmem:[#allocation3 + $0x570] sm:$0xff]
    %v1481 = vld [vmem:[#allocation3 + $0x578] sm:$0xff]
    %v1482 = vld [vmem:[#allocation3 + $0x580] sm:$0xff]
    %v1483 = vld [vmem:[#allocation3 + $0x588] sm:$0xff]
    %v1484 = vld [vmem:[#allocation3 + $0x590] sm:$0xff]
    %v1485 = vld [vmem:[#allocation3 + $0x598] sm:$0xff]
    %v1486 = vld [vmem:[#allocation3 + $0x5a0] sm:$0xff]
    %v1487 = vld [vmem:[#allocation3 + $0x5a8] sm:$0xff]
    %v1488 = vld [vmem:[#allocation3 + $0x5b0] sm:$0xff]
    %v1489 = vld [vmem:[#allocation3 + $0x5b8] sm:$0xff]
    %v1490 = vld [vmem:[#allocation3 + $0x5c0] sm:$0xff]
    %v1491 = vld [vmem:[#allocation3 + $0x5c8] sm:$0xff]
    %v1492 = vld [vmem:[#allocation3 + $0x5d0] sm:$0xff]
    %v1493 = vld [vmem:[#allocation3 + $0x5d8] sm:$0xff]
    %v1494 = vld [vmem:[#allocation3 + $0x5e0] sm:$0xff]
    %v1495 = vld [vmem:[#allocation3 + $0x5e8] sm:$0xff]
    %v1496 = vld [vmem:[#allocation3 + $0x5f0] sm:$0xff]
    %v1497 = vld [vmem:[#allocation3 + $0x5f8] sm:$0xff]
    %v1498 = vld [vmem:[#allocation3 + $0x600] sm:$0xff]
    %v1499 = vld [vmem:[#allocation3 + $0x608] sm:$0xff]
    %v1500 = vld [vmem:[#allocation3 + $0x610] sm:$0xff]
    %v1501 = vld [vmem:[#allocation3 + $0x618] sm:$0xff]
    %v1502 = vld [vmem:[#allocation3 + $0x620] sm:$0xff]
    %v1503 = vld [vmem:[#allocation3 + $0x628] sm:$0xff]
    %v1504 = vld [vmem:[#allocation3 + $0x630] sm:$0xff]
    %v1505 = vld [vmem:[#allocation3 + $0x638] sm:$0xff]
    %v1506 = vld [vmem:[#allocation3 + $0x640] sm:$0xff]
    %v1507 = vld [vmem:[#allocation3 + $0x648] sm:$0xff]
    %v1508 = vld [vmem:[#allocation3 + $0x650] sm:$0xff]
    %v1509 = vld [vmem:[#allocation3 + $0x658] sm:$0xff]
    %v1510 = vld [vmem:[#allocation3 + $0x660] sm:$0xff]
    %v1511 = vld [vmem:[#allocation3 + $0x668] sm:$0xff]
    %v1512 = vld [vmem:[#allocation3 + $0x670] sm:$0xff]
    %v1513 = vld [vmem:[#allocation3 + $0x678] sm:$0xff]
    %v1514 = vld [vmem:[#allocation3 + $0x680] sm:$0xff]
    %v1515 = vld [vmem:[#allocation3 + $0x688] sm:$0xff]
    %v1516 = vld [vmem:[#allocation3 + $0x690] sm:$0xff]
    %v1517 = vld [vmem:[#allocation3 + $0x698] sm:$0xff]
    %v1518 = vld [vmem:[#allocation3 + $0x6a0] sm:$0xff]
    %v1519 = vld [vmem:[#allocation3 + $0x6a8] sm:$0xff]
    %v1520 = vld [vmem:[#allocation3 + $0x6b0] sm:$0xff]
    %v1521 = vld [vmem:[#allocation3 + $0x6b8] sm:$0xff]
    %v1522 = vld [vmem:[#allocation3 + $0x6c0] sm:$0xff]
    %v1523 = vld [vmem:[#allocation3 + $0x6c8] sm:$0xff]
    %v1524 = vld [vmem:[#allocation3 + $0x6d0] sm:$0xff]
    %v1525 = vld [vmem:[#allocation3 + $0x6d8] sm:$0xff]
    %v1526 = vld [vmem:[#allocation3 + $0x6e0] sm:$0xff]
    %v1527 = vld [vmem:[#allocation3 + $0x6e8] sm:$0xff]
    %v1528 = vld [vmem:[#allocation3 + $0x6f0] sm:$0xff]
    %v1529 = vld [vmem:[#allocation3 + $0x6f8] sm:$0xff]
    %v1530 = vld [vmem:[#allocation3 + $0x700] sm:$0xff]
    %v1531 = vld [vmem:[#allocation3 + $0x708] sm:$0xff]
    %v1532 = vld [vmem:[#allocation3 + $0x710] sm:$0xff]
    %v1533 = vld [vmem:[#allocation3 + $0x718] sm:$0xff]
    %v1534 = vld [vmem:[#allocation3 + $0x720] sm:$0xff]
    %v1535 = vld [vmem:[#allocation3 + $0x728] sm:$0xff]
    %v1536 = vld [vmem:[#allocation3 + $0x730] sm:$0xff]
    %v1537 = vld [vmem:[#allocation3 + $0x738] sm:$0xff]
    %v1538 = vld [vmem:[#allocation3 + $0x740] sm:$0xff]
    %v1539 = vld [vmem:[#allocation3 + $0x748] sm:$0xff]
    %v1540 = vld [vmem:[#allocation3 + $0x750] sm:$0xff]
    %v1541 = vld [vmem:[#allocation3 + $0x758] sm:$0xff]
    %v1542 = vld [vmem:[#allocation3 + $0x760] sm:$0xff]
    %v1543 = vld [vmem:[#allocation3 + $0x768] sm:$0xff]
    %v1544 = vld [vmem:[#allocation3 + $0x770] sm:$0xff]
    %v1545 = vld [vmem:[#allocation3 + $0x778] sm:$0xff]
    %v1546 = vld [vmem:[#allocation3 + $0x780] sm:$0xff]
    %v1547 = vld [vmem:[#allocation3 + $0x788] sm:$0xff]
    %v1548 = vld [vmem:[#allocation3 + $0x790] sm:$0xff]
    %v1549 = vld [vmem:[#allocation3 + $0x798] sm:$0xff]
    %v1550 = vld [vmem:[#allocation3 + $0x7a0] sm:$0xff]
    %v1551 = vld [vmem:[#allocation3 + $0x7a8] sm:$0xff]
    %v1552 = vld [vmem:[#allocation3 + $0x7b0] sm:$0xff]
    %v1553 = vld [vmem:[#allocation3 + $0x7b8] sm:$0xff]
    %v1554 = vld [vmem:[#allocation3 + $0x7c0] sm:$0xff]
    %v1555 = vld [vmem:[#allocation3 + $0x7c8] sm:$0xff]
    %v1556 = vld [vmem:[#allocation3 + $0x7d0] sm:$0xff]
    %v1557 = vld [vmem:[#allocation3 + $0x7d8] sm:$0xff]
    %v1558 = vld [vmem:[#allocation3 + $0x7e0] sm:$0xff]
    %v1559 = vld [vmem:[#allocation3 + $0x7e8] sm:$0xff]
    %v1560 = vld [vmem:[#allocation3 + $0x7f0] sm:$0xff]
    %v1561 = vld [vmem:[#allocation3 + $0x7f8] sm:$0xff]
    %v1562 = vld [vmem:[%s4] sm:$0xf]
    %v1564 = vperm.slane %v1562, 0
    %v1565 = vperm.slane %v1562, 1
    %v1566 = vperm.slane %v1562, 2
    %v1567 = vperm.slane %v1562, 3
    %v1828 = vunpack.c.l.b16 %v1306
    %v1829 = vunpack.c.h.b16 %v1306
    %v1830 = vunpack.c.l.b16 %v1307
    %v1831 = vunpack.c.h.b16 %v1307
    %v1832 = vunpack.c.l.b16 %v1308
    %v1833 = vunpack.c.h.b16 %v1308
    %v1834 = vunpack.c.l.b16 %v1309
    %v1835 = vunpack.c.h.b16 %v1309
    %v1836 = vunpack.c.l.b16 %v1310
    %v1837 = vunpack.c.h.b16 %v1310
    %v1838 = vunpack.c.l.b16 %v1311
    %v1839 = vunpack.c.h.b16 %v1311
    %v1840 = vunpack.c.l.b16 %v1312
    %v1841 = vunpack.c.h.b16 %v1312
    %v1842 = vunpack.c.l.b16 %v1313
    %v1843 = vunpack.c.h.b16 %v1313
    %v1844 = vunpack.c.l.b16 %v1314
    %v1845 = vunpack.c.h.b16 %v1314
    %v1846 = vunpack.c.l.b16 %v1315
    %v1847 = vunpack.c.h.b16 %v1315
    %v1848 = vunpack.c.l.b16 %v1316
    %v1849 = vunpack.c.h.b16 %v1316
    %v1850 = vunpack.c.l.b16 %v1317
    %v1851 = vunpack.c.h.b16 %v1317
    %v1852 = vunpack.c.l.b16 %v1318
    %v1853 = vunpack.c.h.b16 %v1318
    %v1854 = vunpack.c.l.b16 %v1319
    %v1855 = vunpack.c.h.b16 %v1319
    %v1856 = vunpack.c.l.b16 %v1320
    %v1857 = vunpack.c.h.b16 %v1320
    %v1858 = vunpack.c.l.b16 %v1321
    %v1859 = vunpack.c.h.b16 %v1321
    %v1860 = vunpack.c.l.b16 %v1322
    %v1861 = vunpack.c.h.b16 %v1322
    %v1862 = vunpack.c.l.b16 %v1323
    %v1863 = vunpack.c.h.b16 %v1323
    %v1864 = vunpack.c.l.b16 %v1324
    %v1865 = vunpack.c.h.b16 %v1324
    %v1866 = vunpack.c.l.b16 %v1325
    %v1867 = vunpack.c.h.b16 %v1325
    %v1868 = vunpack.c.l.b16 %v1326
    %v1869 = vunpack.c.h.b16 %v1326
    %v1870 = vunpack.c.l.b16 %v1327
    %v1871 = vunpack.c.h.b16 %v1327
    %v1872 = vunpack.c.l.b16 %v1328
    %v1873 = vunpack.c.h.b16 %v1328
    %v1874 = vunpack.c.l.b16 %v1329
    %v1875 = vunpack.c.h.b16 %v1329
    %v1876 = vunpack.c.l.b16 %v1330
    %v1877 = vunpack.c.h.b16 %v1330
    %v1878 = vunpack.c.l.b16 %v1331
    %v1879 = vunpack.c.h.b16 %v1331
    %v1880 = vunpack.c.l.b16 %v1332
    %v1881 = vunpack.c.h.b16 %v1332
    %v1882 = vunpack.c.l.b16 %v1333
    %v1883 = vunpack.c.h.b16 %v1333
    %v1884 = vunpack.c.l.b16 %v1334
    %v1885 = vunpack.c.h.b16 %v1334
    %v1886 = vunpack.c.l.b16 %v1335
    %v1887 = vunpack.c.h.b16 %v1335
    %v1888 = vunpack.c.l.b16 %v1336
    %v1889 = vunpack.c.h.b16 %v1336
    %v1890 = vunpack.c.l.b16 %v1337
    %v1891 = vunpack.c.h.b16 %v1337
    %v1892 = vunpack.c.l.b16 %v1338
    %v1893 = vunpack.c.h.b16 %v1338
    %v1894 = vunpack.c.l.b16 %v1339
    %v1895 = vunpack.c.h.b16 %v1339
    %v1896 = vunpack.c.l.b16 %v1340
    %v1897 = vunpack.c.h.b16 %v1340
    %v1898 = vunpack.c.l.b16 %v1341
    %v1899 = vunpack.c.h.b16 %v1341
    %v1900 = vunpack.c.l.b16 %v1342
    %v1901 = vunpack.c.h.b16 %v1342
    %v1902 = vunpack.c.l.b16 %v1343
    %v1903 = vunpack.c.h.b16 %v1343
    %v1904 = vunpack.c.l.b16 %v1344
    %v1905 = vunpack.c.h.b16 %v1344
    %v1906 = vunpack.c.l.b16 %v1345
    %v1907 = vunpack.c.h.b16 %v1345
    %v1908 = vunpack.c.l.b16 %v1346
    %v1909 = vunpack.c.h.b16 %v1346
    %v1910 = vunpack.c.l.b16 %v1347
    %v1911 = vunpack.c.h.b16 %v1347
    %v1912 = vunpack.c.l.b16 %v1348
    %v1913 = vunpack.c.h.b16 %v1348
    %v1914 = vunpack.c.l.b16 %v1349
    %v1915 = vunpack.c.h.b16 %v1349
    %v1916 = vunpack.c.l.b16 %v1350
    %v1917 = vunpack.c.h.b16 %v1350
    %v1918 = vunpack.c.l.b16 %v1351
    %v1919 = vunpack.c.h.b16 %v1351
    %v1920 = vunpack.c.l.b16 %v1352
    %v1921 = vunpack.c.h.b16 %v1352
    %v1922 = vunpack.c.l.b16 %v1353
    %v1923 = vunpack.c.h.b16 %v1353
    %v1924 = vunpack.c.l.b16 %v1354
    %v1925 = vunpack.c.h.b16 %v1354
    %v1926 = vunpack.c.l.b16 %v1355
    %v1927 = vunpack.c.h.b16 %v1355
    %v1928 = vunpack.c.l.b16 %v1356
    %v1929 = vunpack.c.h.b16 %v1356
    %v1930 = vunpack.c.l.b16 %v1357
    %v1931 = vunpack.c.h.b16 %v1357
    %v1932 = vunpack.c.l.b16 %v1358
    %v1933 = vunpack.c.h.b16 %v1358
    %v1934 = vunpack.c.l.b16 %v1359
    %v1935 = vunpack.c.h.b16 %v1359
    %v1936 = vunpack.c.l.b16 %v1360
    %v1937 = vunpack.c.h.b16 %v1360
    %v1938 = vunpack.c.l.b16 %v1361
    %v1939 = vunpack.c.h.b16 %v1361
    %v1940 = vunpack.c.l.b16 %v1362
    %v1941 = vunpack.c.h.b16 %v1362
    %v1942 = vunpack.c.l.b16 %v1363
    %v1943 = vunpack.c.h.b16 %v1363
    %v1944 = vunpack.c.l.b16 %v1364
    %v1945 = vunpack.c.h.b16 %v1364
    %v1946 = vunpack.c.l.b16 %v1365
    %v1947 = vunpack.c.h.b16 %v1365
    %v1948 = vunpack.c.l.b16 %v1366
    %v1949 = vunpack.c.h.b16 %v1366
    %v1950 = vunpack.c.l.b16 %v1367
    %v1951 = vunpack.c.h.b16 %v1367
    %v1952 = vunpack.c.l.b16 %v1368
    %v1953 = vunpack.c.h.b16 %v1368
    %v1954 = vunpack.c.l.b16 %v1369
    %v1955 = vunpack.c.h.b16 %v1369
    %v1956 = vunpack.c.l.b16 %v1370
    %v1957 = vunpack.c.h.b16 %v1370
    %v1958 = vunpack.c.l.b16 %v1371
    %v1959 = vunpack.c.h.b16 %v1371
    %v1960 = vunpack.c.l.b16 %v1372
    %v1961 = vunpack.c.h.b16 %v1372
    %v1962 = vunpack.c.l.b16 %v1373
    %v1963 = vunpack.c.h.b16 %v1373
    %v1964 = vunpack.c.l.b16 %v1374
    %v1965 = vunpack.c.h.b16 %v1374
    %v1966 = vunpack.c.l.b16 %v1375
    %v1967 = vunpack.c.h.b16 %v1375
    %v1968 = vunpack.c.l.b16 %v1376
    %v1969 = vunpack.c.h.b16 %v1376
    %v1970 = vunpack.c.l.b16 %v1377
    %v1971 = vunpack.c.h.b16 %v1377
    %v1972 = vunpack.c.l.b16 %v1378
    %v1973 = vunpack.c.h.b16 %v1378
    %v1974 = vunpack.c.l.b16 %v1379
    %v1975 = vunpack.c.h.b16 %v1379
    %v1976 = vunpack.c.l.b16 %v1380
    %v1977 = vunpack.c.h.b16 %v1380
    %v1978 = vunpack.c.l.b16 %v1381
    %v1979 = vunpack.c.h.b16 %v1381
    %v1980 = vunpack.c.l.b16 %v1382
    %v1981 = vunpack.c.h.b16 %v1382
    %v1982 = vunpack.c.l.b16 %v1383
    %v1983 = vunpack.c.h.b16 %v1383
    %v1984 = vunpack.c.l.b16 %v1384
    %v1985 = vunpack.c.h.b16 %v1384
    %v1986 = vunpack.c.l.b16 %v1385
    %v1987 = vunpack.c.h.b16 %v1385
    %v1988 = vunpack.c.l.b16 %v1386
    %v1989 = vunpack.c.h.b16 %v1386
    %v1990 = vunpack.c.l.b16 %v1387
    %v1991 = vunpack.c.h.b16 %v1387
    %v1992 = vunpack.c.l.b16 %v1388
    %v1993 = vunpack.c.h.b16 %v1388
    %v1994 = vunpack.c.l.b16 %v1389
    %v1995 = vunpack.c.h.b16 %v1389
    %v1996 = vunpack.c.l.b16 %v1390
    %v1997 = vunpack.c.h.b16 %v1390
    %v1998 = vunpack.c.l.b16 %v1391
    %v1999 = vunpack.c.h.b16 %v1391
    %v2000 = vunpack.c.l.b16 %v1392
    %v2001 = vunpack.c.h.b16 %v1392
    %v2002 = vunpack.c.l.b16 %v1393
    %v2003 = vunpack.c.h.b16 %v1393
    %v2004 = vunpack.c.l.b16 %v1394
    %v2005 = vunpack.c.h.b16 %v1394
    %v2006 = vunpack.c.l.b16 %v1395
    %v2007 = vunpack.c.h.b16 %v1395
    %v2008 = vunpack.c.l.b16 %v1396
    %v2009 = vunpack.c.h.b16 %v1396
    %v2010 = vunpack.c.l.b16 %v1397
    %v2011 = vunpack.c.h.b16 %v1397
    %v2012 = vunpack.c.l.b16 %v1398
    %v2013 = vunpack.c.h.b16 %v1398
    %v2014 = vunpack.c.l.b16 %v1399
    %v2015 = vunpack.c.h.b16 %v1399
    %v2016 = vunpack.c.l.b16 %v1400
    %v2017 = vunpack.c.h.b16 %v1400
    %v2018 = vunpack.c.l.b16 %v1401
    %v2019 = vunpack.c.h.b16 %v1401
    %v2020 = vunpack.c.l.b16 %v1402
    %v2021 = vunpack.c.h.b16 %v1402
    %v2022 = vunpack.c.l.b16 %v1403
    %v2023 = vunpack.c.h.b16 %v1403
    %v2024 = vunpack.c.l.b16 %v1404
    %v2025 = vunpack.c.h.b16 %v1404
    %v2026 = vunpack.c.l.b16 %v1405
    %v2027 = vunpack.c.h.b16 %v1405
    %v2028 = vunpack.c.l.b16 %v1406
    %v2029 = vunpack.c.h.b16 %v1406
    %v2030 = vunpack.c.l.b16 %v1407
    %v2031 = vunpack.c.h.b16 %v1407
    %v2032 = vunpack.c.l.b16 %v1408
    %v2033 = vunpack.c.h.b16 %v1408
    %v2034 = vunpack.c.l.b16 %v1409
    %v2035 = vunpack.c.h.b16 %v1409
    %v2036 = vunpack.c.l.b16 %v1410
    %v2037 = vunpack.c.h.b16 %v1410
    %v2038 = vunpack.c.l.b16 %v1411
    %v2039 = vunpack.c.h.b16 %v1411
    %v2040 = vunpack.c.l.b16 %v1412
    %v2041 = vunpack.c.h.b16 %v1412
    %v2042 = vunpack.c.l.b16 %v1413
    %v2043 = vunpack.c.h.b16 %v1413
    %v2044 = vunpack.c.l.b16 %v1414
    %v2045 = vunpack.c.h.b16 %v1414
    %v2046 = vunpack.c.l.b16 %v1415
    %v2047 = vunpack.c.h.b16 %v1415
    %v2048 = vunpack.c.l.b16 %v1416
    %v2049 = vunpack.c.h.b16 %v1416
    %v2050 = vunpack.c.l.b16 %v1417
    %v2051 = vunpack.c.h.b16 %v1417
    %v2052 = vunpack.c.l.b16 %v1418
    %v2053 = vunpack.c.h.b16 %v1418
    %v2054 = vunpack.c.l.b16 %v1419
    %v2055 = vunpack.c.h.b16 %v1419
    %v2056 = vunpack.c.l.b16 %v1420
    %v2057 = vunpack.c.h.b16 %v1420
    %v2058 = vunpack.c.l.b16 %v1421
    %v2059 = vunpack.c.h.b16 %v1421
    %v2060 = vunpack.c.l.b16 %v1422
    %v2061 = vunpack.c.h.b16 %v1422
    %v2062 = vunpack.c.l.b16 %v1423
    %v2063 = vunpack.c.h.b16 %v1423
    %v2064 = vunpack.c.l.b16 %v1424
    %v2065 = vunpack.c.h.b16 %v1424
    %v2066 = vunpack.c.l.b16 %v1425
    %v2067 = vunpack.c.h.b16 %v1425
    %v2068 = vunpack.c.l.b16 %v1426
    %v2069 = vunpack.c.h.b16 %v1426
    %v2070 = vunpack.c.l.b16 %v1427
    %v2071 = vunpack.c.h.b16 %v1427
    %v2072 = vunpack.c.l.b16 %v1428
    %v2073 = vunpack.c.h.b16 %v1428
    %v2074 = vunpack.c.l.b16 %v1429
    %v2075 = vunpack.c.h.b16 %v1429
    %v2076 = vunpack.c.l.b16 %v1430
    %v2077 = vunpack.c.h.b16 %v1430
    %v2078 = vunpack.c.l.b16 %v1431
    %v2079 = vunpack.c.h.b16 %v1431
    %v2080 = vunpack.c.l.b16 %v1432
    %v2081 = vunpack.c.h.b16 %v1432
    %v2082 = vunpack.c.l.b16 %v1433
    %v2083 = vunpack.c.h.b16 %v1433
    %v2084 = vunpack.c.l.b16 %v1434
    %v2085 = vunpack.c.h.b16 %v1434
    %v2086 = vunpack.c.l.b16 %v1435
    %v2087 = vunpack.c.h.b16 %v1435
    %v2088 = vunpack.c.l.b16 %v1436
    %v2089 = vunpack.c.h.b16 %v1436
    %v2090 = vunpack.c.l.b16 %v1437
    %v2091 = vunpack.c.h.b16 %v1437
    %v2092 = vunpack.c.l.b16 %v1438
    %v2093 = vunpack.c.h.b16 %v1438
    %v2094 = vunpack.c.l.b16 %v1439
    %v2095 = vunpack.c.h.b16 %v1439
    %v2096 = vunpack.c.l.b16 %v1440
    %v2097 = vunpack.c.h.b16 %v1440
    %v2098 = vunpack.c.l.b16 %v1441
    %v2099 = vunpack.c.h.b16 %v1441
    %v2100 = vunpack.c.l.b16 %v1442
    %v2101 = vunpack.c.h.b16 %v1442
    %v2102 = vunpack.c.l.b16 %v1443
    %v2103 = vunpack.c.h.b16 %v1443
    %v2104 = vunpack.c.l.b16 %v1444
    %v2105 = vunpack.c.h.b16 %v1444
    %v2106 = vunpack.c.l.b16 %v1445
    %v2107 = vunpack.c.h.b16 %v1445
    %v2108 = vunpack.c.l.b16 %v1446
    %v2109 = vunpack.c.h.b16 %v1446
    %v2110 = vunpack.c.l.b16 %v1447
    %v2111 = vunpack.c.h.b16 %v1447
    %v2112 = vunpack.c.l.b16 %v1448
    %v2113 = vunpack.c.h.b16 %v1448
    %v2114 = vunpack.c.l.b16 %v1449
    %v2115 = vunpack.c.h.b16 %v1449
    %v2116 = vunpack.c.l.b16 %v1450
    %v2117 = vunpack.c.h.b16 %v1450
    %v2118 = vunpack.c.l.b16 %v1451
    %v2119 = vunpack.c.h.b16 %v1451
    %v2120 = vunpack.c.l.b16 %v1452
    %v2121 = vunpack.c.h.b16 %v1452
    %v2122 = vunpack.c.l.b16 %v1453
    %v2123 = vunpack.c.h.b16 %v1453
    %v2124 = vunpack.c.l.b16 %v1454
    %v2125 = vunpack.c.h.b16 %v1454
    %v2126 = vunpack.c.l.b16 %v1455
    %v2127 = vunpack.c.h.b16 %v1455
    %v2128 = vunpack.c.l.b16 %v1456
    %v2129 = vunpack.c.h.b16 %v1456
    %v2130 = vunpack.c.l.b16 %v1457
    %v2131 = vunpack.c.h.b16 %v1457
    %v2132 = vunpack.c.l.b16 %v1458
    %v2133 = vunpack.c.h.b16 %v1458
    %v2134 = vunpack.c.l.b16 %v1459
    %v2135 = vunpack.c.h.b16 %v1459
    %v2136 = vunpack.c.l.b16 %v1460
    %v2137 = vunpack.c.h.b16 %v1460
    %v2138 = vunpack.c.l.b16 %v1461
    %v2139 = vunpack.c.h.b16 %v1461
    %v2140 = vunpack.c.l.b16 %v1462
    %v2141 = vunpack.c.h.b16 %v1462
    %v2142 = vunpack.c.l.b16 %v1463
    %v2143 = vunpack.c.h.b16 %v1463
    %v2144 = vunpack.c.l.b16 %v1464
    %v2145 = vunpack.c.h.b16 %v1464
    %v2146 = vunpack.c.l.b16 %v1465
    %v2147 = vunpack.c.h.b16 %v1465
    %v2148 = vunpack.c.l.b16 %v1466
    %v2149 = vunpack.c.h.b16 %v1466
    %v2150 = vunpack.c.l.b16 %v1467
    %v2151 = vunpack.c.h.b16 %v1467
    %v2152 = vunpack.c.l.b16 %v1468
    %v2153 = vunpack.c.h.b16 %v1468
    %v2154 = vunpack.c.l.b16 %v1469
    %v2155 = vunpack.c.h.b16 %v1469
    %v2156 = vunpack.c.l.b16 %v1470
    %v2157 = vunpack.c.h.b16 %v1470
    %v2158 = vunpack.c.l.b16 %v1471
    %v2159 = vunpack.c.h.b16 %v1471
    %v2160 = vunpack.c.l.b16 %v1472
    %v2161 = vunpack.c.h.b16 %v1472
    %v2162 = vunpack.c.l.b16 %v1473
    %v2163 = vunpack.c.h.b16 %v1473
    %v2164 = vunpack.c.l.b16 %v1474
    %v2165 = vunpack.c.h.b16 %v1474
    %v2166 = vunpack.c.l.b16 %v1475
    %v2167 = vunpack.c.h.b16 %v1475
    %v2168 = vunpack.c.l.b16 %v1476
    %v2169 = vunpack.c.h.b16 %v1476
    %v2170 = vunpack.c.l.b16 %v1477
    %v2171 = vunpack.c.h.b16 %v1477
    %v2172 = vunpack.c.l.b16 %v1478
    %v2173 = vunpack.c.h.b16 %v1478
    %v2174 = vunpack.c.l.b16 %v1479
    %v2175 = vunpack.c.h.b16 %v1479
    %v2176 = vunpack.c.l.b16 %v1480
    %v2177 = vunpack.c.h.b16 %v1480
    %v2178 = vunpack.c.l.b16 %v1481
    %v2179 = vunpack.c.h.b16 %v1481
    %v2180 = vunpack.c.l.b16 %v1482
    %v2181 = vunpack.c.h.b16 %v1482
    %v2182 = vunpack.c.l.b16 %v1483
    %v2183 = vunpack.c.h.b16 %v1483
    %v2184 = vunpack.c.l.b16 %v1484
    %v2185 = vunpack.c.h.b16 %v1484
    %v2186 = vunpack.c.l.b16 %v1485
    %v2187 = vunpack.c.h.b16 %v1485
    %v2188 = vunpack.c.l.b16 %v1486
    %v2189 = vunpack.c.h.b16 %v1486
    %v2190 = vunpack.c.l.b16 %v1487
    %v2191 = vunpack.c.h.b16 %v1487
    %v2192 = vunpack.c.l.b16 %v1488
    %v2193 = vunpack.c.h.b16 %v1488
    %v2194 = vunpack.c.l.b16 %v1489
    %v2195 = vunpack.c.h.b16 %v1489
    %v2196 = vunpack.c.l.b16 %v1490
    %v2197 = vunpack.c.h.b16 %v1490
    %v2198 = vunpack.c.l.b16 %v1491
    %v2199 = vunpack.c.h.b16 %v1491
    %v2200 = vunpack.c.l.b16 %v1492
    %v2201 = vunpack.c.h.b16 %v1492
    %v2202 = vunpack.c.l.b16 %v1493
    %v2203 = vunpack.c.h.b16 %v1493
    %v2204 = vunpack.c.l.b16 %v1494
    %v2205 = vunpack.c.h.b16 %v1494
    %v2206 = vunpack.c.l.b16 %v1495
    %v2207 = vunpack.c.h.b16 %v1495
    %v2208 = vunpack.c.l.b16 %v1496
    %v2209 = vunpack.c.h.b16 %v1496
    %v2210 = vunpack.c.l.b16 %v1497
    %v2211 = vunpack.c.h.b16 %v1497
    %v2212 = vunpack.c.l.b16 %v1498
    %v2213 = vunpack.c.h.b16 %v1498
    %v2214 = vunpack.c.l.b16 %v1499
    %v2215 = vunpack.c.h.b16 %v1499
    %v2216 = vunpack.c.l.b16 %v1500
    %v2217 = vunpack.c.h.b16 %v1500
    %v2218 = vunpack.c.l.b16 %v1501
    %v2219 = vunpack.c.h.b16 %v1501
    %v2220 = vunpack.c.l.b16 %v1502
    %v2221 = vunpack.c.h.b16 %v1502
    %v2222 = vunpack.c.l.b16 %v1503
    %v2223 = vunpack.c.h.b16 %v1503
    %v2224 = vunpack.c.l.b16 %v1504
    %v2225 = vunpack.c.h.b16 %v1504
    %v2226 = vunpack.c.l.b16 %v1505
    %v2227 = vunpack.c.h.b16 %v1505
    %v2228 = vunpack.c.l.b16 %v1506
    %v2229 = vunpack.c.h.b16 %v1506
    %v2230 = vunpack.c.l.b16 %v1507
    %v2231 = vunpack.c.h.b16 %v1507
    %v2232 = vunpack.c.l.b16 %v1508
    %v2233 = vunpack.c.h.b16 %v1508
    %v2234 = vunpack.c.l.b16 %v1509
    %v2235 = vunpack.c.h.b16 %v1509
    %v2236 = vunpack.c.l.b16 %v1510
    %v2237 = vunpack.c.h.b16 %v1510
    %v2238 = vunpack.c.l.b16 %v1511
    %v2239 = vunpack.c.h.b16 %v1511
    %v2240 = vunpack.c.l.b16 %v1512
    %v2241 = vunpack.c.h.b16 %v1512
    %v2242 = vunpack.c.l.b16 %v1513
    %v2243 = vunpack.c.h.b16 %v1513
    %v2244 = vunpack.c.l.b16 %v1514
    %v2245 = vunpack.c.h.b16 %v1514
    %v2246 = vunpack.c.l.b16 %v1515
    %v2247 = vunpack.c.h.b16 %v1515
    %v2248 = vunpack.c.l.b16 %v1516
    %v2249 = vunpack.c.h.b16 %v1516
    %v2250 = vunpack.c.l.b16 %v1517
    %v2251 = vunpack.c.h.b16 %v1517
    %v2252 = vunpack.c.l.b16 %v1518
    %v2253 = vunpack.c.h.b16 %v1518
    %v2254 = vunpack.c.l.b16 %v1519
    %v2255 = vunpack.c.h.b16 %v1519
    %v2256 = vunpack.c.l.b16 %v1520
    %v2257 = vunpack.c.h.b16 %v1520
    %v2258 = vunpack.c.l.b16 %v1521
    %v2259 = vunpack.c.h.b16 %v1521
    %v2260 = vunpack.c.l.b16 %v1522
    %v2261 = vunpack.c.h.b16 %v1522
    %v2262 = vunpack.c.l.b16 %v1523
    %v2263 = vunpack.c.h.b16 %v1523
    %v2264 = vunpack.c.l.b16 %v1524
    %v2265 = vunpack.c.h.b16 %v1524
    %v2266 = vunpack.c.l.b16 %v1525
    %v2267 = vunpack.c.h.b16 %v1525
    %v2268 = vunpack.c.l.b16 %v1526
    %v2269 = vunpack.c.h.b16 %v1526
    %v2270 = vunpack.c.l.b16 %v1527
    %v2271 = vunpack.c.h.b16 %v1527
    %v2272 = vunpack.c.l.b16 %v1528
    %v2273 = vunpack.c.h.b16 %v1528
    %v2274 = vunpack.c.l.b16 %v1529
    %v2275 = vunpack.c.h.b16 %v1529
    %v2276 = vunpack.c.l.b16 %v1530
    %v2277 = vunpack.c.h.b16 %v1530
    %v2278 = vunpack.c.l.b16 %v1531
    %v2279 = vunpack.c.h.b16 %v1531
    %v2280 = vunpack.c.l.b16 %v1532
    %v2281 = vunpack.c.h.b16 %v1532
    %v2282 = vunpack.c.l.b16 %v1533
    %v2283 = vunpack.c.h.b16 %v1533
    %v2284 = vunpack.c.l.b16 %v1534
    %v2285 = vunpack.c.h.b16 %v1534
    %v2286 = vunpack.c.l.b16 %v1535
    %v2287 = vunpack.c.h.b16 %v1535
    %v2288 = vunpack.c.l.b16 %v1536
    %v2289 = vunpack.c.h.b16 %v1536
    %v2290 = vunpack.c.l.b16 %v1537
    %v2291 = vunpack.c.h.b16 %v1537
    %v2292 = vunpack.c.l.b16 %v1538
    %v2293 = vunpack.c.h.b16 %v1538
    %v2294 = vunpack.c.l.b16 %v1539
    %v2295 = vunpack.c.h.b16 %v1539
    %v2296 = vunpack.c.l.b16 %v1540
    %v2297 = vunpack.c.h.b16 %v1540
    %v2298 = vunpack.c.l.b16 %v1541
    %v2299 = vunpack.c.h.b16 %v1541
    %v2300 = vunpack.c.l.b16 %v1542
    %v2301 = vunpack.c.h.b16 %v1542
    %v2302 = vunpack.c.l.b16 %v1543
    %v2303 = vunpack.c.h.b16 %v1543
    %v2304 = vunpack.c.l.b16 %v1544
    %v2305 = vunpack.c.h.b16 %v1544
    %v2306 = vunpack.c.l.b16 %v1545
    %v2307 = vunpack.c.h.b16 %v1545
    %v2308 = vunpack.c.l.b16 %v1546
    %v2309 = vunpack.c.h.b16 %v1546
    %v2310 = vunpack.c.l.b16 %v1547
    %v2311 = vunpack.c.h.b16 %v1547
    %v2312 = vunpack.c.l.b16 %v1548
    %v2313 = vunpack.c.h.b16 %v1548
    %v2314 = vunpack.c.l.b16 %v1549
    %v2315 = vunpack.c.h.b16 %v1549
    %v2316 = vunpack.c.l.b16 %v1550
    %v2317 = vunpack.c.h.b16 %v1550
    %v2318 = vunpack.c.l.b16 %v1551
    %v2319 = vunpack.c.h.b16 %v1551
    %v2320 = vunpack.c.l.b16 %v1552
    %v2321 = vunpack.c.h.b16 %v1552
    %v2322 = vunpack.c.l.b16 %v1553
    %v2323 = vunpack.c.h.b16 %v1553
    %v2324 = vunpack.c.l.b16 %v1554
    %v2325 = vunpack.c.h.b16 %v1554
    %v2326 = vunpack.c.l.b16 %v1555
    %v2327 = vunpack.c.h.b16 %v1555
    %v2328 = vunpack.c.l.b16 %v1556
    %v2329 = vunpack.c.h.b16 %v1556
    %v2330 = vunpack.c.l.b16 %v1557
    %v2331 = vunpack.c.h.b16 %v1557
    %v2332 = vunpack.c.l.b16 %v1558
    %v2333 = vunpack.c.h.b16 %v1558
    %v2334 = vunpack.c.l.b16 %v1559
    %v2335 = vunpack.c.h.b16 %v1559
    %v2336 = vunpack.c.l.b16 %v1560
    %v2337 = vunpack.c.h.b16 %v1560
    %v2338 = vunpack.c.l.b16 %v1561
    %v2339 = vunpack.c.h.b16 %v1561
    %v2340 = vpack.c.b16 %v1832, %v1828
    %v2341 = vpack.c.b16 %v1833, %v1829
    %v2342 = vpack.c.b16 %v1834, %v1830
    %v2343 = vpack.c.b16 %v1835, %v1831
    %v2344 = vpack.c.b16 %v1840, %v1836
    %v2345 = vpack.c.b16 %v1841, %v1837
    %v2346 = vpack.c.b16 %v1842, %v1838
    %v2347 = vpack.c.b16 %v1843, %v1839
    %v2348 = vpack.c.b16 %v1848, %v1844
    %v2349 = vpack.c.b16 %v1849, %v1845
    %v2350 = vpack.c.b16 %v1850, %v1846
    %v2351 = vpack.c.b16 %v1851, %v1847
    %v2352 = vpack.c.b16 %v1856, %v1852
    %v2353 = vpack.c.b16 %v1857, %v1853
    %v2354 = vpack.c.b16 %v1858, %v1854
    %v2355 = vpack.c.b16 %v1859, %v1855
    %v2356 = vpack.c.b16 %v1864, %v1860
    %v2357 = vpack.c.b16 %v1865, %v1861
    %v2358 = vpack.c.b16 %v1866, %v1862
    %v2359 = vpack.c.b16 %v1867, %v1863
    %v2360 = vpack.c.b16 %v1872, %v1868
    %v2361 = vpack.c.b16 %v1873, %v1869
    %v2362 = vpack.c.b16 %v1874, %v1870
    %v2363 = vpack.c.b16 %v1875, %v1871
    %v2364 = vpack.c.b16 %v1880, %v1876
    %v2365 = vpack.c.b16 %v1881, %v1877
    %v2366 = vpack.c.b16 %v1882, %v1878
    %v2367 = vpack.c.b16 %v1883, %v1879
    %v2368 = vpack.c.b16 %v1888, %v1884
    %v2369 = vpack.c.b16 %v1889, %v1885
    %v2370 = vpack.c.b16 %v1890, %v1886
    %v2371 = vpack.c.b16 %v1891, %v1887
    %v2372 = vpack.c.b16 %v1896, %v1892
    %v2373 = vpack.c.b16 %v1897, %v1893
    %v2374 = vpack.c.b16 %v1898, %v1894
    %v2375 = vpack.c.b16 %v1899, %v1895
    %v2376 = vpack.c.b16 %v1904, %v1900
    %v2377 = vpack.c.b16 %v1905, %v1901
    %v2378 = vpack.c.b16 %v1906, %v1902
    %v2379 = vpack.c.b16 %v1907, %v1903
    %v2380 = vpack.c.b16 %v1912, %v1908
    %v2381 = vpack.c.b16 %v1913, %v1909
    %v2382 = vpack.c.b16 %v1914, %v1910
    %v2383 = vpack.c.b16 %v1915, %v1911
    %v2384 = vpack.c.b16 %v1920, %v1916
    %v2385 = vpack.c.b16 %v1921, %v1917
    %v2386 = vpack.c.b16 %v1922, %v1918
    %v2387 = vpack.c.b16 %v1923, %v1919
    %v2388 = vpack.c.b16 %v1928, %v1924
    %v2389 = vpack.c.b16 %v1929, %v1925
    %v2390 = vpack.c.b16 %v1930, %v1926
    %v2391 = vpack.c.b16 %v1931, %v1927
    %v2392 = vpack.c.b16 %v1936, %v1932
    %v2393 = vpack.c.b16 %v1937, %v1933
    %v2394 = vpack.c.b16 %v1938, %v1934
    %v2395 = vpack.c.b16 %v1939, %v1935
    %v2396 = vpack.c.b16 %v1944, %v1940
    %v2397 = vpack.c.b16 %v1945, %v1941
    %v2398 = vpack.c.b16 %v1946, %v1942
    %v2399 = vpack.c.b16 %v1947, %v1943
    %v2400 = vpack.c.b16 %v1952, %v1948
    %v2401 = vpack.c.b16 %v1953, %v1949
    %v2402 = vpack.c.b16 %v1954, %v1950
    %v2403 = vpack.c.b16 %v1955, %v1951
    %v2404 = vpack.c.b16 %v1960, %v1956
    %v2405 = vpack.c.b16 %v1961, %v1957
    %v2406 = vpack.c.b16 %v1962, %v1958
    %v2407 = vpack.c.b16 %v1963, %v1959
    %v2408 = vpack.c.b16 %v1968, %v1964
    %v2409 = vpack.c.b16 %v1969, %v1965
    %v2410 = vpack.c.b16 %v1970, %v1966
    %v2411 = vpack.c.b16 %v1971, %v1967
    %v2412 = vpack.c.b16 %v1976, %v1972
    %v2413 = vpack.c.b16 %v1977, %v1973
    %v2414 = vpack.c.b16 %v1978, %v1974
    %v2415 = vpack.c.b16 %v1979, %v1975
    %v2416 = vpack.c.b16 %v1984, %v1980
    %v2417 = vpack.c.b16 %v1985, %v1981
    %v2418 = vpack.c.b16 %v1986, %v1982
    %v2419 = vpack.c.b16 %v1987, %v1983
    %v2420 = vpack.c.b16 %v1992, %v1988
    %v2421 = vpack.c.b16 %v1993, %v1989
    %v2422 = vpack.c.b16 %v1994, %v1990
    %v2423 = vpack.c.b16 %v1995, %v1991
    %v2424 = vpack.c.b16 %v2000, %v1996
    %v2425 = vpack.c.b16 %v2001, %v1997
    %v2426 = vpack.c.b16 %v2002, %v1998
    %v2427 = vpack.c.b16 %v2003, %v1999
    %v2428 = vpack.c.b16 %v2008, %v2004
    %v2429 = vpack.c.b16 %v2009, %v2005
    %v2430 = vpack.c.b16 %v2010, %v2006
    %v2431 = vpack.c.b16 %v2011, %v2007
    %v2432 = vpack.c.b16 %v2016, %v2012
    %v2433 = vpack.c.b16 %v2017, %v2013
    %v2434 = vpack.c.b16 %v2018, %v2014
    %v2435 = vpack.c.b16 %v2019, %v2015
    %v2436 = vpack.c.b16 %v2024, %v2020
    %v2437 = vpack.c.b16 %v2025, %v2021
    %v2438 = vpack.c.b16 %v2026, %v2022
    %v2439 = vpack.c.b16 %v2027, %v2023
    %v2440 = vpack.c.b16 %v2032, %v2028
    %v2441 = vpack.c.b16 %v2033, %v2029
    %v2442 = vpack.c.b16 %v2034, %v2030
    %v2443 = vpack.c.b16 %v2035, %v2031
    %v2444 = vpack.c.b16 %v2040, %v2036
    %v2445 = vpack.c.b16 %v2041, %v2037
    %v2446 = vpack.c.b16 %v2042, %v2038
    %v2447 = vpack.c.b16 %v2043, %v2039
    %v2448 = vpack.c.b16 %v2048, %v2044
    %v2449 = vpack.c.b16 %v2049, %v2045
    %v2450 = vpack.c.b16 %v2050, %v2046
    %v2451 = vpack.c.b16 %v2051, %v2047
    %v2452 = vpack.c.b16 %v2056, %v2052
    %v2453 = vpack.c.b16 %v2057, %v2053
    %v2454 = vpack.c.b16 %v2058, %v2054
    %v2455 = vpack.c.b16 %v2059, %v2055
    %v2456 = vpack.c.b16 %v2064, %v2060
    %v2457 = vpack.c.b16 %v2065, %v2061
    %v2458 = vpack.c.b16 %v2066, %v2062
    %v2459 = vpack.c.b16 %v2067, %v2063
    %v2460 = vpack.c.b16 %v2072, %v2068
    %v2461 = vpack.c.b16 %v2073, %v2069
    %v2462 = vpack.c.b16 %v2074, %v2070
    %v2463 = vpack.c.b16 %v2075, %v2071
    %v2464 = vpack.c.b16 %v2080, %v2076
    %v2465 = vpack.c.b16 %v2081, %v2077
    %v2466 = vpack.c.b16 %v2082, %v2078
    %v2467 = vpack.c.b16 %v2083, %v2079
    %v2468 = vpack.c.b16 %v2088, %v2084
    %v2469 = vpack.c.b16 %v2089, %v2085
    %v2470 = vpack.c.b16 %v2090, %v2086
    %v2471 = vpack.c.b16 %v2091, %v2087
    %v2472 = vpack.c.b16 %v2096, %v2092
    %v2473 = vpack.c.b16 %v2097, %v2093
    %v2474 = vpack.c.b16 %v2098, %v2094
    %v2475 = vpack.c.b16 %v2099, %v2095
    %v2476 = vpack.c.b16 %v2104, %v2100
    %v2477 = vpack.c.b16 %v2105, %v2101
    %v2478 = vpack.c.b16 %v2106, %v2102
    %v2479 = vpack.c.b16 %v2107, %v2103
    %v2480 = vpack.c.b16 %v2112, %v2108
    %v2481 = vpack.c.b16 %v2113, %v2109
    %v2482 = vpack.c.b16 %v2114, %v2110
    %v2483 = vpack.c.b16 %v2115, %v2111
    %v2484 = vpack.c.b16 %v2120, %v2116
    %v2485 = vpack.c.b16 %v2121, %v2117
    %v2486 = vpack.c.b16 %v2122, %v2118
    %v2487 = vpack.c.b16 %v2123, %v2119
    %v2488 = vpack.c.b16 %v2128, %v2124
    %v2489 = vpack.c.b16 %v2129, %v2125
    %v2490 = vpack.c.b16 %v2130, %v2126
    %v2491 = vpack.c.b16 %v2131, %v2127
    %v2492 = vpack.c.b16 %v2136, %v2132
    %v2493 = vpack.c.b16 %v2137, %v2133
    %v2494 = vpack.c.b16 %v2138, %v2134
    %v2495 = vpack.c.b16 %v2139, %v2135
    %v2496 = vpack.c.b16 %v2144, %v2140
    %v2497 = vpack.c.b16 %v2145, %v2141
    %v2498 = vpack.c.b16 %v2146, %v2142
    %v2499 = vpack.c.b16 %v2147, %v2143
    %v2500 = vpack.c.b16 %v2152, %v2148
    %v2501 = vpack.c.b16 %v2153, %v2149
    %v2502 = vpack.c.b16 %v2154, %v2150
    %v2503 = vpack.c.b16 %v2155, %v2151
    %v2504 = vpack.c.b16 %v2160, %v2156
    %v2505 = vpack.c.b16 %v2161, %v2157
    %v2506 = vpack.c.b16 %v2162, %v2158
    %v2507 = vpack.c.b16 %v2163, %v2159
    %v2508 = vpack.c.b16 %v2168, %v2164
    %v2509 = vpack.c.b16 %v2169, %v2165
    %v2510 = vpack.c.b16 %v2170, %v2166
    %v2511 = vpack.c.b16 %v2171, %v2167
    %v2512 = vpack.c.b16 %v2176, %v2172
    %v2513 = vpack.c.b16 %v2177, %v2173
    %v2514 = vpack.c.b16 %v2178, %v2174
    %v2515 = vpack.c.b16 %v2179, %v2175
    %v2516 = vpack.c.b16 %v2184, %v2180
    %v2517 = vpack.c.b16 %v2185, %v2181
    %v2518 = vpack.c.b16 %v2186, %v2182
    %v2519 = vpack.c.b16 %v2187, %v2183
    %v2520 = vpack.c.b16 %v2192, %v2188
    %v2521 = vpack.c.b16 %v2193, %v2189
    %v2522 = vpack.c.b16 %v2194, %v2190
    %v2523 = vpack.c.b16 %v2195, %v2191
    %v2524 = vpack.c.b16 %v2200, %v2196
    %v2525 = vpack.c.b16 %v2201, %v2197
    %v2526 = vpack.c.b16 %v2202, %v2198
    %v2527 = vpack.c.b16 %v2203, %v2199
    %v2528 = vpack.c.b16 %v2208, %v2204
    %v2529 = vpack.c.b16 %v2209, %v2205
    %v2530 = vpack.c.b16 %v2210, %v2206
    %v2531 = vpack.c.b16 %v2211, %v2207
    %v2532 = vpack.c.b16 %v2216, %v2212
    %v2533 = vpack.c.b16 %v2217, %v2213
    %v2534 = vpack.c.b16 %v2218, %v2214
    %v2535 = vpack.c.b16 %v2219, %v2215
    %v2536 = vpack.c.b16 %v2224, %v2220
    %v2537 = vpack.c.b16 %v2225, %v2221
    %v2538 = vpack.c.b16 %v2226, %v2222
    %v2539 = vpack.c.b16 %v2227, %v2223
    %v2540 = vpack.c.b16 %v2232, %v2228
    %v2541 = vpack.c.b16 %v2233, %v2229
    %v2542 = vpack.c.b16 %v2234, %v2230
    %v2543 = vpack.c.b16 %v2235, %v2231
    %v2544 = vpack.c.b16 %v2240, %v2236
    %v2545 = vpack.c.b16 %v2241, %v2237
    %v2546 = vpack.c.b16 %v2242, %v2238
    %v2547 = vpack.c.b16 %v2243, %v2239
    %v2548 = vpack.c.b16 %v2248, %v2244
    %v2549 = vpack.c.b16 %v2249, %v2245
    %v2550 = vpack.c.b16 %v2250, %v2246
    %v2551 = vpack.c.b16 %v2251, %v2247
    %v2552 = vpack.c.b16 %v2256, %v2252
    %v2553 = vpack.c.b16 %v2257, %v2253
    %v2554 = vpack.c.b16 %v2258, %v2254
    %v2555 = vpack.c.b16 %v2259, %v2255
    %v2556 = vpack.c.b16 %v2264, %v2260
    %v2557 = vpack.c.b16 %v2265, %v2261
    %v2558 = vpack.c.b16 %v2266, %v2262
    %v2559 = vpack.c.b16 %v2267, %v2263
    %v2560 = vpack.c.b16 %v2272, %v2268
    %v2561 = vpack.c.b16 %v2273, %v2269
    %v2562 = vpack.c.b16 %v2274, %v2270
    %v2563 = vpack.c.b16 %v2275, %v2271
    %v2564 = vpack.c.b16 %v2280, %v2276
    %v2565 = vpack.c.b16 %v2281, %v2277
    %v2566 = vpack.c.b16 %v2282, %v2278
    %v2567 = vpack.c.b16 %v2283, %v2279
    %v2568 = vpack.c.b16 %v2288, %v2284
    %v2569 = vpack.c.b16 %v2289, %v2285
    %v2570 = vpack.c.b16 %v2290, %v2286
    %v2571 = vpack.c.b16 %v2291, %v2287
    %v2572 = vpack.c.b16 %v2296, %v2292
    %v2573 = vpack.c.b16 %v2297, %v2293
    %v2574 = vpack.c.b16 %v2298, %v2294
    %v2575 = vpack.c.b16 %v2299, %v2295
    %v2576 = vpack.c.b16 %v2304, %v2300
    %v2577 = vpack.c.b16 %v2305, %v2301
    %v2578 = vpack.c.b16 %v2306, %v2302
    %v2579 = vpack.c.b16 %v2307, %v2303
    %v2580 = vpack.c.b16 %v2312, %v2308
    %v2581 = vpack.c.b16 %v2313, %v2309
    %v2582 = vpack.c.b16 %v2314, %v2310
    %v2583 = vpack.c.b16 %v2315, %v2311
    %v2584 = vpack.c.b16 %v2320, %v2316
    %v2585 = vpack.c.b16 %v2321, %v2317
    %v2586 = vpack.c.b16 %v2322, %v2318
    %v2587 = vpack.c.b16 %v2323, %v2319
    %v2588 = vpack.c.b16 %v2328, %v2324
    %v2589 = vpack.c.b16 %v2329, %v2325
    %v2590 = vpack.c.b16 %v2330, %v2326
    %v2591 = vpack.c.b16 %v2331, %v2327
    %v2592 = vpack.c.b16 %v2336, %v2332
    %v2593 = vpack.c.b16 %v2337, %v2333
    %v2594 = vpack.c.b16 %v2338, %v2334
    %v2595 = vpack.c.b16 %v2339, %v2335
    %2852 = vmatpush.bf16.msra.mxu0 %v2368
    %2853 = vmatpush.bf16.msra.mxu0 %v2364
    %2854 = vmatpush.bf16.msra.mxu0 %v2360
    %2855 = vmatpush.bf16.msra.mxu0 %v2356
    %2856 = vmatpush.bf16.msra.mxu0 %v2352
    %2857 = vmatpush.bf16.msra.mxu0 %v2348
    %2858 = vmatpush.bf16.msra.mxu0 %v2344
    %2859 = vmatpush.bf16.msra.mxu0 %v2340
    %2860 = vmatmul.bf16.gmra.mxu0 %v1178
    %v2861 = vpop.f32.mrf.mxu0
    %v2862 = vadd.f32 %v1564, %v2861
    %v2863 = vpop.f32.mrf.mxu0
    %v2864 = vadd.f32 %v1564, %v2863
    %2865 = vmatmul.bf16.gmra.mxu0 %v1186
    %v2866 = vpop.f32.mrf.mxu0
    %v2867 = vadd.f32 %v1564, %v2866
    %v2868 = vpop.f32.mrf.mxu0
    %v2869 = vadd.f32 %v1564, %v2868
    %2870 = vmatmul.bf16.gmra.mxu0 %v1194
    %v2871 = vpop.f32.mrf.mxu0
    %v2872 = vadd.f32 %v1564, %v2871
    %v2873 = vpop.f32.mrf.mxu0
    %v2874 = vadd.f32 %v1564, %v2873
    %2875 = vmatmul.bf16.gmra.mxu0 %v1202
    %v2876 = vpop.f32.mrf.mxu0
    %v2877 = vadd.f32 %v1564, %v2876
    %v2878 = vpop.f32.mrf.mxu0
    %v2879 = vadd.f32 %v1564, %v2878
    %2880 = vmatmul.bf16.gmra.mxu0 %v1210
    %v2881 = vpop.f32.mrf.mxu0
    %v2882 = vadd.f32 %v1564, %v2881
    %v2883 = vpop.f32.mrf.mxu0
    %v2884 = vadd.f32 %v1564, %v2883
    %2885 = vmatmul.bf16.gmra.mxu0 %v1218
    %v2886 = vpop.f32.mrf.mxu0
    %v2887 = vadd.f32 %v1564, %v2886
    %v2888 = vpop.f32.mrf.mxu0
    %v2889 = vadd.f32 %v1564, %v2888
    %2890 = vmatmul.bf16.gmra.mxu0 %v1226
    %v2891 = vpop.f32.mrf.mxu0
    %v2892 = vadd.f32 %v1564, %v2891
    %v2893 = vpop.f32.mrf.mxu0
    %v2894 = vadd.f32 %v1564, %v2893
    %2895 = vmatmul.bf16.gmra.mxu0 %v1234
    %v2896 = vpop.f32.mrf.mxu0
    %v2897 = vadd.f32 %v1564, %v2896
    %v2898 = vpop.f32.mrf.mxu0
    %v2899 = vadd.f32 %v1564, %v2898
    %2900 = vmatmul.bf16.gmra.mxu0 %v1242
    %v2901 = vpop.f32.mrf.mxu0
    %v2902 = vadd.f32 %v1564, %v2901
    %v2903 = vpop.f32.mrf.mxu0
    %v2904 = vadd.f32 %v1564, %v2903
    %2905 = vmatmul.bf16.gmra.mxu0 %v1250
    %v2906 = vpop.f32.mrf.mxu0
    %v2907 = vadd.f32 %v1564, %v2906
    %v2908 = vpop.f32.mrf.mxu0
    %v2909 = vadd.f32 %v1564, %v2908
    %2910 = vmatmul.bf16.gmra.mxu0 %v1258
    %v2911 = vpop.f32.mrf.mxu0
    %v2912 = vadd.f32 %v1564, %v2911
    %v2913 = vpop.f32.mrf.mxu0
    %v2914 = vadd.f32 %v1564, %v2913
    %2915 = vmatmul.bf16.gmra.mxu0 %v1266
    %v2916 = vpop.f32.mrf.mxu0
    %v2917 = vadd.f32 %v1564, %v2916
    %v2918 = vpop.f32.mrf.mxu0
    %v2919 = vadd.f32 %v1564, %v2918
    %2920 = vmatmul.bf16.gmra.mxu0 %v1274
    %v2921 = vpop.f32.mrf.mxu0
    %v2922 = vadd.f32 %v1564, %v2921
    %v2923 = vpop.f32.mrf.mxu0
    %v2924 = vadd.f32 %v1564, %v2923
    %2925 = vmatmul.bf16.gmra.mxu0 %v1282
    %v2926 = vpop.f32.mrf.mxu0
    %v2927 = vadd.f32 %v1564, %v2926
    %v2928 = vpop.f32.mrf.mxu0
    %v2929 = vadd.f32 %v1564, %v2928
    %2930 = vmatmul.bf16.gmra.mxu0 %v1290
    %v2931 = vpop.f32.mrf.mxu0
    %v2932 = vadd.f32 %v1564, %v2931
    %v2933 = vpop.f32.mrf.mxu0
    %v2934 = vadd.f32 %v1564, %v2933
    %2935 = vmatmul.bf16.gmra.mxu0 %v1298
    %v2936 = vpop.f32.mrf.mxu0
    %v2937 = vadd.f32 %v1564, %v2936
    %v2938 = vpop.f32.mrf.mxu0
    %v2939 = vadd.f32 %v1564, %v2938
    %2940 = vdwg.mxu0
    %2941 = vmatpush.bf16.msra.mxu0 %v2400
    %2942 = vmatpush.bf16.msra.mxu0 %v2396
    %2943 = vmatpush.bf16.msra.mxu0 %v2392
    %2944 = vmatpush.bf16.msra.mxu0 %v2388
    %2945 = vmatpush.bf16.msra.mxu0 %v2384
    %2946 = vmatpush.bf16.msra.mxu0 %v2380
    %2947 = vmatpush.bf16.msra.mxu0 %v2376
    %2948 = vmatpush.bf16.msra.mxu0 %v2372
    %2949 = vmatmul.bf16.gmra.mxu0 %v1179
    %v2950 = vpop.f32.mrf.mxu0
    %v2951 = vadd.f32 %v2862, %v2950
    %v2952 = vpop.f32.mrf.mxu0
    %v2953 = vadd.f32 %v2864, %v2952
    %2954 = vmatmul.bf16.gmra.mxu0 %v1187
    %v2955 = vpop.f32.mrf.mxu0
    %v2956 = vadd.f32 %v2867, %v2955
    %v2957 = vpop.f32.mrf.mxu0
    %v2958 = vadd.f32 %v2869, %v2957
    %2959 = vmatmul.bf16.gmra.mxu0 %v1195
    %v2960 = vpop.f32.mrf.mxu0
    %v2961 = vadd.f32 %v2872, %v2960
    %v2962 = vpop.f32.mrf.mxu0
    %v2963 = vadd.f32 %v2874, %v2962
    %2964 = vmatmul.bf16.gmra.mxu0 %v1203
    %v2965 = vpop.f32.mrf.mxu0
    %v2966 = vadd.f32 %v2877, %v2965
    %v2967 = vpop.f32.mrf.mxu0
    %v2968 = vadd.f32 %v2879, %v2967
    %2969 = vmatmul.bf16.gmra.mxu0 %v1211
    %v2970 = vpop.f32.mrf.mxu0
    %v2971 = vadd.f32 %v2882, %v2970
    %v2972 = vpop.f32.mrf.mxu0
    %v2973 = vadd.f32 %v2884, %v2972
    %2974 = vmatmul.bf16.gmra.mxu0 %v1219
    %v2975 = vpop.f32.mrf.mxu0
    %v2976 = vadd.f32 %v2887, %v2975
    %v2977 = vpop.f32.mrf.mxu0
    %v2978 = vadd.f32 %v2889, %v2977
    %2979 = vmatmul.bf16.gmra.mxu0 %v1227
    %v2980 = vpop.f32.mrf.mxu0
    %v2981 = vadd.f32 %v2892, %v2980
    %v2982 = vpop.f32.mrf.mxu0
    %v2983 = vadd.f32 %v2894, %v2982
    %2984 = vmatmul.bf16.gmra.mxu0 %v1235
    %v2985 = vpop.f32.mrf.mxu0
    %v2986 = vadd.f32 %v2897, %v2985
    %v2987 = vpop.f32.mrf.mxu0
    %v2988 = vadd.f32 %v2899, %v2987
    %2989 = vmatmul.bf16.gmra.mxu0 %v1243
    %v2990 = vpop.f32.mrf.mxu0
    %v2991 = vadd.f32 %v2902, %v2990
    %v2992 = vpop.f32.mrf.mxu0
    %v2993 = vadd.f32 %v2904, %v2992
    %2994 = vmatmul.bf16.gmra.mxu0 %v1251
    %v2995 = vpop.f32.mrf.mxu0
    %v2996 = vadd.f32 %v2907, %v2995
    %v2997 = vpop.f32.mrf.mxu0
    %v2998 = vadd.f32 %v2909, %v2997
    %2999 = vmatmul.bf16.gmra.mxu0 %v1259
    %v3000 = vpop.f32.mrf.mxu0
    %v3001 = vadd.f32 %v2912, %v3000
    %v3002 = vpop.f32.mrf.mxu0
    %v3003 = vadd.f32 %v2914, %v3002
    %3004 = vmatmul.bf16.gmra.mxu0 %v1267
    %v3005 = vpop.f32.mrf.mxu0
    %v3006 = vadd.f32 %v2917, %v3005
    %v3007 = vpop.f32.mrf.mxu0
    %v3008 = vadd.f32 %v2919, %v3007
    %3009 = vmatmul.bf16.gmra.mxu0 %v1275
    %v3010 = vpop.f32.mrf.mxu0
    %v3011 = vadd.f32 %v2922, %v3010
    %v3012 = vpop.f32.mrf.mxu0
    %v3013 = vadd.f32 %v2924, %v3012
    %3014 = vmatmul.bf16.gmra.mxu0 %v1283
    %v3015 = vpop.f32.mrf.mxu0
    %v3016 = vadd.f32 %v2927, %v3015
    %v3017 = vpop.f32.mrf.mxu0
    %v3018 = vadd.f32 %v2929, %v3017
    %3019 = vmatmul.bf16.gmra.mxu0 %v1291
    %v3020 = vpop.f32.mrf.mxu0
    %v3021 = vadd.f32 %v2932, %v3020
    %v3022 = vpop.f32.mrf.mxu0
    %v3023 = vadd.f32 %v2934, %v3022
    %3024 = vmatmul.bf16.gmra.mxu0 %v1299
    %v3025 = vpop.f32.mrf.mxu0
    %v3026 = vadd.f32 %v2937, %v3025
    %v3027 = vpop.f32.mrf.mxu0
    %v3028 = vadd.f32 %v2939, %v3027
    %3029 = vdwg.mxu0
    %3030 = vmatpush.bf16.msra.mxu0 %v2432
    %3031 = vmatpush.bf16.msra.mxu0 %v2428
    %3032 = vmatpush.bf16.msra.mxu0 %v2424
    %3033 = vmatpush.bf16.msra.mxu0 %v2420
    %3034 = vmatpush.bf16.msra.mxu0 %v2416
    %3035 = vmatpush.bf16.msra.mxu0 %v2412
    %3036 = vmatpush.bf16.msra.mxu0 %v2408
    %3037 = vmatpush.bf16.msra.mxu0 %v2404
    %3038 = vmatmul.bf16.gmra.mxu0 %v1180
    %v3039 = vpop.f32.mrf.mxu0
    %v3040 = vadd.f32 %v2951, %v3039
    %v3041 = vpop.f32.mrf.mxu0
    %v3042 = vadd.f32 %v2953, %v3041
    %3043 = vmatmul.bf16.gmra.mxu0 %v1188
    %v3044 = vpop.f32.mrf.mxu0
    %v3045 = vadd.f32 %v2956, %v3044
    %v3046 = vpop.f32.mrf.mxu0
    %v3047 = vadd.f32 %v2958, %v3046
    %3048 = vmatmul.bf16.gmra.mxu0 %v1196
    %v3049 = vpop.f32.mrf.mxu0
    %v3050 = vadd.f32 %v2961, %v3049
    %v3051 = vpop.f32.mrf.mxu0
    %v3052 = vadd.f32 %v2963, %v3051
    %3053 = vmatmul.bf16.gmra.mxu0 %v1204
    %v3054 = vpop.f32.mrf.mxu0
    %v3055 = vadd.f32 %v2966, %v3054
    %v3056 = vpop.f32.mrf.mxu0
    %v3057 = vadd.f32 %v2968, %v3056
    %3058 = vmatmul.bf16.gmra.mxu0 %v1212
    %v3059 = vpop.f32.mrf.mxu0
    %v3060 = vadd.f32 %v2971, %v3059
    %v3061 = vpop.f32.mrf.mxu0
    %v3062 = vadd.f32 %v2973, %v3061
    %3063 = vmatmul.bf16.gmra.mxu0 %v1220
    %v3064 = vpop.f32.mrf.mxu0
    %v3065 = vadd.f32 %v2976, %v3064
    %v3066 = vpop.f32.mrf.mxu0
    %v3067 = vadd.f32 %v2978, %v3066
    %3068 = vmatmul.bf16.gmra.mxu0 %v1228
    %v3069 = vpop.f32.mrf.mxu0
    %v3070 = vadd.f32 %v2981, %v3069
    %v3071 = vpop.f32.mrf.mxu0
    %v3072 = vadd.f32 %v2983, %v3071
    %3073 = vmatmul.bf16.gmra.mxu0 %v1236
    %v3074 = vpop.f32.mrf.mxu0
    %v3075 = vadd.f32 %v2986, %v3074
    %v3076 = vpop.f32.mrf.mxu0
    %v3077 = vadd.f32 %v2988, %v3076
    %3078 = vmatmul.bf16.gmra.mxu0 %v1244
    %v3079 = vpop.f32.mrf.mxu0
    %v3080 = vadd.f32 %v2991, %v3079
    %v3081 = vpop.f32.mrf.mxu0
    %v3082 = vadd.f32 %v2993, %v3081
    %3083 = vmatmul.bf16.gmra.mxu0 %v1252
    %v3084 = vpop.f32.mrf.mxu0
    %v3085 = vadd.f32 %v2996, %v3084
    %v3086 = vpop.f32.mrf.mxu0
    %v3087 = vadd.f32 %v2998, %v3086
    %3088 = vmatmul.bf16.gmra.mxu0 %v1260
    %v3089 = vpop.f32.mrf.mxu0
    %v3090 = vadd.f32 %v3001, %v3089
    %v3091 = vpop.f32.mrf.mxu0
    %v3092 = vadd.f32 %v3003, %v3091
    %3093 = vmatmul.bf16.gmra.mxu0 %v1268
    %v3094 = vpop.f32.mrf.mxu0
    %v3095 = vadd.f32 %v3006, %v3094
    %v3096 = vpop.f32.mrf.mxu0
    %v3097 = vadd.f32 %v3008, %v3096
    %3098 = vmatmul.bf16.gmra.mxu0 %v1276
    %v3099 = vpop.f32.mrf.mxu0
    %v3100 = vadd.f32 %v3011, %v3099
    %v3101 = vpop.f32.mrf.mxu0
    %v3102 = vadd.f32 %v3013, %v3101
    %3103 = vmatmul.bf16.gmra.mxu0 %v1284
    %v3104 = vpop.f32.mrf.mxu0
    %v3105 = vadd.f32 %v3016, %v3104
    %v3106 = vpop.f32.mrf.mxu0
    %v3107 = vadd.f32 %v3018, %v3106
    %3108 = vmatmul.bf16.gmra.mxu0 %v1292
    %v3109 = vpop.f32.mrf.mxu0
    %v3110 = vadd.f32 %v3021, %v3109
    %v3111 = vpop.f32.mrf.mxu0
    %v3112 = vadd.f32 %v3023, %v3111
    %3113 = vmatmul.bf16.gmra.mxu0 %v1300
    %v3114 = vpop.f32.mrf.mxu0
    %v3115 = vadd.f32 %v3026, %v3114
    %v3116 = vpop.f32.mrf.mxu0
    %v3117 = vadd.f32 %v3028, %v3116
    %3118 = vdwg.mxu0
    %3119 = vmatpush.bf16.msra.mxu0 %v2464
    %3120 = vmatpush.bf16.msra.mxu0 %v2460
    %3121 = vmatpush.bf16.msra.mxu0 %v2456
    %3122 = vmatpush.bf16.msra.mxu0 %v2452
    %3123 = vmatpush.bf16.msra.mxu0 %v2448
    %3124 = vmatpush.bf16.msra.mxu0 %v2444
    %3125 = vmatpush.bf16.msra.mxu0 %v2440
    %3126 = vmatpush.bf16.msra.mxu0 %v2436
    %3127 = vmatmul.bf16.gmra.mxu0 %v1181
    %v3128 = vpop.f32.mrf.mxu0
    %v3129 = vadd.f32 %v3040, %v3128
    %v3130 = vpop.f32.mrf.mxu0
    %v3131 = vadd.f32 %v3042, %v3130
    %3132 = vmatmul.bf16.gmra.mxu0 %v1189
    %v3133 = vpop.f32.mrf.mxu0
    %v3134 = vadd.f32 %v3045, %v3133
    %v3135 = vpop.f32.mrf.mxu0
    %v3136 = vadd.f32 %v3047, %v3135
    %3137 = vmatmul.bf16.gmra.mxu0 %v1197
    %v3138 = vpop.f32.mrf.mxu0
    %v3139 = vadd.f32 %v3050, %v3138
    %v3140 = vpop.f32.mrf.mxu0
    %v3141 = vadd.f32 %v3052, %v3140
    %3142 = vmatmul.bf16.gmra.mxu0 %v1205
    %v3143 = vpop.f32.mrf.mxu0
    %v3144 = vadd.f32 %v3055, %v3143
    %v3145 = vpop.f32.mrf.mxu0
    %v3146 = vadd.f32 %v3057, %v3145
    %3147 = vmatmul.bf16.gmra.mxu0 %v1213
    %v3148 = vpop.f32.mrf.mxu0
    %v3149 = vadd.f32 %v3060, %v3148
    %v3150 = vpop.f32.mrf.mxu0
    %v3151 = vadd.f32 %v3062, %v3150
    %3152 = vmatmul.bf16.gmra.mxu0 %v1221
    %v3153 = vpop.f32.mrf.mxu0
    %v3154 = vadd.f32 %v3065, %v3153
    %v3155 = vpop.f32.mrf.mxu0
    %v3156 = vadd.f32 %v3067, %v3155
    %3157 = vmatmul.bf16.gmra.mxu0 %v1229
    %v3158 = vpop.f32.mrf.mxu0
    %v3159 = vadd.f32 %v3070, %v3158
    %v3160 = vpop.f32.mrf.mxu0
    %v3161 = vadd.f32 %v3072, %v3160
    %3162 = vmatmul.bf16.gmra.mxu0 %v1237
    %v3163 = vpop.f32.mrf.mxu0
    %v3164 = vadd.f32 %v3075, %v3163
    %v3165 = vpop.f32.mrf.mxu0
    %v3166 = vadd.f32 %v3077, %v3165
    %3167 = vmatmul.bf16.gmra.mxu0 %v1245
    %v3168 = vpop.f32.mrf.mxu0
    %v3169 = vadd.f32 %v3080, %v3168
    %v3170 = vpop.f32.mrf.mxu0
    %v3171 = vadd.f32 %v3082, %v3170
    %3172 = vmatmul.bf16.gmra.mxu0 %v1253
    %v3173 = vpop.f32.mrf.mxu0
    %v3174 = vadd.f32 %v3085, %v3173
    %v3175 = vpop.f32.mrf.mxu0
    %v3176 = vadd.f32 %v3087, %v3175
    %3177 = vmatmul.bf16.gmra.mxu0 %v1261
    %v3178 = vpop.f32.mrf.mxu0
    %v3179 = vadd.f32 %v3090, %v3178
    %v3180 = vpop.f32.mrf.mxu0
    %v3181 = vadd.f32 %v3092, %v3180
    %3182 = vmatmul.bf16.gmra.mxu0 %v1269
    %v3183 = vpop.f32.mrf.mxu0
    %v3184 = vadd.f32 %v3095, %v3183
    %v3185 = vpop.f32.mrf.mxu0
    %v3186 = vadd.f32 %v3097, %v3185
    %3187 = vmatmul.bf16.gmra.mxu0 %v1277
    %v3188 = vpop.f32.mrf.mxu0
    %v3189 = vadd.f32 %v3100, %v3188
    %v3190 = vpop.f32.mrf.mxu0
    %v3191 = vadd.f32 %v3102, %v3190
    %3192 = vmatmul.bf16.gmra.mxu0 %v1285
    %v3193 = vpop.f32.mrf.mxu0
    %v3194 = vadd.f32 %v3105, %v3193
    %v3195 = vpop.f32.mrf.mxu0
    %v3196 = vadd.f32 %v3107, %v3195
    %3197 = vmatmul.bf16.gmra.mxu0 %v1293
    %v3198 = vpop.f32.mrf.mxu0
    %v3199 = vadd.f32 %v3110, %v3198
    %v3200 = vpop.f32.mrf.mxu0
    %v3201 = vadd.f32 %v3112, %v3200
    %3202 = vmatmul.bf16.gmra.mxu0 %v1301
    %v3203 = vpop.f32.mrf.mxu0
    %v3204 = vadd.f32 %v3115, %v3203
    %v3205 = vpop.f32.mrf.mxu0
    %v3206 = vadd.f32 %v3117, %v3205
    %3207 = vdwg.mxu0
    %3208 = vmatpush.bf16.msra.mxu0 %v2496
    %3209 = vmatpush.bf16.msra.mxu0 %v2492
    %3210 = vmatpush.bf16.msra.mxu0 %v2488
    %3211 = vmatpush.bf16.msra.mxu0 %v2484
    %3212 = vmatpush.bf16.msra.mxu0 %v2480
    %3213 = vmatpush.bf16.msra.mxu0 %v2476
    %3214 = vmatpush.bf16.msra.mxu0 %v2472
    %3215 = vmatpush.bf16.msra.mxu0 %v2468
    %3216 = vmatmul.bf16.gmra.mxu0 %v1182
    %v3217 = vpop.f32.mrf.mxu0
    %v3218 = vadd.f32 %v3129, %v3217
    %v3219 = vpop.f32.mrf.mxu0
    %v3220 = vadd.f32 %v3131, %v3219
    %3221 = vmatmul.bf16.gmra.mxu0 %v1190
    %v3222 = vpop.f32.mrf.mxu0
    %v3223 = vadd.f32 %v3134, %v3222
    %v3224 = vpop.f32.mrf.mxu0
    %v3225 = vadd.f32 %v3136, %v3224
    %3226 = vmatmul.bf16.gmra.mxu0 %v1198
    %v3227 = vpop.f32.mrf.mxu0
    %v3228 = vadd.f32 %v3139, %v3227
    %v3229 = vpop.f32.mrf.mxu0
    %v3230 = vadd.f32 %v3141, %v3229
    %3231 = vmatmul.bf16.gmra.mxu0 %v1206
    %v3232 = vpop.f32.mrf.mxu0
    %v3233 = vadd.f32 %v3144, %v3232
    %v3234 = vpop.f32.mrf.mxu0
    %v3235 = vadd.f32 %v3146, %v3234
    %3236 = vmatmul.bf16.gmra.mxu0 %v1214
    %v3237 = vpop.f32.mrf.mxu0
    %v3238 = vadd.f32 %v3149, %v3237
    %v3239 = vpop.f32.mrf.mxu0
    %v3240 = vadd.f32 %v3151, %v3239
    %3241 = vmatmul.bf16.gmra.mxu0 %v1222
    %v3242 = vpop.f32.mrf.mxu0
    %v3243 = vadd.f32 %v3154, %v3242
    %v3244 = vpop.f32.mrf.mxu0
    %v3245 = vadd.f32 %v3156, %v3244
    %3246 = vmatmul.bf16.gmra.mxu0 %v1230
    %v3247 = vpop.f32.mrf.mxu0
    %v3248 = vadd.f32 %v3159, %v3247
    %v3249 = vpop.f32.mrf.mxu0
    %v3250 = vadd.f32 %v3161, %v3249
    %3251 = vmatmul.bf16.gmra.mxu0 %v1238
    %v3252 = vpop.f32.mrf.mxu0
    %v3253 = vadd.f32 %v3164, %v3252
    %v3254 = vpop.f32.mrf.mxu0
    %v3255 = vadd.f32 %v3166, %v3254
    %3256 = vmatmul.bf16.gmra.mxu0 %v1246
    %v3257 = vpop.f32.mrf.mxu0
    %v3258 = vadd.f32 %v3169, %v3257
    %v3259 = vpop.f32.mrf.mxu0
    %v3260 = vadd.f32 %v3171, %v3259
    %3261 = vmatmul.bf16.gmra.mxu0 %v1254
    %v3262 = vpop.f32.mrf.mxu0
    %v3263 = vadd.f32 %v3174, %v3262
    %v3264 = vpop.f32.mrf.mxu0
    %v3265 = vadd.f32 %v3176, %v3264
    %3266 = vmatmul.bf16.gmra.mxu0 %v1262
    %v3267 = vpop.f32.mrf.mxu0
    %v3268 = vadd.f32 %v3179, %v3267
    %v3269 = vpop.f32.mrf.mxu0
    %v3270 = vadd.f32 %v3181, %v3269
    %3271 = vmatmul.bf16.gmra.mxu0 %v1270
    %v3272 = vpop.f32.mrf.mxu0
    %v3273 = vadd.f32 %v3184, %v3272
    %v3274 = vpop.f32.mrf.mxu0
    %v3275 = vadd.f32 %v3186, %v3274
    %3276 = vmatmul.bf16.gmra.mxu0 %v1278
    %v3277 = vpop.f32.mrf.mxu0
    %v3278 = vadd.f32 %v3189, %v3277
    %v3279 = vpop.f32.mrf.mxu0
    %v3280 = vadd.f32 %v3191, %v3279
    %3281 = vmatmul.bf16.gmra.mxu0 %v1286
    %v3282 = vpop.f32.mrf.mxu0
    %v3283 = vadd.f32 %v3194, %v3282
    %v3284 = vpop.f32.mrf.mxu0
    %v3285 = vadd.f32 %v3196, %v3284
    %3286 = vmatmul.bf16.gmra.mxu0 %v1294
    %v3287 = vpop.f32.mrf.mxu0
    %v3288 = vadd.f32 %v3199, %v3287
    %v3289 = vpop.f32.mrf.mxu0
    %v3290 = vadd.f32 %v3201, %v3289
    %3291 = vmatmul.bf16.gmra.mxu0 %v1302
    %v3292 = vpop.f32.mrf.mxu0
    %v3293 = vadd.f32 %v3204, %v3292
    %v3294 = vpop.f32.mrf.mxu0
    %v3295 = vadd.f32 %v3206, %v3294
    %3296 = vdwg.mxu0
    %3297 = vmatpush.bf16.msra.mxu0 %v2528
    %3298 = vmatpush.bf16.msra.mxu0 %v2524
    %3299 = vmatpush.bf16.msra.mxu0 %v2520
    %3300 = vmatpush.bf16.msra.mxu0 %v2516
    %3301 = vmatpush.bf16.msra.mxu0 %v2512
    %3302 = vmatpush.bf16.msra.mxu0 %v2508
    %3303 = vmatpush.bf16.msra.mxu0 %v2504
    %3304 = vmatpush.bf16.msra.mxu0 %v2500
    %3305 = vmatmul.bf16.gmra.mxu0 %v1183
    %v3306 = vpop.f32.mrf.mxu0
    %v3307 = vadd.f32 %v3218, %v3306
    %v3308 = vpop.f32.mrf.mxu0
    %v3309 = vadd.f32 %v3220, %v3308
    %3310 = vmatmul.bf16.gmra.mxu0 %v1191
    %v3311 = vpop.f32.mrf.mxu0
    %v3312 = vadd.f32 %v3223, %v3311
    %v3313 = vpop.f32.mrf.mxu0
    %v3314 = vadd.f32 %v3225, %v3313
    %3315 = vmatmul.bf16.gmra.mxu0 %v1199
    %v3316 = vpop.f32.mrf.mxu0
    %v3317 = vadd.f32 %v3228, %v3316
    %v3318 = vpop.f32.mrf.mxu0
    %v3319 = vadd.f32 %v3230, %v3318
    %3320 = vmatmul.bf16.gmra.mxu0 %v1207
    %v3321 = vpop.f32.mrf.mxu0
    %v3322 = vadd.f32 %v3233, %v3321
    %v3323 = vpop.f32.mrf.mxu0
    %v3324 = vadd.f32 %v3235, %v3323
    %3325 = vmatmul.bf16.gmra.mxu0 %v1215
    %v3326 = vpop.f32.mrf.mxu0
    %v3327 = vadd.f32 %v3238, %v3326
    %v3328 = vpop.f32.mrf.mxu0
    %v3329 = vadd.f32 %v3240, %v3328
    %3330 = vmatmul.bf16.gmra.mxu0 %v1223
    %v3331 = vpop.f32.mrf.mxu0
    %v3332 = vadd.f32 %v3243, %v3331
    %v3333 = vpop.f32.mrf.mxu0
    %v3334 = vadd.f32 %v3245, %v3333
    %3335 = vmatmul.bf16.gmra.mxu0 %v1231
    %v3336 = vpop.f32.mrf.mxu0
    %v3337 = vadd.f32 %v3248, %v3336
    %v3338 = vpop.f32.mrf.mxu0
    %v3339 = vadd.f32 %v3250, %v3338
    %3340 = vmatmul.bf16.gmra.mxu0 %v1239
    %v3341 = vpop.f32.mrf.mxu0
    %v3342 = vadd.f32 %v3253, %v3341
    %v3343 = vpop.f32.mrf.mxu0
    %v3344 = vadd.f32 %v3255, %v3343
    %3345 = vmatmul.bf16.gmra.mxu0 %v1247
    %v3346 = vpop.f32.mrf.mxu0
    %v3347 = vadd.f32 %v3258, %v3346
    %v3348 = vpop.f32.mrf.mxu0
    %v3349 = vadd.f32 %v3260, %v3348
    %3350 = vmatmul.bf16.gmra.mxu0 %v1255
    %v3351 = vpop.f32.mrf.mxu0
    %v3352 = vadd.f32 %v3263, %v3351
    %v3353 = vpop.f32.mrf.mxu0
    %v3354 = vadd.f32 %v3265, %v3353
    %3355 = vmatmul.bf16.gmra.mxu0 %v1263
    %v3356 = vpop.f32.mrf.mxu0
    %v3357 = vadd.f32 %v3268, %v3356
    %v3358 = vpop.f32.mrf.mxu0
    %v3359 = vadd.f32 %v3270, %v3358
    %3360 = vmatmul.bf16.gmra.mxu0 %v1271
    %v3361 = vpop.f32.mrf.mxu0
    %v3362 = vadd.f32 %v3273, %v3361
    %v3363 = vpop.f32.mrf.mxu0
    %v3364 = vadd.f32 %v3275, %v3363
    %3365 = vmatmul.bf16.gmra.mxu0 %v1279
    %v3366 = vpop.f32.mrf.mxu0
    %v3367 = vadd.f32 %v3278, %v3366
    %v3368 = vpop.f32.mrf.mxu0
    %v3369 = vadd.f32 %v3280, %v3368
    %3370 = vmatmul.bf16.gmra.mxu0 %v1287
    %v3371 = vpop.f32.mrf.mxu0
    %v3372 = vadd.f32 %v3283, %v3371
    %v3373 = vpop.f32.mrf.mxu0
    %v3374 = vadd.f32 %v3285, %v3373
    %3375 = vmatmul.bf16.gmra.mxu0 %v1295
    %v3376 = vpop.f32.mrf.mxu0
    %v3377 = vadd.f32 %v3288, %v3376
    %v3378 = vpop.f32.mrf.mxu0
    %v3379 = vadd.f32 %v3290, %v3378
    %3380 = vmatmul.bf16.gmra.mxu0 %v1303
    %v3381 = vpop.f32.mrf.mxu0
    %v3382 = vadd.f32 %v3293, %v3381
    %v3383 = vpop.f32.mrf.mxu0
    %v3384 = vadd.f32 %v3295, %v3383
    %3385 = vdwg.mxu0
    %3386 = vmatpush.bf16.msra.mxu0 %v2560
    %3387 = vmatpush.bf16.msra.mxu0 %v2556
    %3388 = vmatpush.bf16.msra.mxu0 %v2552
    %3389 = vmatpush.bf16.msra.mxu0 %v2548
    %3390 = vmatpush.bf16.msra.mxu0 %v2544
    %3391 = vmatpush.bf16.msra.mxu0 %v2540
    %3392 = vmatpush.bf16.msra.mxu0 %v2536
    %3393 = vmatpush.bf16.msra.mxu0 %v2532
    %3394 = vmatmul.bf16.gmra.mxu0 %v1184
    %v3395 = vpop.f32.mrf.mxu0
    %v3396 = vadd.f32 %v3307, %v3395
    %v3397 = vpop.f32.mrf.mxu0
    %v3398 = vadd.f32 %v3309, %v3397
    %3399 = vmatmul.bf16.gmra.mxu0 %v1192
    %v3400 = vpop.f32.mrf.mxu0
    %v3401 = vadd.f32 %v3312, %v3400
    %v3402 = vpop.f32.mrf.mxu0
    %v3403 = vadd.f32 %v3314, %v3402
    %3404 = vmatmul.bf16.gmra.mxu0 %v1200
    %v3405 = vpop.f32.mrf.mxu0
    %v3406 = vadd.f32 %v3317, %v3405
    %v3407 = vpop.f32.mrf.mxu0
    %v3408 = vadd.f32 %v3319, %v3407
    %3409 = vmatmul.bf16.gmra.mxu0 %v1208
    %v3410 = vpop.f32.mrf.mxu0
    %v3411 = vadd.f32 %v3322, %v3410
    %v3412 = vpop.f32.mrf.mxu0
    %v3413 = vadd.f32 %v3324, %v3412
    %3414 = vmatmul.bf16.gmra.mxu0 %v1216
    %v3415 = vpop.f32.mrf.mxu0
    %v3416 = vadd.f32 %v3327, %v3415
    %v3417 = vpop.f32.mrf.mxu0
    %v3418 = vadd.f32 %v3329, %v3417
    %3419 = vmatmul.bf16.gmra.mxu0 %v1224
    %v3420 = vpop.f32.mrf.mxu0
    %v3421 = vadd.f32 %v3332, %v3420
    %v3422 = vpop.f32.mrf.mxu0
    %v3423 = vadd.f32 %v3334, %v3422
    %3424 = vmatmul.bf16.gmra.mxu0 %v1232
    %v3425 = vpop.f32.mrf.mxu0
    %v3426 = vadd.f32 %v3337, %v3425
    %v3427 = vpop.f32.mrf.mxu0
    %v3428 = vadd.f32 %v3339, %v3427
    %3429 = vmatmul.bf16.gmra.mxu0 %v1240
    %v3430 = vpop.f32.mrf.mxu0
    %v3431 = vadd.f32 %v3342, %v3430
    %v3432 = vpop.f32.mrf.mxu0
    %v3433 = vadd.f32 %v3344, %v3432
    %3434 = vmatmul.bf16.gmra.mxu0 %v1248
    %v3435 = vpop.f32.mrf.mxu0
    %v3436 = vadd.f32 %v3347, %v3435
    %v3437 = vpop.f32.mrf.mxu0
    %v3438 = vadd.f32 %v3349, %v3437
    %3439 = vmatmul.bf16.gmra.mxu0 %v1256
    %v3440 = vpop.f32.mrf.mxu0
    %v3441 = vadd.f32 %v3352, %v3440
    %v3442 = vpop.f32.mrf.mxu0
    %v3443 = vadd.f32 %v3354, %v3442
    %3444 = vmatmul.bf16.gmra.mxu0 %v1264
    %v3445 = vpop.f32.mrf.mxu0
    %v3446 = vadd.f32 %v3357, %v3445
    %v3447 = vpop.f32.mrf.mxu0
    %v3448 = vadd.f32 %v3359, %v3447
    %3449 = vmatmul.bf16.gmra.mxu0 %v1272
    %v3450 = vpop.f32.mrf.mxu0
    %v3451 = vadd.f32 %v3362, %v3450
    %v3452 = vpop.f32.mrf.mxu0
    %v3453 = vadd.f32 %v3364, %v3452
    %3454 = vmatmul.bf16.gmra.mxu0 %v1280
    %v3455 = vpop.f32.mrf.mxu0
    %v3456 = vadd.f32 %v3367, %v3455
    %v3457 = vpop.f32.mrf.mxu0
    %v3458 = vadd.f32 %v3369, %v3457
    %3459 = vmatmul.bf16.gmra.mxu0 %v1288
    %v3460 = vpop.f32.mrf.mxu0
    %v3461 = vadd.f32 %v3372, %v3460
    %v3462 = vpop.f32.mrf.mxu0
    %v3463 = vadd.f32 %v3374, %v3462
    %3464 = vmatmul.bf16.gmra.mxu0 %v1296
    %v3465 = vpop.f32.mrf.mxu0
    %v3466 = vadd.f32 %v3377, %v3465
    %v3467 = vpop.f32.mrf.mxu0
    %v3468 = vadd.f32 %v3379, %v3467
    %3469 = vmatmul.bf16.gmra.mxu0 %v1304
    %v3470 = vpop.f32.mrf.mxu0
    %v3471 = vadd.f32 %v3382, %v3470
    %v3472 = vpop.f32.mrf.mxu0
    %v3473 = vadd.f32 %v3384, %v3472
    %3474 = vdwg.mxu0
    %3475 = vmatpush.bf16.msra.mxu0 %v2592
    %3476 = vmatpush.bf16.msra.mxu0 %v2588
    %3477 = vmatpush.bf16.msra.mxu0 %v2584
    %3478 = vmatpush.bf16.msra.mxu0 %v2580
    %3479 = vmatpush.bf16.msra.mxu0 %v2576
    %3480 = vmatpush.bf16.msra.mxu0 %v2572
    %3481 = vmatpush.bf16.msra.mxu0 %v2568
    %3482 = vmatpush.bf16.msra.mxu0 %v2564
    %3483 = vmatmul.bf16.gmra.mxu0 %v1185
    %v3484 = vpop.f32.mrf.mxu0
    %v3485 = vadd.f32 %v3396, %v3484
    %v3486 = vpop.f32.mrf.mxu0
    %v3487 = vadd.f32 %v3398, %v3486
    %3488 = vmatmul.bf16.gmra.mxu0 %v1193
    %v3489 = vpop.f32.mrf.mxu0
    %v3490 = vadd.f32 %v3401, %v3489
    %v3491 = vpop.f32.mrf.mxu0
    %v3492 = vadd.f32 %v3403, %v3491
    %3493 = vmatmul.bf16.gmra.mxu0 %v1201
    %v3494 = vpop.f32.mrf.mxu0
    %v3495 = vadd.f32 %v3406, %v3494
    %v3496 = vpop.f32.mrf.mxu0
    %v3497 = vadd.f32 %v3408, %v3496
    %3498 = vmatmul.bf16.gmra.mxu0 %v1209
    %v3499 = vpop.f32.mrf.mxu0
    %v3500 = vadd.f32 %v3411, %v3499
    %v3501 = vpop.f32.mrf.mxu0
    %v3502 = vadd.f32 %v3413, %v3501
    %3503 = vmatmul.bf16.gmra.mxu0 %v1217
    %v3504 = vpop.f32.mrf.mxu0
    %v3505 = vadd.f32 %v3416, %v3504
    %v3506 = vpop.f32.mrf.mxu0
    %v3507 = vadd.f32 %v3418, %v3506
    %3508 = vmatmul.bf16.gmra.mxu0 %v1225
    %v3509 = vpop.f32.mrf.mxu0
    %v3510 = vadd.f32 %v3421, %v3509
    %v3511 = vpop.f32.mrf.mxu0
    %v3512 = vadd.f32 %v3423, %v3511
    %3513 = vmatmul.bf16.gmra.mxu0 %v1233
    %v3514 = vpop.f32.mrf.mxu0
    %v3515 = vadd.f32 %v3426, %v3514
    %v3516 = vpop.f32.mrf.mxu0
    %v3517 = vadd.f32 %v3428, %v3516
    %3518 = vmatmul.bf16.gmra.mxu0 %v1241
    %v3519 = vpop.f32.mrf.mxu0
    %v3520 = vadd.f32 %v3431, %v3519
    %v3521 = vpop.f32.mrf.mxu0
    %v3522 = vadd.f32 %v3433, %v3521
    %3523 = vmatmul.bf16.gmra.mxu0 %v1249
    %v3524 = vpop.f32.mrf.mxu0
    %v3525 = vadd.f32 %v3436, %v3524
    %v3526 = vpop.f32.mrf.mxu0
    %v3527 = vadd.f32 %v3438, %v3526
    %3528 = vmatmul.bf16.gmra.mxu0 %v1257
    %v3529 = vpop.f32.mrf.mxu0
    %v3530 = vadd.f32 %v3441, %v3529
    %v3531 = vpop.f32.mrf.mxu0
    %v3532 = vadd.f32 %v3443, %v3531
    %3533 = vmatmul.bf16.gmra.mxu0 %v1265
    %v3534 = vpop.f32.mrf.mxu0
    %v3535 = vadd.f32 %v3446, %v3534
    %v3536 = vpop.f32.mrf.mxu0
    %v3537 = vadd.f32 %v3448, %v3536
    %3538 = vmatmul.bf16.gmra.mxu0 %v1273
    %v3539 = vpop.f32.mrf.mxu0
    %v3540 = vadd.f32 %v3451, %v3539
    %v3541 = vpop.f32.mrf.mxu0
    %v3542 = vadd.f32 %v3453, %v3541
    %3543 = vmatmul.bf16.gmra.mxu0 %v1281
    %v3544 = vpop.f32.mrf.mxu0
    %v3545 = vadd.f32 %v3456, %v3544
    %v3546 = vpop.f32.mrf.mxu0
    %v3547 = vadd.f32 %v3458, %v3546
    %3548 = vmatmul.bf16.gmra.mxu0 %v1289
    %v3549 = vpop.f32.mrf.mxu0
    %v3550 = vadd.f32 %v3461, %v3549
    %v3551 = vpop.f32.mrf.mxu0
    %v3552 = vadd.f32 %v3463, %v3551
    %3553 = vmatmul.bf16.gmra.mxu0 %v1297
    %v3554 = vpop.f32.mrf.mxu0
    %v3555 = vadd.f32 %v3466, %v3554
    %v3556 = vpop.f32.mrf.mxu0
    %v3557 = vadd.f32 %v3468, %v3556
    %3558 = vmatmul.bf16.gmra.mxu0 %v1305
    %v3559 = vpop.f32.mrf.mxu0
    %v3560 = vadd.f32 %v3471, %v3559
    %v3561 = vpop.f32.mrf.mxu0
    %v3562 = vadd.f32 %v3473, %v3561
    %3563 = vdwg.mxu0
    %3564 = vmatpush.bf16.msra.mxu0 %v2369
    %3565 = vmatpush.bf16.msra.mxu0 %v2365
    %3566 = vmatpush.bf16.msra.mxu0 %v2361
    %3567 = vmatpush.bf16.msra.mxu0 %v2357
    %3568 = vmatpush.bf16.msra.mxu0 %v2353
    %3569 = vmatpush.bf16.msra.mxu0 %v2349
    %3570 = vmatpush.bf16.msra.mxu0 %v2345
    %3571 = vmatpush.bf16.msra.mxu0 %v2341
    %3572 = vmatmul.bf16.gmra.mxu0 %v1178
    %v3573 = vpop.f32.mrf.mxu0
    %v3574 = vadd.f32 %v1565, %v3573
    %v3575 = vpop.f32.mrf.mxu0
    %v3576 = vadd.f32 %v1565, %v3575
    %3577 = vmatmul.bf16.gmra.mxu0 %v1186
    %v3578 = vpop.f32.mrf.mxu0
    %v3579 = vadd.f32 %v1565, %v3578
    %v3580 = vpop.f32.mrf.mxu0
    %v3581 = vadd.f32 %v1565, %v3580
    %3582 = vmatmul.bf16.gmra.mxu0 %v1194
    %v3583 = vpop.f32.mrf.mxu0
    %v3584 = vadd.f32 %v1565, %v3583
    %v3585 = vpop.f32.mrf.mxu0
    %v3586 = vadd.f32 %v1565, %v3585
    %3587 = vmatmul.bf16.gmra.mxu0 %v1202
    %v3588 = vpop.f32.mrf.mxu0
    %v3589 = vadd.f32 %v1565, %v3588
    %v3590 = vpop.f32.mrf.mxu0
    %v3591 = vadd.f32 %v1565, %v3590
    %3592 = vmatmul.bf16.gmra.mxu0 %v1210
    %v3593 = vpop.f32.mrf.mxu0
    %v3594 = vadd.f32 %v1565, %v3593
    %v3595 = vpop.f32.mrf.mxu0
    %v3596 = vadd.f32 %v1565, %v3595
    %3597 = vmatmul.bf16.gmra.mxu0 %v1218
    %v3598 = vpop.f32.mrf.mxu0
    %v3599 = vadd.f32 %v1565, %v3598
    %v3600 = vpop.f32.mrf.mxu0
    %v3601 = vadd.f32 %v1565, %v3600
    %3602 = vmatmul.bf16.gmra.mxu0 %v1226
    %v3603 = vpop.f32.mrf.mxu0
    %v3604 = vadd.f32 %v1565, %v3603
    %v3605 = vpop.f32.mrf.mxu0
    %v3606 = vadd.f32 %v1565, %v3605
    %3607 = vmatmul.bf16.gmra.mxu0 %v1234
    %v3608 = vpop.f32.mrf.mxu0
    %v3609 = vadd.f32 %v1565, %v3608
    %v3610 = vpop.f32.mrf.mxu0
    %v3611 = vadd.f32 %v1565, %v3610
    %3612 = vmatmul.bf16.gmra.mxu0 %v1242
    %v3613 = vpop.f32.mrf.mxu0
    %v3614 = vadd.f32 %v1565, %v3613
    %v3615 = vpop.f32.mrf.mxu0
    %v3616 = vadd.f32 %v1565, %v3615
    %3617 = vmatmul.bf16.gmra.mxu0 %v1250
    %v3618 = vpop.f32.mrf.mxu0
    %v3619 = vadd.f32 %v1565, %v3618
    %v3620 = vpop.f32.mrf.mxu0
    %v3621 = vadd.f32 %v1565, %v3620
    %3622 = vmatmul.bf16.gmra.mxu0 %v1258
    %v3623 = vpop.f32.mrf.mxu0
    %v3624 = vadd.f32 %v1565, %v3623
    %v3625 = vpop.f32.mrf.mxu0
    %v3626 = vadd.f32 %v1565, %v3625
    %3627 = vmatmul.bf16.gmra.mxu0 %v1266
    %v3628 = vpop.f32.mrf.mxu0
    %v3629 = vadd.f32 %v1565, %v3628
    %v3630 = vpop.f32.mrf.mxu0
    %v3631 = vadd.f32 %v1565, %v3630
    %3632 = vmatmul.bf16.gmra.mxu0 %v1274
    %v3633 = vpop.f32.mrf.mxu0
    %v3634 = vadd.f32 %v1565, %v3633
    %v3635 = vpop.f32.mrf.mxu0
    %v3636 = vadd.f32 %v1565, %v3635
    %3637 = vmatmul.bf16.gmra.mxu0 %v1282
    %v3638 = vpop.f32.mrf.mxu0
    %v3639 = vadd.f32 %v1565, %v3638
    %v3640 = vpop.f32.mrf.mxu0
    %v3641 = vadd.f32 %v1565, %v3640
    %3642 = vmatmul.bf16.gmra.mxu0 %v1290
    %v3643 = vpop.f32.mrf.mxu0
    %v3644 = vadd.f32 %v1565, %v3643
    %v3645 = vpop.f32.mrf.mxu0
    %v3646 = vadd.f32 %v1565, %v3645
    %3647 = vmatmul.bf16.gmra.mxu0 %v1298
    %v3648 = vpop.f32.mrf.mxu0
    %v3649 = vadd.f32 %v1565, %v3648
    %v3650 = vpop.f32.mrf.mxu0
    %v3651 = vadd.f32 %v1565, %v3650
    %3652 = vdwg.mxu0
    %3653 = vmatpush.bf16.msra.mxu0 %v2401
    %3654 = vmatpush.bf16.msra.mxu0 %v2397
    %3655 = vmatpush.bf16.msra.mxu0 %v2393
    %3656 = vmatpush.bf16.msra.mxu0 %v2389
    %3657 = vmatpush.bf16.msra.mxu0 %v2385
    %3658 = vmatpush.bf16.msra.mxu0 %v2381
    %3659 = vmatpush.bf16.msra.mxu0 %v2377
    %3660 = vmatpush.bf16.msra.mxu0 %v2373
    %3661 = vmatmul.bf16.gmra.mxu0 %v1179
    %v3662 = vpop.f32.mrf.mxu0
    %v3663 = vadd.f32 %v3574, %v3662
    %v3664 = vpop.f32.mrf.mxu0
    %v3665 = vadd.f32 %v3576, %v3664
    %3666 = vmatmul.bf16.gmra.mxu0 %v1187
    %v3667 = vpop.f32.mrf.mxu0
    %v3668 = vadd.f32 %v3579, %v3667
    %v3669 = vpop.f32.mrf.mxu0
    %v3670 = vadd.f32 %v3581, %v3669
    %3671 = vmatmul.bf16.gmra.mxu0 %v1195
    %v3672 = vpop.f32.mrf.mxu0
    %v3673 = vadd.f32 %v3584, %v3672
    %v3674 = vpop.f32.mrf.mxu0
    %v3675 = vadd.f32 %v3586, %v3674
    %3676 = vmatmul.bf16.gmra.mxu0 %v1203
    %v3677 = vpop.f32.mrf.mxu0
    %v3678 = vadd.f32 %v3589, %v3677
    %v3679 = vpop.f32.mrf.mxu0
    %v3680 = vadd.f32 %v3591, %v3679
    %3681 = vmatmul.bf16.gmra.mxu0 %v1211
    %v3682 = vpop.f32.mrf.mxu0
    %v3683 = vadd.f32 %v3594, %v3682
    %v3684 = vpop.f32.mrf.mxu0
    %v3685 = vadd.f32 %v3596, %v3684
    %3686 = vmatmul.bf16.gmra.mxu0 %v1219
    %v3687 = vpop.f32.mrf.mxu0
    %v3688 = vadd.f32 %v3599, %v3687
    %v3689 = vpop.f32.mrf.mxu0
    %v3690 = vadd.f32 %v3601, %v3689
    %3691 = vmatmul.bf16.gmra.mxu0 %v1227
    %v3692 = vpop.f32.mrf.mxu0
    %v3693 = vadd.f32 %v3604, %v3692
    %v3694 = vpop.f32.mrf.mxu0
    %v3695 = vadd.f32 %v3606, %v3694
    %3696 = vmatmul.bf16.gmra.mxu0 %v1235
    %v3697 = vpop.f32.mrf.mxu0
    %v3698 = vadd.f32 %v3609, %v3697
    %v3699 = vpop.f32.mrf.mxu0
    %v3700 = vadd.f32 %v3611, %v3699
    %3701 = vmatmul.bf16.gmra.mxu0 %v1243
    %v3702 = vpop.f32.mrf.mxu0
    %v3703 = vadd.f32 %v3614, %v3702
    %v3704 = vpop.f32.mrf.mxu0
    %v3705 = vadd.f32 %v3616, %v3704
    %3706 = vmatmul.bf16.gmra.mxu0 %v1251
    %v3707 = vpop.f32.mrf.mxu0
    %v3708 = vadd.f32 %v3619, %v3707
    %v3709 = vpop.f32.mrf.mxu0
    %v3710 = vadd.f32 %v3621, %v3709
    %3711 = vmatmul.bf16.gmra.mxu0 %v1259
    %v3712 = vpop.f32.mrf.mxu0
    %v3713 = vadd.f32 %v3624, %v3712
    %v3714 = vpop.f32.mrf.mxu0
    %v3715 = vadd.f32 %v3626, %v3714
    %3716 = vmatmul.bf16.gmra.mxu0 %v1267
    %v3717 = vpop.f32.mrf.mxu0
    %v3718 = vadd.f32 %v3629, %v3717
    %v3719 = vpop.f32.mrf.mxu0
    %v3720 = vadd.f32 %v3631, %v3719
    %3721 = vmatmul.bf16.gmra.mxu0 %v1275
    %v3722 = vpop.f32.mrf.mxu0
    %v3723 = vadd.f32 %v3634, %v3722
    %v3724 = vpop.f32.mrf.mxu0
    %v3725 = vadd.f32 %v3636, %v3724
    %3726 = vmatmul.bf16.gmra.mxu0 %v1283
    %v3727 = vpop.f32.mrf.mxu0
    %v3728 = vadd.f32 %v3639, %v3727
    %v3729 = vpop.f32.mrf.mxu0
    %v3730 = vadd.f32 %v3641, %v3729
    %3731 = vmatmul.bf16.gmra.mxu0 %v1291
    %v3732 = vpop.f32.mrf.mxu0
    %v3733 = vadd.f32 %v3644, %v3732
    %v3734 = vpop.f32.mrf.mxu0
    %v3735 = vadd.f32 %v3646, %v3734
    %3736 = vmatmul.bf16.gmra.mxu0 %v1299
    %v3737 = vpop.f32.mrf.mxu0
    %v3738 = vadd.f32 %v3649, %v3737
    %v3739 = vpop.f32.mrf.mxu0
    %v3740 = vadd.f32 %v3651, %v3739
    %3741 = vdwg.mxu0
    %3742 = vmatpush.bf16.msra.mxu0 %v2433
    %3743 = vmatpush.bf16.msra.mxu0 %v2429
    %3744 = vmatpush.bf16.msra.mxu0 %v2425
    %3745 = vmatpush.bf16.msra.mxu0 %v2421
    %3746 = vmatpush.bf16.msra.mxu0 %v2417
    %3747 = vmatpush.bf16.msra.mxu0 %v2413
    %3748 = vmatpush.bf16.msra.mxu0 %v2409
    %3749 = vmatpush.bf16.msra.mxu0 %v2405
    %3750 = vmatmul.bf16.gmra.mxu0 %v1180
    %v3751 = vpop.f32.mrf.mxu0
    %v3752 = vadd.f32 %v3663, %v3751
    %v3753 = vpop.f32.mrf.mxu0
    %v3754 = vadd.f32 %v3665, %v3753
    %3755 = vmatmul.bf16.gmra.mxu0 %v1188
    %v3756 = vpop.f32.mrf.mxu0
    %v3757 = vadd.f32 %v3668, %v3756
    %v3758 = vpop.f32.mrf.mxu0
    %v3759 = vadd.f32 %v3670, %v3758
    %3760 = vmatmul.bf16.gmra.mxu0 %v1196
    %v3761 = vpop.f32.mrf.mxu0
    %v3762 = vadd.f32 %v3673, %v3761
    %v3763 = vpop.f32.mrf.mxu0
    %v3764 = vadd.f32 %v3675, %v3763
    %3765 = vmatmul.bf16.gmra.mxu0 %v1204
    %v3766 = vpop.f32.mrf.mxu0
    %v3767 = vadd.f32 %v3678, %v3766
    %v3768 = vpop.f32.mrf.mxu0
    %v3769 = vadd.f32 %v3680, %v3768
    %3770 = vmatmul.bf16.gmra.mxu0 %v1212
    %v3771 = vpop.f32.mrf.mxu0
    %v3772 = vadd.f32 %v3683, %v3771
    %v3773 = vpop.f32.mrf.mxu0
    %v3774 = vadd.f32 %v3685, %v3773
    %3775 = vmatmul.bf16.gmra.mxu0 %v1220
    %v3776 = vpop.f32.mrf.mxu0
    %v3777 = vadd.f32 %v3688, %v3776
    %v3778 = vpop.f32.mrf.mxu0
    %v3779 = vadd.f32 %v3690, %v3778
    %3780 = vmatmul.bf16.gmra.mxu0 %v1228
    %v3781 = vpop.f32.mrf.mxu0
    %v3782 = vadd.f32 %v3693, %v3781
    %v3783 = vpop.f32.mrf.mxu0
    %v3784 = vadd.f32 %v3695, %v3783
    %3785 = vmatmul.bf16.gmra.mxu0 %v1236
    %v3786 = vpop.f32.mrf.mxu0
    %v3787 = vadd.f32 %v3698, %v3786
    %v3788 = vpop.f32.mrf.mxu0
    %v3789 = vadd.f32 %v3700, %v3788
    %3790 = vmatmul.bf16.gmra.mxu0 %v1244
    %v3791 = vpop.f32.mrf.mxu0
    %v3792 = vadd.f32 %v3703, %v3791
    %v3793 = vpop.f32.mrf.mxu0
    %v3794 = vadd.f32 %v3705, %v3793
    %3795 = vmatmul.bf16.gmra.mxu0 %v1252
    %v3796 = vpop.f32.mrf.mxu0
    %v3797 = vadd.f32 %v3708, %v3796
    %v3798 = vpop.f32.mrf.mxu0
    %v3799 = vadd.f32 %v3710, %v3798
    %3800 = vmatmul.bf16.gmra.mxu0 %v1260
    %v3801 = vpop.f32.mrf.mxu0
    %v3802 = vadd.f32 %v3713, %v3801
    %v3803 = vpop.f32.mrf.mxu0
    %v3804 = vadd.f32 %v3715, %v3803
    %3805 = vmatmul.bf16.gmra.mxu0 %v1268
    %v3806 = vpop.f32.mrf.mxu0
    %v3807 = vadd.f32 %v3718, %v3806
    %v3808 = vpop.f32.mrf.mxu0
    %v3809 = vadd.f32 %v3720, %v3808
    %3810 = vmatmul.bf16.gmra.mxu0 %v1276
    %v3811 = vpop.f32.mrf.mxu0
    %v3812 = vadd.f32 %v3723, %v3811
    %v3813 = vpop.f32.mrf.mxu0
    %v3814 = vadd.f32 %v3725, %v3813
    %3815 = vmatmul.bf16.gmra.mxu0 %v1284
    %v3816 = vpop.f32.mrf.mxu0
    %v3817 = vadd.f32 %v3728, %v3816
    %v3818 = vpop.f32.mrf.mxu0
    %v3819 = vadd.f32 %v3730, %v3818
    %3820 = vmatmul.bf16.gmra.mxu0 %v1292
    %v3821 = vpop.f32.mrf.mxu0
    %v3822 = vadd.f32 %v3733, %v3821
    %v3823 = vpop.f32.mrf.mxu0
    %v3824 = vadd.f32 %v3735, %v3823
    %3825 = vmatmul.bf16.gmra.mxu0 %v1300
    %v3826 = vpop.f32.mrf.mxu0
    %v3827 = vadd.f32 %v3738, %v3826
    %v3828 = vpop.f32.mrf.mxu0
    %v3829 = vadd.f32 %v3740, %v3828
    %3830 = vdwg.mxu0
    %3831 = vmatpush.bf16.msra.mxu0 %v2465
    %3832 = vmatpush.bf16.msra.mxu0 %v2461
    %3833 = vmatpush.bf16.msra.mxu0 %v2457
    %3834 = vmatpush.bf16.msra.mxu0 %v2453
    %3835 = vmatpush.bf16.msra.mxu0 %v2449
    %3836 = vmatpush.bf16.msra.mxu0 %v2445
    %3837 = vmatpush.bf16.msra.mxu0 %v2441
    %3838 = vmatpush.bf16.msra.mxu0 %v2437
    %3839 = vmatmul.bf16.gmra.mxu0 %v1181
    %v3840 = vpop.f32.mrf.mxu0
    %v3841 = vadd.f32 %v3752, %v3840
    %v3842 = vpop.f32.mrf.mxu0
    %v3843 = vadd.f32 %v3754, %v3842
    %3844 = vmatmul.bf16.gmra.mxu0 %v1189
    %v3845 = vpop.f32.mrf.mxu0
    %v3846 = vadd.f32 %v3757, %v3845
    %v3847 = vpop.f32.mrf.mxu0
    %v3848 = vadd.f32 %v3759, %v3847
    %3849 = vmatmul.bf16.gmra.mxu0 %v1197
    %v3850 = vpop.f32.mrf.mxu0
    %v3851 = vadd.f32 %v3762, %v3850
    %v3852 = vpop.f32.mrf.mxu0
    %v3853 = vadd.f32 %v3764, %v3852
    %3854 = vmatmul.bf16.gmra.mxu0 %v1205
    %v3855 = vpop.f32.mrf.mxu0
    %v3856 = vadd.f32 %v3767, %v3855
    %v3857 = vpop.f32.mrf.mxu0
    %v3858 = vadd.f32 %v3769, %v3857
    %3859 = vmatmul.bf16.gmra.mxu0 %v1213
    %v3860 = vpop.f32.mrf.mxu0
    %v3861 = vadd.f32 %v3772, %v3860
    %v3862 = vpop.f32.mrf.mxu0
    %v3863 = vadd.f32 %v3774, %v3862
    %3864 = vmatmul.bf16.gmra.mxu0 %v1221
    %v3865 = vpop.f32.mrf.mxu0
    %v3866 = vadd.f32 %v3777, %v3865
    %v3867 = vpop.f32.mrf.mxu0
    %v3868 = vadd.f32 %v3779, %v3867
    %3869 = vmatmul.bf16.gmra.mxu0 %v1229
    %v3870 = vpop.f32.mrf.mxu0
    %v3871 = vadd.f32 %v3782, %v3870
    %v3872 = vpop.f32.mrf.mxu0
    %v3873 = vadd.f32 %v3784, %v3872
    %3874 = vmatmul.bf16.gmra.mxu0 %v1237
    %v3875 = vpop.f32.mrf.mxu0
    %v3876 = vadd.f32 %v3787, %v3875
    %v3877 = vpop.f32.mrf.mxu0
    %v3878 = vadd.f32 %v3789, %v3877
    %3879 = vmatmul.bf16.gmra.mxu0 %v1245
    %v3880 = vpop.f32.mrf.mxu0
    %v3881 = vadd.f32 %v3792, %v3880
    %v3882 = vpop.f32.mrf.mxu0
    %v3883 = vadd.f32 %v3794, %v3882
    %3884 = vmatmul.bf16.gmra.mxu0 %v1253
    %v3885 = vpop.f32.mrf.mxu0
    %v3886 = vadd.f32 %v3797, %v3885
    %v3887 = vpop.f32.mrf.mxu0
    %v3888 = vadd.f32 %v3799, %v3887
    %3889 = vmatmul.bf16.gmra.mxu0 %v1261
    %v3890 = vpop.f32.mrf.mxu0
    %v3891 = vadd.f32 %v3802, %v3890
    %v3892 = vpop.f32.mrf.mxu0
    %v3893 = vadd.f32 %v3804, %v3892
    %3894 = vmatmul.bf16.gmra.mxu0 %v1269
    %v3895 = vpop.f32.mrf.mxu0
    %v3896 = vadd.f32 %v3807, %v3895
    %v3897 = vpop.f32.mrf.mxu0
    %v3898 = vadd.f32 %v3809, %v3897
    %3899 = vmatmul.bf16.gmra.mxu0 %v1277
    %v3900 = vpop.f32.mrf.mxu0
    %v3901 = vadd.f32 %v3812, %v3900
    %v3902 = vpop.f32.mrf.mxu0
    %v3903 = vadd.f32 %v3814, %v3902
    %3904 = vmatmul.bf16.gmra.mxu0 %v1285
    %v3905 = vpop.f32.mrf.mxu0
    %v3906 = vadd.f32 %v3817, %v3905
    %v3907 = vpop.f32.mrf.mxu0
    %v3908 = vadd.f32 %v3819, %v3907
    %3909 = vmatmul.bf16.gmra.mxu0 %v1293
    %v3910 = vpop.f32.mrf.mxu0
    %v3911 = vadd.f32 %v3822, %v3910
    %v3912 = vpop.f32.mrf.mxu0
    %v3913 = vadd.f32 %v3824, %v3912
    %3914 = vmatmul.bf16.gmra.mxu0 %v1301
    %v3915 = vpop.f32.mrf.mxu0
    %v3916 = vadd.f32 %v3827, %v3915
    %v3917 = vpop.f32.mrf.mxu0
    %v3918 = vadd.f32 %v3829, %v3917
    %3919 = vdwg.mxu0
    %3920 = vmatpush.bf16.msra.mxu0 %v2497
    %3921 = vmatpush.bf16.msra.mxu0 %v2493
    %3922 = vmatpush.bf16.msra.mxu0 %v2489
    %3923 = vmatpush.bf16.msra.mxu0 %v2485
    %3924 = vmatpush.bf16.msra.mxu0 %v2481
    %3925 = vmatpush.bf16.msra.mxu0 %v2477
    %3926 = vmatpush.bf16.msra.mxu0 %v2473
    %3927 = vmatpush.bf16.msra.mxu0 %v2469
    %3928 = vmatmul.bf16.gmra.mxu0 %v1182
    %v3929 = vpop.f32.mrf.mxu0
    %v3930 = vadd.f32 %v3841, %v3929
    %v3931 = vpop.f32.mrf.mxu0
    %v3932 = vadd.f32 %v3843, %v3931
    %3933 = vmatmul.bf16.gmra.mxu0 %v1190
    %v3934 = vpop.f32.mrf.mxu0
    %v3935 = vadd.f32 %v3846, %v3934
    %v3936 = vpop.f32.mrf.mxu0
    %v3937 = vadd.f32 %v3848, %v3936
    %3938 = vmatmul.bf16.gmra.mxu0 %v1198
    %v3939 = vpop.f32.mrf.mxu0
    %v3940 = vadd.f32 %v3851, %v3939
    %v3941 = vpop.f32.mrf.mxu0
    %v3942 = vadd.f32 %v3853, %v3941
    %3943 = vmatmul.bf16.gmra.mxu0 %v1206
    %v3944 = vpop.f32.mrf.mxu0
    %v3945 = vadd.f32 %v3856, %v3944
    %v3946 = vpop.f32.mrf.mxu0
    %v3947 = vadd.f32 %v3858, %v3946
    %3948 = vmatmul.bf16.gmra.mxu0 %v1214
    %v3949 = vpop.f32.mrf.mxu0
    %v3950 = vadd.f32 %v3861, %v3949
    %v3951 = vpop.f32.mrf.mxu0
    %v3952 = vadd.f32 %v3863, %v3951
    %3953 = vmatmul.bf16.gmra.mxu0 %v1222
    %v3954 = vpop.f32.mrf.mxu0
    %v3955 = vadd.f32 %v3866, %v3954
    %v3956 = vpop.f32.mrf.mxu0
    %v3957 = vadd.f32 %v3868, %v3956
    %3958 = vmatmul.bf16.gmra.mxu0 %v1230
    %v3959 = vpop.f32.mrf.mxu0
    %v3960 = vadd.f32 %v3871, %v3959
    %v3961 = vpop.f32.mrf.mxu0
    %v3962 = vadd.f32 %v3873, %v3961
    %3963 = vmatmul.bf16.gmra.mxu0 %v1238
    %v3964 = vpop.f32.mrf.mxu0
    %v3965 = vadd.f32 %v3876, %v3964
    %v3966 = vpop.f32.mrf.mxu0
    %v3967 = vadd.f32 %v3878, %v3966
    %3968 = vmatmul.bf16.gmra.mxu0 %v1246
    %v3969 = vpop.f32.mrf.mxu0
    %v3970 = vadd.f32 %v3881, %v3969
    %v3971 = vpop.f32.mrf.mxu0
    %v3972 = vadd.f32 %v3883, %v3971
    %3973 = vmatmul.bf16.gmra.mxu0 %v1254
    %v3974 = vpop.f32.mrf.mxu0
    %v3975 = vadd.f32 %v3886, %v3974
    %v3976 = vpop.f32.mrf.mxu0
    %v3977 = vadd.f32 %v3888, %v3976
    %3978 = vmatmul.bf16.gmra.mxu0 %v1262
    %v3979 = vpop.f32.mrf.mxu0
    %v3980 = vadd.f32 %v3891, %v3979
    %v3981 = vpop.f32.mrf.mxu0
    %v3982 = vadd.f32 %v3893, %v3981
    %3983 = vmatmul.bf16.gmra.mxu0 %v1270
    %v3984 = vpop.f32.mrf.mxu0
    %v3985 = vadd.f32 %v3896, %v3984
    %v3986 = vpop.f32.mrf.mxu0
    %v3987 = vadd.f32 %v3898, %v3986
    %3988 = vmatmul.bf16.gmra.mxu0 %v1278
    %v3989 = vpop.f32.mrf.mxu0
    %v3990 = vadd.f32 %v3901, %v3989
    %v3991 = vpop.f32.mrf.mxu0
    %v3992 = vadd.f32 %v3903, %v3991
    %3993 = vmatmul.bf16.gmra.mxu0 %v1286
    %v3994 = vpop.f32.mrf.mxu0
    %v3995 = vadd.f32 %v3906, %v3994
    %v3996 = vpop.f32.mrf.mxu0
    %v3997 = vadd.f32 %v3908, %v3996
    %3998 = vmatmul.bf16.gmra.mxu0 %v1294
    %v3999 = vpop.f32.mrf.mxu0
    %v4000 = vadd.f32 %v3911, %v3999
    %v4001 = vpop.f32.mrf.mxu0
    %v4002 = vadd.f32 %v3913, %v4001
    %4003 = vmatmul.bf16.gmra.mxu0 %v1302
    %v4004 = vpop.f32.mrf.mxu0
    %v4005 = vadd.f32 %v3916, %v4004
    %v4006 = vpop.f32.mrf.mxu0
    %v4007 = vadd.f32 %v3918, %v4006
    %4008 = vdwg.mxu0
    %4009 = vmatpush.bf16.msra.mxu0 %v2529
    %4010 = vmatpush.bf16.msra.mxu0 %v2525
    %4011 = vmatpush.bf16.msra.mxu0 %v2521
    %4012 = vmatpush.bf16.msra.mxu0 %v2517
    %4013 = vmatpush.bf16.msra.mxu0 %v2513
    %4014 = vmatpush.bf16.msra.mxu0 %v2509
    %4015 = vmatpush.bf16.msra.mxu0 %v2505
    %4016 = vmatpush.bf16.msra.mxu0 %v2501
    %4017 = vmatmul.bf16.gmra.mxu0 %v1183
    %v4018 = vpop.f32.mrf.mxu0
    %v4019 = vadd.f32 %v3930, %v4018
    %v4020 = vpop.f32.mrf.mxu0
    %v4021 = vadd.f32 %v3932, %v4020
    %4022 = vmatmul.bf16.gmra.mxu0 %v1191
    %v4023 = vpop.f32.mrf.mxu0
    %v4024 = vadd.f32 %v3935, %v4023
    %v4025 = vpop.f32.mrf.mxu0
    %v4026 = vadd.f32 %v3937, %v4025
    %4027 = vmatmul.bf16.gmra.mxu0 %v1199
    %v4028 = vpop.f32.mrf.mxu0
    %v4029 = vadd.f32 %v3940, %v4028
    %v4030 = vpop.f32.mrf.mxu0
    %v4031 = vadd.f32 %v3942, %v4030
    %4032 = vmatmul.bf16.gmra.mxu0 %v1207
    %v4033 = vpop.f32.mrf.mxu0
    %v4034 = vadd.f32 %v3945, %v4033
    %v4035 = vpop.f32.mrf.mxu0
    %v4036 = vadd.f32 %v3947, %v4035
    %4037 = vmatmul.bf16.gmra.mxu0 %v1215
    %v4038 = vpop.f32.mrf.mxu0
    %v4039 = vadd.f32 %v3950, %v4038
    %v4040 = vpop.f32.mrf.mxu0
    %v4041 = vadd.f32 %v3952, %v4040
    %4042 = vmatmul.bf16.gmra.mxu0 %v1223
    %v4043 = vpop.f32.mrf.mxu0
    %v4044 = vadd.f32 %v3955, %v4043
    %v4045 = vpop.f32.mrf.mxu0
    %v4046 = vadd.f32 %v3957, %v4045
    %4047 = vmatmul.bf16.gmra.mxu0 %v1231
    %v4048 = vpop.f32.mrf.mxu0
    %v4049 = vadd.f32 %v3960, %v4048
    %v4050 = vpop.f32.mrf.mxu0
    %v4051 = vadd.f32 %v3962, %v4050
    %4052 = vmatmul.bf16.gmra.mxu0 %v1239
    %v4053 = vpop.f32.mrf.mxu0
    %v4054 = vadd.f32 %v3965, %v4053
    %v4055 = vpop.f32.mrf.mxu0
    %v4056 = vadd.f32 %v3967, %v4055
    %4057 = vmatmul.bf16.gmra.mxu0 %v1247
    %v4058 = vpop.f32.mrf.mxu0
    %v4059 = vadd.f32 %v3970, %v4058
    %v4060 = vpop.f32.mrf.mxu0
    %v4061 = vadd.f32 %v3972, %v4060
    %4062 = vmatmul.bf16.gmra.mxu0 %v1255
    %v4063 = vpop.f32.mrf.mxu0
    %v4064 = vadd.f32 %v3975, %v4063
    %v4065 = vpop.f32.mrf.mxu0
    %v4066 = vadd.f32 %v3977, %v4065
    %4067 = vmatmul.bf16.gmra.mxu0 %v1263
    %v4068 = vpop.f32.mrf.mxu0
    %v4069 = vadd.f32 %v3980, %v4068
    %v4070 = vpop.f32.mrf.mxu0
    %v4071 = vadd.f32 %v3982, %v4070
    %4072 = vmatmul.bf16.gmra.mxu0 %v1271
    %v4073 = vpop.f32.mrf.mxu0
    %v4074 = vadd.f32 %v3985, %v4073
    %v4075 = vpop.f32.mrf.mxu0
    %v4076 = vadd.f32 %v3987, %v4075
    %4077 = vmatmul.bf16.gmra.mxu0 %v1279
    %v4078 = vpop.f32.mrf.mxu0
    %v4079 = vadd.f32 %v3990, %v4078
    %v4080 = vpop.f32.mrf.mxu0
    %v4081 = vadd.f32 %v3992, %v4080
    %4082 = vmatmul.bf16.gmra.mxu0 %v1287
    %v4083 = vpop.f32.mrf.mxu0
    %v4084 = vadd.f32 %v3995, %v4083
    %v4085 = vpop.f32.mrf.mxu0
    %v4086 = vadd.f32 %v3997, %v4085
    %4087 = vmatmul.bf16.gmra.mxu0 %v1295
    %v4088 = vpop.f32.mrf.mxu0
    %v4089 = vadd.f32 %v4000, %v4088
    %v4090 = vpop.f32.mrf.mxu0
    %v4091 = vadd.f32 %v4002, %v4090
    %4092 = vmatmul.bf16.gmra.mxu0 %v1303
    %v4093 = vpop.f32.mrf.mxu0
    %v4094 = vadd.f32 %v4005, %v4093
    %v4095 = vpop.f32.mrf.mxu0
    %v4096 = vadd.f32 %v4007, %v4095
    %4097 = vdwg.mxu0
    %4098 = vmatpush.bf16.msra.mxu0 %v2561
    %4099 = vmatpush.bf16.msra.mxu0 %v2557
    %4100 = vmatpush.bf16.msra.mxu0 %v2553
    %4101 = vmatpush.bf16.msra.mxu0 %v2549
    %4102 = vmatpush.bf16.msra.mxu0 %v2545
    %4103 = vmatpush.bf16.msra.mxu0 %v2541
    %4104 = vmatpush.bf16.msra.mxu0 %v2537
    %4105 = vmatpush.bf16.msra.mxu0 %v2533
    %4106 = vmatmul.bf16.gmra.mxu0 %v1184
    %v4107 = vpop.f32.mrf.mxu0
    %v4108 = vadd.f32 %v4019, %v4107
    %v4109 = vpop.f32.mrf.mxu0
    %v4110 = vadd.f32 %v4021, %v4109
    %4111 = vmatmul.bf16.gmra.mxu0 %v1192
    %v4112 = vpop.f32.mrf.mxu0
    %v4113 = vadd.f32 %v4024, %v4112
    %v4114 = vpop.f32.mrf.mxu0
    %v4115 = vadd.f32 %v4026, %v4114
    %4116 = vmatmul.bf16.gmra.mxu0 %v1200
    %v4117 = vpop.f32.mrf.mxu0
    %v4118 = vadd.f32 %v4029, %v4117
    %v4119 = vpop.f32.mrf.mxu0
    %v4120 = vadd.f32 %v4031, %v4119
    %4121 = vmatmul.bf16.gmra.mxu0 %v1208
    %v4122 = vpop.f32.mrf.mxu0
    %v4123 = vadd.f32 %v4034, %v4122
    %v4124 = vpop.f32.mrf.mxu0
    %v4125 = vadd.f32 %v4036, %v4124
    %4126 = vmatmul.bf16.gmra.mxu0 %v1216
    %v4127 = vpop.f32.mrf.mxu0
    %v4128 = vadd.f32 %v4039, %v4127
    %v4129 = vpop.f32.mrf.mxu0
    %v4130 = vadd.f32 %v4041, %v4129
    %4131 = vmatmul.bf16.gmra.mxu0 %v1224
    %v4132 = vpop.f32.mrf.mxu0
    %v4133 = vadd.f32 %v4044, %v4132
    %v4134 = vpop.f32.mrf.mxu0
    %v4135 = vadd.f32 %v4046, %v4134
    %4136 = vmatmul.bf16.gmra.mxu0 %v1232
    %v4137 = vpop.f32.mrf.mxu0
    %v4138 = vadd.f32 %v4049, %v4137
    %v4139 = vpop.f32.mrf.mxu0
    %v4140 = vadd.f32 %v4051, %v4139
    %4141 = vmatmul.bf16.gmra.mxu0 %v1240
    %v4142 = vpop.f32.mrf.mxu0
    %v4143 = vadd.f32 %v4054, %v4142
    %v4144 = vpop.f32.mrf.mxu0
    %v4145 = vadd.f32 %v4056, %v4144
    %4146 = vmatmul.bf16.gmra.mxu0 %v1248
    %v4147 = vpop.f32.mrf.mxu0
    %v4148 = vadd.f32 %v4059, %v4147
    %v4149 = vpop.f32.mrf.mxu0
    %v4150 = vadd.f32 %v4061, %v4149
    %4151 = vmatmul.bf16.gmra.mxu0 %v1256
    %v4152 = vpop.f32.mrf.mxu0
    %v4153 = vadd.f32 %v4064, %v4152
    %v4154 = vpop.f32.mrf.mxu0
    %v4155 = vadd.f32 %v4066, %v4154
    %4156 = vmatmul.bf16.gmra.mxu0 %v1264
    %v4157 = vpop.f32.mrf.mxu0
    %v4158 = vadd.f32 %v4069, %v4157
    %v4159 = vpop.f32.mrf.mxu0
    %v4160 = vadd.f32 %v4071, %v4159
    %4161 = vmatmul.bf16.gmra.mxu0 %v1272
    %v4162 = vpop.f32.mrf.mxu0
    %v4163 = vadd.f32 %v4074, %v4162
    %v4164 = vpop.f32.mrf.mxu0
    %v4165 = vadd.f32 %v4076, %v4164
    %4166 = vmatmul.bf16.gmra.mxu0 %v1280
    %v4167 = vpop.f32.mrf.mxu0
    %v4168 = vadd.f32 %v4079, %v4167
    %v4169 = vpop.f32.mrf.mxu0
    %v4170 = vadd.f32 %v4081, %v4169
    %4171 = vmatmul.bf16.gmra.mxu0 %v1288
    %v4172 = vpop.f32.mrf.mxu0
    %v4173 = vadd.f32 %v4084, %v4172
    %v4174 = vpop.f32.mrf.mxu0
    %v4175 = vadd.f32 %v4086, %v4174
    %4176 = vmatmul.bf16.gmra.mxu0 %v1296
    %v4177 = vpop.f32.mrf.mxu0
    %v4178 = vadd.f32 %v4089, %v4177
    %v4179 = vpop.f32.mrf.mxu0
    %v4180 = vadd.f32 %v4091, %v4179
    %4181 = vmatmul.bf16.gmra.mxu0 %v1304
    %v4182 = vpop.f32.mrf.mxu0
    %v4183 = vadd.f32 %v4094, %v4182
    %v4184 = vpop.f32.mrf.mxu0
    %v4185 = vadd.f32 %v4096, %v4184
    %4186 = vdwg.mxu0
    %4187 = vmatpush.bf16.msra.mxu0 %v2593
    %4188 = vmatpush.bf16.msra.mxu0 %v2589
    %4189 = vmatpush.bf16.msra.mxu0 %v2585
    %4190 = vmatpush.bf16.msra.mxu0 %v2581
    %4191 = vmatpush.bf16.msra.mxu0 %v2577
    %4192 = vmatpush.bf16.msra.mxu0 %v2573
    %4193 = vmatpush.bf16.msra.mxu0 %v2569
    %4194 = vmatpush.bf16.msra.mxu0 %v2565
    %4195 = vmatmul.bf16.gmra.mxu0 %v1185
    %v4196 = vpop.f32.mrf.mxu0
    %v4197 = vadd.f32 %v4108, %v4196
    %v4198 = vpop.f32.mrf.mxu0
    %v4199 = vadd.f32 %v4110, %v4198
    %4200 = vmatmul.bf16.gmra.mxu0 %v1193
    %v4201 = vpop.f32.mrf.mxu0
    %v4202 = vadd.f32 %v4113, %v4201
    %v4203 = vpop.f32.mrf.mxu0
    %v4204 = vadd.f32 %v4115, %v4203
    %4205 = vmatmul.bf16.gmra.mxu0 %v1201
    %v4206 = vpop.f32.mrf.mxu0
    %v4207 = vadd.f32 %v4118, %v4206
    %v4208 = vpop.f32.mrf.mxu0
    %v4209 = vadd.f32 %v4120, %v4208
    %4210 = vmatmul.bf16.gmra.mxu0 %v1209
    %v4211 = vpop.f32.mrf.mxu0
    %v4212 = vadd.f32 %v4123, %v4211
    %v4213 = vpop.f32.mrf.mxu0
    %v4214 = vadd.f32 %v4125, %v4213
    %4215 = vmatmul.bf16.gmra.mxu0 %v1217
    %v4216 = vpop.f32.mrf.mxu0
    %v4217 = vadd.f32 %v4128, %v4216
    %v4218 = vpop.f32.mrf.mxu0
    %v4219 = vadd.f32 %v4130, %v4218
    %4220 = vmatmul.bf16.gmra.mxu0 %v1225
    %v4221 = vpop.f32.mrf.mxu0
    %v4222 = vadd.f32 %v4133, %v4221
    %v4223 = vpop.f32.mrf.mxu0
    %v4224 = vadd.f32 %v4135, %v4223
    %4225 = vmatmul.bf16.gmra.mxu0 %v1233
    %v4226 = vpop.f32.mrf.mxu0
    %v4227 = vadd.f32 %v4138, %v4226
    %v4228 = vpop.f32.mrf.mxu0
    %v4229 = vadd.f32 %v4140, %v4228
    %4230 = vmatmul.bf16.gmra.mxu0 %v1241
    %v4231 = vpop.f32.mrf.mxu0
    %v4232 = vadd.f32 %v4143, %v4231
    %v4233 = vpop.f32.mrf.mxu0
    %v4234 = vadd.f32 %v4145, %v4233
    %4235 = vmatmul.bf16.gmra.mxu0 %v1249
    %v4236 = vpop.f32.mrf.mxu0
    %v4237 = vadd.f32 %v4148, %v4236
    %v4238 = vpop.f32.mrf.mxu0
    %v4239 = vadd.f32 %v4150, %v4238
    %4240 = vmatmul.bf16.gmra.mxu0 %v1257
    %v4241 = vpop.f32.mrf.mxu0
    %v4242 = vadd.f32 %v4153, %v4241
    %v4243 = vpop.f32.mrf.mxu0
    %v4244 = vadd.f32 %v4155, %v4243
    %4245 = vmatmul.bf16.gmra.mxu0 %v1265
    %v4246 = vpop.f32.mrf.mxu0
    %v4247 = vadd.f32 %v4158, %v4246
    %v4248 = vpop.f32.mrf.mxu0
    %v4249 = vadd.f32 %v4160, %v4248
    %4250 = vmatmul.bf16.gmra.mxu0 %v1273
    %v4251 = vpop.f32.mrf.mxu0
    %v4252 = vadd.f32 %v4163, %v4251
    %v4253 = vpop.f32.mrf.mxu0
    %v4254 = vadd.f32 %v4165, %v4253
    %4255 = vmatmul.bf16.gmra.mxu0 %v1281
    %v4256 = vpop.f32.mrf.mxu0
    %v4257 = vadd.f32 %v4168, %v4256
    %v4258 = vpop.f32.mrf.mxu0
    %v4259 = vadd.f32 %v4170, %v4258
    %4260 = vmatmul.bf16.gmra.mxu0 %v1289
    %v4261 = vpop.f32.mrf.mxu0
    %v4262 = vadd.f32 %v4173, %v4261
    %v4263 = vpop.f32.mrf.mxu0
    %v4264 = vadd.f32 %v4175, %v4263
    %4265 = vmatmul.bf16.gmra.mxu0 %v1297
    %v4266 = vpop.f32.mrf.mxu0
    %v4267 = vadd.f32 %v4178, %v4266
    %v4268 = vpop.f32.mrf.mxu0
    %v4269 = vadd.f32 %v4180, %v4268
    %4270 = vmatmul.bf16.gmra.mxu0 %v1305
    %v4271 = vpop.f32.mrf.mxu0
    %v4272 = vadd.f32 %v4183, %v4271
    %v4273 = vpop.f32.mrf.mxu0
    %v4274 = vadd.f32 %v4185, %v4273
    %4275 = vdwg.mxu0
    %4276 = vmatpush.bf16.msra.mxu0 %v2370
    %4277 = vmatpush.bf16.msra.mxu0 %v2366
    %4278 = vmatpush.bf16.msra.mxu0 %v2362
    %4279 = vmatpush.bf16.msra.mxu0 %v2358
    %4280 = vmatpush.bf16.msra.mxu0 %v2354
    %4281 = vmatpush.bf16.msra.mxu0 %v2350
    %4282 = vmatpush.bf16.msra.mxu0 %v2346
    %4283 = vmatpush.bf16.msra.mxu0 %v2342
    %4284 = vmatmul.bf16.gmra.mxu0 %v1178
    %v4285 = vpop.f32.mrf.mxu0
    %v4286 = vadd.f32 %v1566, %v4285
    %v4287 = vpop.f32.mrf.mxu0
    %v4288 = vadd.f32 %v1566, %v4287
    %4289 = vmatmul.bf16.gmra.mxu0 %v1186
    %v4290 = vpop.f32.mrf.mxu0
    %v4291 = vadd.f32 %v1566, %v4290
    %v4292 = vpop.f32.mrf.mxu0
    %v4293 = vadd.f32 %v1566, %v4292
    %4294 = vmatmul.bf16.gmra.mxu0 %v1194
    %v4295 = vpop.f32.mrf.mxu0
    %v4296 = vadd.f32 %v1566, %v4295
    %v4297 = vpop.f32.mrf.mxu0
    %v4298 = vadd.f32 %v1566, %v4297
    %4299 = vmatmul.bf16.gmra.mxu0 %v1202
    %v4300 = vpop.f32.mrf.mxu0
    %v4301 = vadd.f32 %v1566, %v4300
    %v4302 = vpop.f32.mrf.mxu0
    %v4303 = vadd.f32 %v1566, %v4302
    %4304 = vmatmul.bf16.gmra.mxu0 %v1210
    %v4305 = vpop.f32.mrf.mxu0
    %v4306 = vadd.f32 %v1566, %v4305
    %v4307 = vpop.f32.mrf.mxu0
    %v4308 = vadd.f32 %v1566, %v4307
    %4309 = vmatmul.bf16.gmra.mxu0 %v1218
    %v4310 = vpop.f32.mrf.mxu0
    %v4311 = vadd.f32 %v1566, %v4310
    %v4312 = vpop.f32.mrf.mxu0
    %v4313 = vadd.f32 %v1566, %v4312
    %4314 = vmatmul.bf16.gmra.mxu0 %v1226
    %v4315 = vpop.f32.mrf.mxu0
    %v4316 = vadd.f32 %v1566, %v4315
    %v4317 = vpop.f32.mrf.mxu0
    %v4318 = vadd.f32 %v1566, %v4317
    %4319 = vmatmul.bf16.gmra.mxu0 %v1234
    %v4320 = vpop.f32.mrf.mxu0
    %v4321 = vadd.f32 %v1566, %v4320
    %v4322 = vpop.f32.mrf.mxu0
    %v4323 = vadd.f32 %v1566, %v4322
    %4324 = vmatmul.bf16.gmra.mxu0 %v1242
    %v4325 = vpop.f32.mrf.mxu0
    %v4326 = vadd.f32 %v1566, %v4325
    %v4327 = vpop.f32.mrf.mxu0
    %v4328 = vadd.f32 %v1566, %v4327
    %4329 = vmatmul.bf16.gmra.mxu0 %v1250
    %v4330 = vpop.f32.mrf.mxu0
    %v4331 = vadd.f32 %v1566, %v4330
    %v4332 = vpop.f32.mrf.mxu0
    %v4333 = vadd.f32 %v1566, %v4332
    %4334 = vmatmul.bf16.gmra.mxu0 %v1258
    %v4335 = vpop.f32.mrf.mxu0
    %v4336 = vadd.f32 %v1566, %v4335
    %v4337 = vpop.f32.mrf.mxu0
    %v4338 = vadd.f32 %v1566, %v4337
    %4339 = vmatmul.bf16.gmra.mxu0 %v1266
    %v4340 = vpop.f32.mrf.mxu0
    %v4341 = vadd.f32 %v1566, %v4340
    %v4342 = vpop.f32.mrf.mxu0
    %v4343 = vadd.f32 %v1566, %v4342
    %4344 = vmatmul.bf16.gmra.mxu0 %v1274
    %v4345 = vpop.f32.mrf.mxu0
    %v4346 = vadd.f32 %v1566, %v4345
    %v4347 = vpop.f32.mrf.mxu0
    %v4348 = vadd.f32 %v1566, %v4347
    %4349 = vmatmul.bf16.gmra.mxu0 %v1282
    %v4350 = vpop.f32.mrf.mxu0
    %v4351 = vadd.f32 %v1566, %v4350
    %v4352 = vpop.f32.mrf.mxu0
    %v4353 = vadd.f32 %v1566, %v4352
    %4354 = vmatmul.bf16.gmra.mxu0 %v1290
    %v4355 = vpop.f32.mrf.mxu0
    %v4356 = vadd.f32 %v1566, %v4355
    %v4357 = vpop.f32.mrf.mxu0
    %v4358 = vadd.f32 %v1566, %v4357
    %4359 = vmatmul.bf16.gmra.mxu0 %v1298
    %v4360 = vpop.f32.mrf.mxu0
    %v4361 = vadd.f32 %v1566, %v4360
    %v4362 = vpop.f32.mrf.mxu0
    %v4363 = vadd.f32 %v1566, %v4362
    %4364 = vdwg.mxu0
    %4365 = vmatpush.bf16.msra.mxu0 %v2402
    %4366 = vmatpush.bf16.msra.mxu0 %v2398
    %4367 = vmatpush.bf16.msra.mxu0 %v2394
    %4368 = vmatpush.bf16.msra.mxu0 %v2390
    %4369 = vmatpush.bf16.msra.mxu0 %v2386
    %4370 = vmatpush.bf16.msra.mxu0 %v2382
    %4371 = vmatpush.bf16.msra.mxu0 %v2378
    %4372 = vmatpush.bf16.msra.mxu0 %v2374
    %4373 = vmatmul.bf16.gmra.mxu0 %v1179
    %v4374 = vpop.f32.mrf.mxu0
    %v4375 = vadd.f32 %v4286, %v4374
    %v4376 = vpop.f32.mrf.mxu0
    %v4377 = vadd.f32 %v4288, %v4376
    %4378 = vmatmul.bf16.gmra.mxu0 %v1187
    %v4379 = vpop.f32.mrf.mxu0
    %v4380 = vadd.f32 %v4291, %v4379
    %v4381 = vpop.f32.mrf.mxu0
    %v4382 = vadd.f32 %v4293, %v4381
    %4383 = vmatmul.bf16.gmra.mxu0 %v1195
    %v4384 = vpop.f32.mrf.mxu0
    %v4385 = vadd.f32 %v4296, %v4384
    %v4386 = vpop.f32.mrf.mxu0
    %v4387 = vadd.f32 %v4298, %v4386
    %4388 = vmatmul.bf16.gmra.mxu0 %v1203
    %v4389 = vpop.f32.mrf.mxu0
    %v4390 = vadd.f32 %v4301, %v4389
    %v4391 = vpop.f32.mrf.mxu0
    %v4392 = vadd.f32 %v4303, %v4391
    %4393 = vmatmul.bf16.gmra.mxu0 %v1211
    %v4394 = vpop.f32.mrf.mxu0
    %v4395 = vadd.f32 %v4306, %v4394
    %v4396 = vpop.f32.mrf.mxu0
    %v4397 = vadd.f32 %v4308, %v4396
    %4398 = vmatmul.bf16.gmra.mxu0 %v1219
    %v4399 = vpop.f32.mrf.mxu0
    %v4400 = vadd.f32 %v4311, %v4399
    %v4401 = vpop.f32.mrf.mxu0
    %v4402 = vadd.f32 %v4313, %v4401
    %4403 = vmatmul.bf16.gmra.mxu0 %v1227
    %v4404 = vpop.f32.mrf.mxu0
    %v4405 = vadd.f32 %v4316, %v4404
    %v4406 = vpop.f32.mrf.mxu0
    %v4407 = vadd.f32 %v4318, %v4406
    %4408 = vmatmul.bf16.gmra.mxu0 %v1235
    %v4409 = vpop.f32.mrf.mxu0
    %v4410 = vadd.f32 %v4321, %v4409
    %v4411 = vpop.f32.mrf.mxu0
    %v4412 = vadd.f32 %v4323, %v4411
    %4413 = vmatmul.bf16.gmra.mxu0 %v1243
    %v4414 = vpop.f32.mrf.mxu0
    %v4415 = vadd.f32 %v4326, %v4414
    %v4416 = vpop.f32.mrf.mxu0
    %v4417 = vadd.f32 %v4328, %v4416
    %4418 = vmatmul.bf16.gmra.mxu0 %v1251
    %v4419 = vpop.f32.mrf.mxu0
    %v4420 = vadd.f32 %v4331, %v4419
    %v4421 = vpop.f32.mrf.mxu0
    %v4422 = vadd.f32 %v4333, %v4421
    %4423 = vmatmul.bf16.gmra.mxu0 %v1259
    %v4424 = vpop.f32.mrf.mxu0
    %v4425 = vadd.f32 %v4336, %v4424
    %v4426 = vpop.f32.mrf.mxu0
    %v4427 = vadd.f32 %v4338, %v4426
    %4428 = vmatmul.bf16.gmra.mxu0 %v1267
    %v4429 = vpop.f32.mrf.mxu0
    %v4430 = vadd.f32 %v4341, %v4429
    %v4431 = vpop.f32.mrf.mxu0
    %v4432 = vadd.f32 %v4343, %v4431
    %4433 = vmatmul.bf16.gmra.mxu0 %v1275
    %v4434 = vpop.f32.mrf.mxu0
    %v4435 = vadd.f32 %v4346, %v4434
    %v4436 = vpop.f32.mrf.mxu0
    %v4437 = vadd.f32 %v4348, %v4436
    %4438 = vmatmul.bf16.gmra.mxu0 %v1283
    %v4439 = vpop.f32.mrf.mxu0
    %v4440 = vadd.f32 %v4351, %v4439
    %v4441 = vpop.f32.mrf.mxu0
    %v4442 = vadd.f32 %v4353, %v4441
    %4443 = vmatmul.bf16.gmra.mxu0 %v1291
    %v4444 = vpop.f32.mrf.mxu0
    %v4445 = vadd.f32 %v4356, %v4444
    %v4446 = vpop.f32.mrf.mxu0
    %v4447 = vadd.f32 %v4358, %v4446
    %4448 = vmatmul.bf16.gmra.mxu0 %v1299
    %v4449 = vpop.f32.mrf.mxu0
    %v4450 = vadd.f32 %v4361, %v4449
    %v4451 = vpop.f32.mrf.mxu0
    %v4452 = vadd.f32 %v4363, %v4451
    %4453 = vdwg.mxu0
    %4454 = vmatpush.bf16.msra.mxu0 %v2434
    %4455 = vmatpush.bf16.msra.mxu0 %v2430
    %4456 = vmatpush.bf16.msra.mxu0 %v2426
    %4457 = vmatpush.bf16.msra.mxu0 %v2422
    %4458 = vmatpush.bf16.msra.mxu0 %v2418
    %4459 = vmatpush.bf16.msra.mxu0 %v2414
    %4460 = vmatpush.bf16.msra.mxu0 %v2410
    %4461 = vmatpush.bf16.msra.mxu0 %v2406
    %4462 = vmatmul.bf16.gmra.mxu0 %v1180
    %v4463 = vpop.f32.mrf.mxu0
    %v4464 = vadd.f32 %v4375, %v4463
    %v4465 = vpop.f32.mrf.mxu0
    %v4466 = vadd.f32 %v4377, %v4465
    %4467 = vmatmul.bf16.gmra.mxu0 %v1188
    %v4468 = vpop.f32.mrf.mxu0
    %v4469 = vadd.f32 %v4380, %v4468
    %v4470 = vpop.f32.mrf.mxu0
    %v4471 = vadd.f32 %v4382, %v4470
    %4472 = vmatmul.bf16.gmra.mxu0 %v1196
    %v4473 = vpop.f32.mrf.mxu0
    %v4474 = vadd.f32 %v4385, %v4473
    %v4475 = vpop.f32.mrf.mxu0
    %v4476 = vadd.f32 %v4387, %v4475
    %4477 = vmatmul.bf16.gmra.mxu0 %v1204
    %v4478 = vpop.f32.mrf.mxu0
    %v4479 = vadd.f32 %v4390, %v4478
    %v4480 = vpop.f32.mrf.mxu0
    %v4481 = vadd.f32 %v4392, %v4480
    %4482 = vmatmul.bf16.gmra.mxu0 %v1212
    %v4483 = vpop.f32.mrf.mxu0
    %v4484 = vadd.f32 %v4395, %v4483
    %v4485 = vpop.f32.mrf.mxu0
    %v4486 = vadd.f32 %v4397, %v4485
    %4487 = vmatmul.bf16.gmra.mxu0 %v1220
    %v4488 = vpop.f32.mrf.mxu0
    %v4489 = vadd.f32 %v4400, %v4488
    %v4490 = vpop.f32.mrf.mxu0
    %v4491 = vadd.f32 %v4402, %v4490
    %4492 = vmatmul.bf16.gmra.mxu0 %v1228
    %v4493 = vpop.f32.mrf.mxu0
    %v4494 = vadd.f32 %v4405, %v4493
    %v4495 = vpop.f32.mrf.mxu0
    %v4496 = vadd.f32 %v4407, %v4495
    %4497 = vmatmul.bf16.gmra.mxu0 %v1236
    %v4498 = vpop.f32.mrf.mxu0
    %v4499 = vadd.f32 %v4410, %v4498
    %v4500 = vpop.f32.mrf.mxu0
    %v4501 = vadd.f32 %v4412, %v4500
    %4502 = vmatmul.bf16.gmra.mxu0 %v1244
    %v4503 = vpop.f32.mrf.mxu0
    %v4504 = vadd.f32 %v4415, %v4503
    %v4505 = vpop.f32.mrf.mxu0
    %v4506 = vadd.f32 %v4417, %v4505
    %4507 = vmatmul.bf16.gmra.mxu0 %v1252
    %v4508 = vpop.f32.mrf.mxu0
    %v4509 = vadd.f32 %v4420, %v4508
    %v4510 = vpop.f32.mrf.mxu0
    %v4511 = vadd.f32 %v4422, %v4510
    %4512 = vmatmul.bf16.gmra.mxu0 %v1260
    %v4513 = vpop.f32.mrf.mxu0
    %v4514 = vadd.f32 %v4425, %v4513
    %v4515 = vpop.f32.mrf.mxu0
    %v4516 = vadd.f32 %v4427, %v4515
    %4517 = vmatmul.bf16.gmra.mxu0 %v1268
    %v4518 = vpop.f32.mrf.mxu0
    %v4519 = vadd.f32 %v4430, %v4518
    %v4520 = vpop.f32.mrf.mxu0
    %v4521 = vadd.f32 %v4432, %v4520
    %4522 = vmatmul.bf16.gmra.mxu0 %v1276
    %v4523 = vpop.f32.mrf.mxu0
    %v4524 = vadd.f32 %v4435, %v4523
    %v4525 = vpop.f32.mrf.mxu0
    %v4526 = vadd.f32 %v4437, %v4525
    %4527 = vmatmul.bf16.gmra.mxu0 %v1284
    %v4528 = vpop.f32.mrf.mxu0
    %v4529 = vadd.f32 %v4440, %v4528
    %v4530 = vpop.f32.mrf.mxu0
    %v4531 = vadd.f32 %v4442, %v4530
    %4532 = vmatmul.bf16.gmra.mxu0 %v1292
    %v4533 = vpop.f32.mrf.mxu0
    %v4534 = vadd.f32 %v4445, %v4533
    %v4535 = vpop.f32.mrf.mxu0
    %v4536 = vadd.f32 %v4447, %v4535
    %4537 = vmatmul.bf16.gmra.mxu0 %v1300
    %v4538 = vpop.f32.mrf.mxu0
    %v4539 = vadd.f32 %v4450, %v4538
    %v4540 = vpop.f32.mrf.mxu0
    %v4541 = vadd.f32 %v4452, %v4540
    %4542 = vdwg.mxu0
    %4543 = vmatpush.bf16.msra.mxu0 %v2466
    %4544 = vmatpush.bf16.msra.mxu0 %v2462
    %4545 = vmatpush.bf16.msra.mxu0 %v2458
    %4546 = vmatpush.bf16.msra.mxu0 %v2454
    %4547 = vmatpush.bf16.msra.mxu0 %v2450
    %4548 = vmatpush.bf16.msra.mxu0 %v2446
    %4549 = vmatpush.bf16.msra.mxu0 %v2442
    %4550 = vmatpush.bf16.msra.mxu0 %v2438
    %4551 = vmatmul.bf16.gmra.mxu0 %v1181
    %v4552 = vpop.f32.mrf.mxu0
    %v4553 = vadd.f32 %v4464, %v4552
    %v4554 = vpop.f32.mrf.mxu0
    %v4555 = vadd.f32 %v4466, %v4554
    %4556 = vmatmul.bf16.gmra.mxu0 %v1189
    %v4557 = vpop.f32.mrf.mxu0
    %v4558 = vadd.f32 %v4469, %v4557
    %v4559 = vpop.f32.mrf.mxu0
    %v4560 = vadd.f32 %v4471, %v4559
    %4561 = vmatmul.bf16.gmra.mxu0 %v1197
    %v4562 = vpop.f32.mrf.mxu0
    %v4563 = vadd.f32 %v4474, %v4562
    %v4564 = vpop.f32.mrf.mxu0
    %v4565 = vadd.f32 %v4476, %v4564
    %4566 = vmatmul.bf16.gmra.mxu0 %v1205
    %v4567 = vpop.f32.mrf.mxu0
    %v4568 = vadd.f32 %v4479, %v4567
    %v4569 = vpop.f32.mrf.mxu0
    %v4570 = vadd.f32 %v4481, %v4569
    %4571 = vmatmul.bf16.gmra.mxu0 %v1213
    %v4572 = vpop.f32.mrf.mxu0
    %v4573 = vadd.f32 %v4484, %v4572
    %v4574 = vpop.f32.mrf.mxu0
    %v4575 = vadd.f32 %v4486, %v4574
    %4576 = vmatmul.bf16.gmra.mxu0 %v1221
    %v4577 = vpop.f32.mrf.mxu0
    %v4578 = vadd.f32 %v4489, %v4577
    %v4579 = vpop.f32.mrf.mxu0
    %v4580 = vadd.f32 %v4491, %v4579
    %4581 = vmatmul.bf16.gmra.mxu0 %v1229
    %v4582 = vpop.f32.mrf.mxu0
    %v4583 = vadd.f32 %v4494, %v4582
    %v4584 = vpop.f32.mrf.mxu0
    %v4585 = vadd.f32 %v4496, %v4584
    %4586 = vmatmul.bf16.gmra.mxu0 %v1237
    %v4587 = vpop.f32.mrf.mxu0
    %v4588 = vadd.f32 %v4499, %v4587
    %v4589 = vpop.f32.mrf.mxu0
    %v4590 = vadd.f32 %v4501, %v4589
    %4591 = vmatmul.bf16.gmra.mxu0 %v1245
    %v4592 = vpop.f32.mrf.mxu0
    %v4593 = vadd.f32 %v4504, %v4592
    %v4594 = vpop.f32.mrf.mxu0
    %v4595 = vadd.f32 %v4506, %v4594
    %4596 = vmatmul.bf16.gmra.mxu0 %v1253
    %v4597 = vpop.f32.mrf.mxu0
    %v4598 = vadd.f32 %v4509, %v4597
    %v4599 = vpop.f32.mrf.mxu0
    %v4600 = vadd.f32 %v4511, %v4599
    %4601 = vmatmul.bf16.gmra.mxu0 %v1261
    %v4602 = vpop.f32.mrf.mxu0
    %v4603 = vadd.f32 %v4514, %v4602
    %v4604 = vpop.f32.mrf.mxu0
    %v4605 = vadd.f32 %v4516, %v4604
    %4606 = vmatmul.bf16.gmra.mxu0 %v1269
    %v4607 = vpop.f32.mrf.mxu0
    %v4608 = vadd.f32 %v4519, %v4607
    %v4609 = vpop.f32.mrf.mxu0
    %v4610 = vadd.f32 %v4521, %v4609
    %4611 = vmatmul.bf16.gmra.mxu0 %v1277
    %v4612 = vpop.f32.mrf.mxu0
    %v4613 = vadd.f32 %v4524, %v4612
    %v4614 = vpop.f32.mrf.mxu0
    %v4615 = vadd.f32 %v4526, %v4614
    %4616 = vmatmul.bf16.gmra.mxu0 %v1285
    %v4617 = vpop.f32.mrf.mxu0
    %v4618 = vadd.f32 %v4529, %v4617
    %v4619 = vpop.f32.mrf.mxu0
    %v4620 = vadd.f32 %v4531, %v4619
    %4621 = vmatmul.bf16.gmra.mxu0 %v1293
    %v4622 = vpop.f32.mrf.mxu0
    %v4623 = vadd.f32 %v4534, %v4622
    %v4624 = vpop.f32.mrf.mxu0
    %v4625 = vadd.f32 %v4536, %v4624
    %4626 = vmatmul.bf16.gmra.mxu0 %v1301
    %v4627 = vpop.f32.mrf.mxu0
    %v4628 = vadd.f32 %v4539, %v4627
    %v4629 = vpop.f32.mrf.mxu0
    %v4630 = vadd.f32 %v4541, %v4629
    %4631 = vdwg.mxu0
    %4632 = vmatpush.bf16.msra.mxu0 %v2498
    %4633 = vmatpush.bf16.msra.mxu0 %v2494
    %4634 = vmatpush.bf16.msra.mxu0 %v2490
    %4635 = vmatpush.bf16.msra.mxu0 %v2486
    %4636 = vmatpush.bf16.msra.mxu0 %v2482
    %4637 = vmatpush.bf16.msra.mxu0 %v2478
    %4638 = vmatpush.bf16.msra.mxu0 %v2474
    %4639 = vmatpush.bf16.msra.mxu0 %v2470
    %4640 = vmatmul.bf16.gmra.mxu0 %v1182
    %v4641 = vpop.f32.mrf.mxu0
    %v4642 = vadd.f32 %v4553, %v4641
    %v4643 = vpop.f32.mrf.mxu0
    %v4644 = vadd.f32 %v4555, %v4643
    %4645 = vmatmul.bf16.gmra.mxu0 %v1190
    %v4646 = vpop.f32.mrf.mxu0
    %v4647 = vadd.f32 %v4558, %v4646
    %v4648 = vpop.f32.mrf.mxu0
    %v4649 = vadd.f32 %v4560, %v4648
    %4650 = vmatmul.bf16.gmra.mxu0 %v1198
    %v4651 = vpop.f32.mrf.mxu0
    %v4652 = vadd.f32 %v4563, %v4651
    %v4653 = vpop.f32.mrf.mxu0
    %v4654 = vadd.f32 %v4565, %v4653
    %4655 = vmatmul.bf16.gmra.mxu0 %v1206
    %v4656 = vpop.f32.mrf.mxu0
    %v4657 = vadd.f32 %v4568, %v4656
    %v4658 = vpop.f32.mrf.mxu0
    %v4659 = vadd.f32 %v4570, %v4658
    %4660 = vmatmul.bf16.gmra.mxu0 %v1214
    %v4661 = vpop.f32.mrf.mxu0
    %v4662 = vadd.f32 %v4573, %v4661
    %v4663 = vpop.f32.mrf.mxu0
    %v4664 = vadd.f32 %v4575, %v4663
    %4665 = vmatmul.bf16.gmra.mxu0 %v1222
    %v4666 = vpop.f32.mrf.mxu0
    %v4667 = vadd.f32 %v4578, %v4666
    %v4668 = vpop.f32.mrf.mxu0
    %v4669 = vadd.f32 %v4580, %v4668
    %4670 = vmatmul.bf16.gmra.mxu0 %v1230
    %v4671 = vpop.f32.mrf.mxu0
    %v4672 = vadd.f32 %v4583, %v4671
    %v4673 = vpop.f32.mrf.mxu0
    %v4674 = vadd.f32 %v4585, %v4673
    %4675 = vmatmul.bf16.gmra.mxu0 %v1238
    %v4676 = vpop.f32.mrf.mxu0
    %v4677 = vadd.f32 %v4588, %v4676
    %v4678 = vpop.f32.mrf.mxu0
    %v4679 = vadd.f32 %v4590, %v4678
    %4680 = vmatmul.bf16.gmra.mxu0 %v1246
    %v4681 = vpop.f32.mrf.mxu0
    %v4682 = vadd.f32 %v4593, %v4681
    %v4683 = vpop.f32.mrf.mxu0
    %v4684 = vadd.f32 %v4595, %v4683
    %4685 = vmatmul.bf16.gmra.mxu0 %v1254
    %v4686 = vpop.f32.mrf.mxu0
    %v4687 = vadd.f32 %v4598, %v4686
    %v4688 = vpop.f32.mrf.mxu0
    %v4689 = vadd.f32 %v4600, %v4688
    %4690 = vmatmul.bf16.gmra.mxu0 %v1262
    %v4691 = vpop.f32.mrf.mxu0
    %v4692 = vadd.f32 %v4603, %v4691
    %v4693 = vpop.f32.mrf.mxu0
    %v4694 = vadd.f32 %v4605, %v4693
    %4695 = vmatmul.bf16.gmra.mxu0 %v1270
    %v4696 = vpop.f32.mrf.mxu0
    %v4697 = vadd.f32 %v4608, %v4696
    %v4698 = vpop.f32.mrf.mxu0
    %v4699 = vadd.f32 %v4610, %v4698
    %4700 = vmatmul.bf16.gmra.mxu0 %v1278
    %v4701 = vpop.f32.mrf.mxu0
    %v4702 = vadd.f32 %v4613, %v4701
    %v4703 = vpop.f32.mrf.mxu0
    %v4704 = vadd.f32 %v4615, %v4703
    %4705 = vmatmul.bf16.gmra.mxu0 %v1286
    %v4706 = vpop.f32.mrf.mxu0
    %v4707 = vadd.f32 %v4618, %v4706
    %v4708 = vpop.f32.mrf.mxu0
    %v4709 = vadd.f32 %v4620, %v4708
    %4710 = vmatmul.bf16.gmra.mxu0 %v1294
    %v4711 = vpop.f32.mrf.mxu0
    %v4712 = vadd.f32 %v4623, %v4711
    %v4713 = vpop.f32.mrf.mxu0
    %v4714 = vadd.f32 %v4625, %v4713
    %4715 = vmatmul.bf16.gmra.mxu0 %v1302
    %v4716 = vpop.f32.mrf.mxu0
    %v4717 = vadd.f32 %v4628, %v4716
    %v4718 = vpop.f32.mrf.mxu0
    %v4719 = vadd.f32 %v4630, %v4718
    %4720 = vdwg.mxu0
    %4721 = vmatpush.bf16.msra.mxu0 %v2530
    %4722 = vmatpush.bf16.msra.mxu0 %v2526
    %4723 = vmatpush.bf16.msra.mxu0 %v2522
    %4724 = vmatpush.bf16.msra.mxu0 %v2518
    %4725 = vmatpush.bf16.msra.mxu0 %v2514
    %4726 = vmatpush.bf16.msra.mxu0 %v2510
    %4727 = vmatpush.bf16.msra.mxu0 %v2506
    %4728 = vmatpush.bf16.msra.mxu0 %v2502
    %4729 = vmatmul.bf16.gmra.mxu0 %v1183
    %v4730 = vpop.f32.mrf.mxu0
    %v4731 = vadd.f32 %v4642, %v4730
    %v4732 = vpop.f32.mrf.mxu0
    %v4733 = vadd.f32 %v4644, %v4732
    %4734 = vmatmul.bf16.gmra.mxu0 %v1191
    %v4735 = vpop.f32.mrf.mxu0
    %v4736 = vadd.f32 %v4647, %v4735
    %v4737 = vpop.f32.mrf.mxu0
    %v4738 = vadd.f32 %v4649, %v4737
    %4739 = vmatmul.bf16.gmra.mxu0 %v1199
    %v4740 = vpop.f32.mrf.mxu0
    %v4741 = vadd.f32 %v4652, %v4740
    %v4742 = vpop.f32.mrf.mxu0
    %v4743 = vadd.f32 %v4654, %v4742
    %4744 = vmatmul.bf16.gmra.mxu0 %v1207
    %v4745 = vpop.f32.mrf.mxu0
    %v4746 = vadd.f32 %v4657, %v4745
    %v4747 = vpop.f32.mrf.mxu0
    %v4748 = vadd.f32 %v4659, %v4747
    %4749 = vmatmul.bf16.gmra.mxu0 %v1215
    %v4750 = vpop.f32.mrf.mxu0
    %v4751 = vadd.f32 %v4662, %v4750
    %v4752 = vpop.f32.mrf.mxu0
    %v4753 = vadd.f32 %v4664, %v4752
    %4754 = vmatmul.bf16.gmra.mxu0 %v1223
    %v4755 = vpop.f32.mrf.mxu0
    %v4756 = vadd.f32 %v4667, %v4755
    %v4757 = vpop.f32.mrf.mxu0
    %v4758 = vadd.f32 %v4669, %v4757
    %4759 = vmatmul.bf16.gmra.mxu0 %v1231
    %v4760 = vpop.f32.mrf.mxu0
    %v4761 = vadd.f32 %v4672, %v4760
    %v4762 = vpop.f32.mrf.mxu0
    %v4763 = vadd.f32 %v4674, %v4762
    %4764 = vmatmul.bf16.gmra.mxu0 %v1239
    %v4765 = vpop.f32.mrf.mxu0
    %v4766 = vadd.f32 %v4677, %v4765
    %v4767 = vpop.f32.mrf.mxu0
    %v4768 = vadd.f32 %v4679, %v4767
    %4769 = vmatmul.bf16.gmra.mxu0 %v1247
    %v4770 = vpop.f32.mrf.mxu0
    %v4771 = vadd.f32 %v4682, %v4770
    %v4772 = vpop.f32.mrf.mxu0
    %v4773 = vadd.f32 %v4684, %v4772
    %4774 = vmatmul.bf16.gmra.mxu0 %v1255
    %v4775 = vpop.f32.mrf.mxu0
    %v4776 = vadd.f32 %v4687, %v4775
    %v4777 = vpop.f32.mrf.mxu0
    %v4778 = vadd.f32 %v4689, %v4777
    %4779 = vmatmul.bf16.gmra.mxu0 %v1263
    %v4780 = vpop.f32.mrf.mxu0
    %v4781 = vadd.f32 %v4692, %v4780
    %v4782 = vpop.f32.mrf.mxu0
    %v4783 = vadd.f32 %v4694, %v4782
    %4784 = vmatmul.bf16.gmra.mxu0 %v1271
    %v4785 = vpop.f32.mrf.mxu0
    %v4786 = vadd.f32 %v4697, %v4785
    %v4787 = vpop.f32.mrf.mxu0
    %v4788 = vadd.f32 %v4699, %v4787
    %4789 = vmatmul.bf16.gmra.mxu0 %v1279
    %v4790 = vpop.f32.mrf.mxu0
    %v4791 = vadd.f32 %v4702, %v4790
    %v4792 = vpop.f32.mrf.mxu0
    %v4793 = vadd.f32 %v4704, %v4792
    %4794 = vmatmul.bf16.gmra.mxu0 %v1287
    %v4795 = vpop.f32.mrf.mxu0
    %v4796 = vadd.f32 %v4707, %v4795
    %v4797 = vpop.f32.mrf.mxu0
    %v4798 = vadd.f32 %v4709, %v4797
    %4799 = vmatmul.bf16.gmra.mxu0 %v1295
    %v4800 = vpop.f32.mrf.mxu0
    %v4801 = vadd.f32 %v4712, %v4800
    %v4802 = vpop.f32.mrf.mxu0
    %v4803 = vadd.f32 %v4714, %v4802
    %4804 = vmatmul.bf16.gmra.mxu0 %v1303
    %v4805 = vpop.f32.mrf.mxu0
    %v4806 = vadd.f32 %v4717, %v4805
    %v4807 = vpop.f32.mrf.mxu0
    %v4808 = vadd.f32 %v4719, %v4807
    %4809 = vdwg.mxu0
    %4810 = vmatpush.bf16.msra.mxu0 %v2562
    %4811 = vmatpush.bf16.msra.mxu0 %v2558
    %4812 = vmatpush.bf16.msra.mxu0 %v2554
    %4813 = vmatpush.bf16.msra.mxu0 %v2550
    %4814 = vmatpush.bf16.msra.mxu0 %v2546
    %4815 = vmatpush.bf16.msra.mxu0 %v2542
    %4816 = vmatpush.bf16.msra.mxu0 %v2538
    %4817 = vmatpush.bf16.msra.mxu0 %v2534
    %4818 = vmatmul.bf16.gmra.mxu0 %v1184
    %v4819 = vpop.f32.mrf.mxu0
    %v4820 = vadd.f32 %v4731, %v4819
    %v4821 = vpop.f32.mrf.mxu0
    %v4822 = vadd.f32 %v4733, %v4821
    %4823 = vmatmul.bf16.gmra.mxu0 %v1192
    %v4824 = vpop.f32.mrf.mxu0
    %v4825 = vadd.f32 %v4736, %v4824
    %v4826 = vpop.f32.mrf.mxu0
    %v4827 = vadd.f32 %v4738, %v4826
    %4828 = vmatmul.bf16.gmra.mxu0 %v1200
    %v4829 = vpop.f32.mrf.mxu0
    %v4830 = vadd.f32 %v4741, %v4829
    %v4831 = vpop.f32.mrf.mxu0
    %v4832 = vadd.f32 %v4743, %v4831
    %4833 = vmatmul.bf16.gmra.mxu0 %v1208
    %v4834 = vpop.f32.mrf.mxu0
    %v4835 = vadd.f32 %v4746, %v4834
    %v4836 = vpop.f32.mrf.mxu0
    %v4837 = vadd.f32 %v4748, %v4836
    %4838 = vmatmul.bf16.gmra.mxu0 %v1216
    %v4839 = vpop.f32.mrf.mxu0
    %v4840 = vadd.f32 %v4751, %v4839
    %v4841 = vpop.f32.mrf.mxu0
    %v4842 = vadd.f32 %v4753, %v4841
    %4843 = vmatmul.bf16.gmra.mxu0 %v1224
    %v4844 = vpop.f32.mrf.mxu0
    %v4845 = vadd.f32 %v4756, %v4844
    %v4846 = vpop.f32.mrf.mxu0
    %v4847 = vadd.f32 %v4758, %v4846
    %4848 = vmatmul.bf16.gmra.mxu0 %v1232
    %v4849 = vpop.f32.mrf.mxu0
    %v4850 = vadd.f32 %v4761, %v4849
    %v4851 = vpop.f32.mrf.mxu0
    %v4852 = vadd.f32 %v4763, %v4851
    %4853 = vmatmul.bf16.gmra.mxu0 %v1240
    %v4854 = vpop.f32.mrf.mxu0
    %v4855 = vadd.f32 %v4766, %v4854
    %v4856 = vpop.f32.mrf.mxu0
    %v4857 = vadd.f32 %v4768, %v4856
    %4858 = vmatmul.bf16.gmra.mxu0 %v1248
    %v4859 = vpop.f32.mrf.mxu0
    %v4860 = vadd.f32 %v4771, %v4859
    %v4861 = vpop.f32.mrf.mxu0
    %v4862 = vadd.f32 %v4773, %v4861
    %4863 = vmatmul.bf16.gmra.mxu0 %v1256
    %v4864 = vpop.f32.mrf.mxu0
    %v4865 = vadd.f32 %v4776, %v4864
    %v4866 = vpop.f32.mrf.mxu0
    %v4867 = vadd.f32 %v4778, %v4866
    %4868 = vmatmul.bf16.gmra.mxu0 %v1264
    %v4869 = vpop.f32.mrf.mxu0
    %v4870 = vadd.f32 %v4781, %v4869
    %v4871 = vpop.f32.mrf.mxu0
    %v4872 = vadd.f32 %v4783, %v4871
    %4873 = vmatmul.bf16.gmra.mxu0 %v1272
    %v4874 = vpop.f32.mrf.mxu0
    %v4875 = vadd.f32 %v4786, %v4874
    %v4876 = vpop.f32.mrf.mxu0
    %v4877 = vadd.f32 %v4788, %v4876
    %4878 = vmatmul.bf16.gmra.mxu0 %v1280
    %v4879 = vpop.f32.mrf.mxu0
    %v4880 = vadd.f32 %v4791, %v4879
    %v4881 = vpop.f32.mrf.mxu0
    %v4882 = vadd.f32 %v4793, %v4881
    %4883 = vmatmul.bf16.gmra.mxu0 %v1288
    %v4884 = vpop.f32.mrf.mxu0
    %v4885 = vadd.f32 %v4796, %v4884
    %v4886 = vpop.f32.mrf.mxu0
    %v4887 = vadd.f32 %v4798, %v4886
    %4888 = vmatmul.bf16.gmra.mxu0 %v1296
    %v4889 = vpop.f32.mrf.mxu0
    %v4890 = vadd.f32 %v4801, %v4889
    %v4891 = vpop.f32.mrf.mxu0
    %v4892 = vadd.f32 %v4803, %v4891
    %4893 = vmatmul.bf16.gmra.mxu0 %v1304
    %v4894 = vpop.f32.mrf.mxu0
    %v4895 = vadd.f32 %v4806, %v4894
    %v4896 = vpop.f32.mrf.mxu0
    %v4897 = vadd.f32 %v4808, %v4896
    %4898 = vdwg.mxu0
    %4899 = vmatpush.bf16.msra.mxu0 %v2594
    %4900 = vmatpush.bf16.msra.mxu0 %v2590
    %4901 = vmatpush.bf16.msra.mxu0 %v2586
    %4902 = vmatpush.bf16.msra.mxu0 %v2582
    %4903 = vmatpush.bf16.msra.mxu0 %v2578
    %4904 = vmatpush.bf16.msra.mxu0 %v2574
    %4905 = vmatpush.bf16.msra.mxu0 %v2570
    %4906 = vmatpush.bf16.msra.mxu0 %v2566
    %4907 = vmatmul.bf16.gmra.mxu0 %v1185
    %v4908 = vpop.f32.mrf.mxu0
    %v4909 = vadd.f32 %v4820, %v4908
    %v4910 = vpop.f32.mrf.mxu0
    %v4911 = vadd.f32 %v4822, %v4910
    %4912 = vmatmul.bf16.gmra.mxu0 %v1193
    %v4913 = vpop.f32.mrf.mxu0
    %v4914 = vadd.f32 %v4825, %v4913
    %v4915 = vpop.f32.mrf.mxu0
    %v4916 = vadd.f32 %v4827, %v4915
    %4917 = vmatmul.bf16.gmra.mxu0 %v1201
    %v4918 = vpop.f32.mrf.mxu0
    %v4919 = vadd.f32 %v4830, %v4918
    %v4920 = vpop.f32.mrf.mxu0
    %v4921 = vadd.f32 %v4832, %v4920
    %4922 = vmatmul.bf16.gmra.mxu0 %v1209
    %v4923 = vpop.f32.mrf.mxu0
    %v4924 = vadd.f32 %v4835, %v4923
    %v4925 = vpop.f32.mrf.mxu0
    %v4926 = vadd.f32 %v4837, %v4925
    %4927 = vmatmul.bf16.gmra.mxu0 %v1217
    %v4928 = vpop.f32.mrf.mxu0
    %v4929 = vadd.f32 %v4840, %v4928
    %v4930 = vpop.f32.mrf.mxu0
    %v4931 = vadd.f32 %v4842, %v4930
    %4932 = vmatmul.bf16.gmra.mxu0 %v1225
    %v4933 = vpop.f32.mrf.mxu0
    %v4934 = vadd.f32 %v4845, %v4933
    %v4935 = vpop.f32.mrf.mxu0
    %v4936 = vadd.f32 %v4847, %v4935
    %4937 = vmatmul.bf16.gmra.mxu0 %v1233
    %v4938 = vpop.f32.mrf.mxu0
    %v4939 = vadd.f32 %v4850, %v4938
    %v4940 = vpop.f32.mrf.mxu0
    %v4941 = vadd.f32 %v4852, %v4940
    %4942 = vmatmul.bf16.gmra.mxu0 %v1241
    %v4943 = vpop.f32.mrf.mxu0
    %v4944 = vadd.f32 %v4855, %v4943
    %v4945 = vpop.f32.mrf.mxu0
    %v4946 = vadd.f32 %v4857, %v4945
    %4947 = vmatmul.bf16.gmra.mxu0 %v1249
    %v4948 = vpop.f32.mrf.mxu0
    %v4949 = vadd.f32 %v4860, %v4948
    %v4950 = vpop.f32.mrf.mxu0
    %v4951 = vadd.f32 %v4862, %v4950
    %4952 = vmatmul.bf16.gmra.mxu0 %v1257
    %v4953 = vpop.f32.mrf.mxu0
    %v4954 = vadd.f32 %v4865, %v4953
    %v4955 = vpop.f32.mrf.mxu0
    %v4956 = vadd.f32 %v4867, %v4955
    %4957 = vmatmul.bf16.gmra.mxu0 %v1265
    %v4958 = vpop.f32.mrf.mxu0
    %v4959 = vadd.f32 %v4870, %v4958
    %v4960 = vpop.f32.mrf.mxu0
    %v4961 = vadd.f32 %v4872, %v4960
    %4962 = vmatmul.bf16.gmra.mxu0 %v1273
    %v4963 = vpop.f32.mrf.mxu0
    %v4964 = vadd.f32 %v4875, %v4963
    %v4965 = vpop.f32.mrf.mxu0
    %v4966 = vadd.f32 %v4877, %v4965
    %4967 = vmatmul.bf16.gmra.mxu0 %v1281
    %v4968 = vpop.f32.mrf.mxu0
    %v4969 = vadd.f32 %v4880, %v4968
    %v4970 = vpop.f32.mrf.mxu0
    %v4971 = vadd.f32 %v4882, %v4970
    %4972 = vmatmul.bf16.gmra.mxu0 %v1289
    %v4973 = vpop.f32.mrf.mxu0
    %v4974 = vadd.f32 %v4885, %v4973
    %v4975 = vpop.f32.mrf.mxu0
    %v4976 = vadd.f32 %v4887, %v4975
    %4977 = vmatmul.bf16.gmra.mxu0 %v1297
    %v4978 = vpop.f32.mrf.mxu0
    %v4979 = vadd.f32 %v4890, %v4978
    %v4980 = vpop.f32.mrf.mxu0
    %v4981 = vadd.f32 %v4892, %v4980
    %4982 = vmatmul.bf16.gmra.mxu0 %v1305
    %v4983 = vpop.f32.mrf.mxu0
    %v4984 = vadd.f32 %v4895, %v4983
    %v4985 = vpop.f32.mrf.mxu0
    %v4986 = vadd.f32 %v4897, %v4985
    %4987 = vdwg.mxu0
    %4988 = vmatpush.bf16.msra.mxu0 %v2371
    %4989 = vmatpush.bf16.msra.mxu0 %v2367
    %4990 = vmatpush.bf16.msra.mxu0 %v2363
    %4991 = vmatpush.bf16.msra.mxu0 %v2359
    %4992 = vmatpush.bf16.msra.mxu0 %v2355
    %4993 = vmatpush.bf16.msra.mxu0 %v2351
    %4994 = vmatpush.bf16.msra.mxu0 %v2347
    %4995 = vmatpush.bf16.msra.mxu0 %v2343
    %4996 = vmatmul.bf16.gmra.mxu0 %v1178
    %v4997 = vpop.f32.mrf.mxu0
    %v4998 = vadd.f32 %v1567, %v4997
    %v4999 = vpop.f32.mrf.mxu0
    %v5000 = vadd.f32 %v1567, %v4999
    %5001 = vmatmul.bf16.gmra.mxu0 %v1186
    %v5002 = vpop.f32.mrf.mxu0
    %v5003 = vadd.f32 %v1567, %v5002
    %v5004 = vpop.f32.mrf.mxu0
    %v5005 = vadd.f32 %v1567, %v5004
    %5006 = vmatmul.bf16.gmra.mxu0 %v1194
    %v5007 = vpop.f32.mrf.mxu0
    %v5008 = vadd.f32 %v1567, %v5007
    %v5009 = vpop.f32.mrf.mxu0
    %v5010 = vadd.f32 %v1567, %v5009
    %5011 = vmatmul.bf16.gmra.mxu0 %v1202
    %v5012 = vpop.f32.mrf.mxu0
    %v5013 = vadd.f32 %v1567, %v5012
    %v5014 = vpop.f32.mrf.mxu0
    %v5015 = vadd.f32 %v1567, %v5014
    %5016 = vmatmul.bf16.gmra.mxu0 %v1210
    %v5017 = vpop.f32.mrf.mxu0
    %v5018 = vadd.f32 %v1567, %v5017
    %v5019 = vpop.f32.mrf.mxu0
    %v5020 = vadd.f32 %v1567, %v5019
    %5021 = vmatmul.bf16.gmra.mxu0 %v1218
    %v5022 = vpop.f32.mrf.mxu0
    %v5023 = vadd.f32 %v1567, %v5022
    %v5024 = vpop.f32.mrf.mxu0
    %v5025 = vadd.f32 %v1567, %v5024
    %5026 = vmatmul.bf16.gmra.mxu0 %v1226
    %v5027 = vpop.f32.mrf.mxu0
    %v5028 = vadd.f32 %v1567, %v5027
    %v5029 = vpop.f32.mrf.mxu0
    %v5030 = vadd.f32 %v1567, %v5029
    %5031 = vmatmul.bf16.gmra.mxu0 %v1234
    %v5032 = vpop.f32.mrf.mxu0
    %v5033 = vadd.f32 %v1567, %v5032
    %v5034 = vpop.f32.mrf.mxu0
    %v5035 = vadd.f32 %v1567, %v5034
    %5036 = vmatmul.bf16.gmra.mxu0 %v1242
    %v5037 = vpop.f32.mrf.mxu0
    %v5038 = vadd.f32 %v1567, %v5037
    %v5039 = vpop.f32.mrf.mxu0
    %v5040 = vadd.f32 %v1567, %v5039
    %5041 = vmatmul.bf16.gmra.mxu0 %v1250
    %v5042 = vpop.f32.mrf.mxu0
    %v5043 = vadd.f32 %v1567, %v5042
    %v5044 = vpop.f32.mrf.mxu0
    %v5045 = vadd.f32 %v1567, %v5044
    %5046 = vmatmul.bf16.gmra.mxu0 %v1258
    %v5047 = vpop.f32.mrf.mxu0
    %v5048 = vadd.f32 %v1567, %v5047
    %v5049 = vpop.f32.mrf.mxu0
    %v5050 = vadd.f32 %v1567, %v5049
    %5051 = vmatmul.bf16.gmra.mxu0 %v1266
    %v5052 = vpop.f32.mrf.mxu0
    %v5053 = vadd.f32 %v1567, %v5052
    %v5054 = vpop.f32.mrf.mxu0
    %v5055 = vadd.f32 %v1567, %v5054
    %5056 = vmatmul.bf16.gmra.mxu0 %v1274
    %v5057 = vpop.f32.mrf.mxu0
    %v5058 = vadd.f32 %v1567, %v5057
    %v5059 = vpop.f32.mrf.mxu0
    %v5060 = vadd.f32 %v1567, %v5059
    %5061 = vmatmul.bf16.gmra.mxu0 %v1282
    %v5062 = vpop.f32.mrf.mxu0
    %v5063 = vadd.f32 %v1567, %v5062
    %v5064 = vpop.f32.mrf.mxu0
    %v5065 = vadd.f32 %v1567, %v5064
    %5066 = vmatmul.bf16.gmra.mxu0 %v1290
    %v5067 = vpop.f32.mrf.mxu0
    %v5068 = vadd.f32 %v1567, %v5067
    %v5069 = vpop.f32.mrf.mxu0
    %v5070 = vadd.f32 %v1567, %v5069
    %5071 = vmatmul.bf16.gmra.mxu0 %v1298
    %v5072 = vpop.f32.mrf.mxu0
    %v5073 = vadd.f32 %v1567, %v5072
    %v5074 = vpop.f32.mrf.mxu0
    %v5075 = vadd.f32 %v1567, %v5074
    %5076 = vdwg.mxu0
    %5077 = vmatpush.bf16.msra.mxu0 %v2403
    %5078 = vmatpush.bf16.msra.mxu0 %v2399
    %5079 = vmatpush.bf16.msra.mxu0 %v2395
    %5080 = vmatpush.bf16.msra.mxu0 %v2391
    %5081 = vmatpush.bf16.msra.mxu0 %v2387
    %5082 = vmatpush.bf16.msra.mxu0 %v2383
    %5083 = vmatpush.bf16.msra.mxu0 %v2379
    %5084 = vmatpush.bf16.msra.mxu0 %v2375
    %5085 = vmatmul.bf16.gmra.mxu0 %v1179
    %v5086 = vpop.f32.mrf.mxu0
    %v5087 = vadd.f32 %v4998, %v5086
    %v5088 = vpop.f32.mrf.mxu0
    %v5089 = vadd.f32 %v5000, %v5088
    %5090 = vmatmul.bf16.gmra.mxu0 %v1187
    %v5091 = vpop.f32.mrf.mxu0
    %v5092 = vadd.f32 %v5003, %v5091
    %v5093 = vpop.f32.mrf.mxu0
    %v5094 = vadd.f32 %v5005, %v5093
    %5095 = vmatmul.bf16.gmra.mxu0 %v1195
    %v5096 = vpop.f32.mrf.mxu0
    %v5097 = vadd.f32 %v5008, %v5096
    %v5098 = vpop.f32.mrf.mxu0
    %v5099 = vadd.f32 %v5010, %v5098
    %5100 = vmatmul.bf16.gmra.mxu0 %v1203
    %v5101 = vpop.f32.mrf.mxu0
    %v5102 = vadd.f32 %v5013, %v5101
    %v5103 = vpop.f32.mrf.mxu0
    %v5104 = vadd.f32 %v5015, %v5103
    %5105 = vmatmul.bf16.gmra.mxu0 %v1211
    %v5106 = vpop.f32.mrf.mxu0
    %v5107 = vadd.f32 %v5018, %v5106
    %v5108 = vpop.f32.mrf.mxu0
    %v5109 = vadd.f32 %v5020, %v5108
    %5110 = vmatmul.bf16.gmra.mxu0 %v1219
    %v5111 = vpop.f32.mrf.mxu0
    %v5112 = vadd.f32 %v5023, %v5111
    %v5113 = vpop.f32.mrf.mxu0
    %v5114 = vadd.f32 %v5025, %v5113
    %5115 = vmatmul.bf16.gmra.mxu0 %v1227
    %v5116 = vpop.f32.mrf.mxu0
    %v5117 = vadd.f32 %v5028, %v5116
    %v5118 = vpop.f32.mrf.mxu0
    %v5119 = vadd.f32 %v5030, %v5118
    %5120 = vmatmul.bf16.gmra.mxu0 %v1235
    %v5121 = vpop.f32.mrf.mxu0
    %v5122 = vadd.f32 %v5033, %v5121
    %v5123 = vpop.f32.mrf.mxu0
    %v5124 = vadd.f32 %v5035, %v5123
    %5125 = vmatmul.bf16.gmra.mxu0 %v1243
    %v5126 = vpop.f32.mrf.mxu0
    %v5127 = vadd.f32 %v5038, %v5126
    %v5128 = vpop.f32.mrf.mxu0
    %v5129 = vadd.f32 %v5040, %v5128
    %5130 = vmatmul.bf16.gmra.mxu0 %v1251
    %v5131 = vpop.f32.mrf.mxu0
    %v5132 = vadd.f32 %v5043, %v5131
    %v5133 = vpop.f32.mrf.mxu0
    %v5134 = vadd.f32 %v5045, %v5133
    %5135 = vmatmul.bf16.gmra.mxu0 %v1259
    %v5136 = vpop.f32.mrf.mxu0
    %v5137 = vadd.f32 %v5048, %v5136
    %v5138 = vpop.f32.mrf.mxu0
    %v5139 = vadd.f32 %v5050, %v5138
    %5140 = vmatmul.bf16.gmra.mxu0 %v1267
    %v5141 = vpop.f32.mrf.mxu0
    %v5142 = vadd.f32 %v5053, %v5141
    %v5143 = vpop.f32.mrf.mxu0
    %v5144 = vadd.f32 %v5055, %v5143
    %5145 = vmatmul.bf16.gmra.mxu0 %v1275
    %v5146 = vpop.f32.mrf.mxu0
    %v5147 = vadd.f32 %v5058, %v5146
    %v5148 = vpop.f32.mrf.mxu0
    %v5149 = vadd.f32 %v5060, %v5148
    %5150 = vmatmul.bf16.gmra.mxu0 %v1283
    %v5151 = vpop.f32.mrf.mxu0
    %v5152 = vadd.f32 %v5063, %v5151
    %v5153 = vpop.f32.mrf.mxu0
    %v5154 = vadd.f32 %v5065, %v5153
    %5155 = vmatmul.bf16.gmra.mxu0 %v1291
    %v5156 = vpop.f32.mrf.mxu0
    %v5157 = vadd.f32 %v5068, %v5156
    %v5158 = vpop.f32.mrf.mxu0
    %v5159 = vadd.f32 %v5070, %v5158
    %5160 = vmatmul.bf16.gmra.mxu0 %v1299
    %v5161 = vpop.f32.mrf.mxu0
    %v5162 = vadd.f32 %v5073, %v5161
    %v5163 = vpop.f32.mrf.mxu0
    %v5164 = vadd.f32 %v5075, %v5163
    %5165 = vdwg.mxu0
    %5166 = vmatpush.bf16.msra.mxu0 %v2435
    %5167 = vmatpush.bf16.msra.mxu0 %v2431
    %5168 = vmatpush.bf16.msra.mxu0 %v2427
    %5169 = vmatpush.bf16.msra.mxu0 %v2423
    %5170 = vmatpush.bf16.msra.mxu0 %v2419
    %5171 = vmatpush.bf16.msra.mxu0 %v2415
    %5172 = vmatpush.bf16.msra.mxu0 %v2411
    %5173 = vmatpush.bf16.msra.mxu0 %v2407
    %5174 = vmatmul.bf16.gmra.mxu0 %v1180
    %v5175 = vpop.f32.mrf.mxu0
    %v5176 = vadd.f32 %v5087, %v5175
    %v5177 = vpop.f32.mrf.mxu0
    %v5178 = vadd.f32 %v5089, %v5177
    %5179 = vmatmul.bf16.gmra.mxu0 %v1188
    %v5180 = vpop.f32.mrf.mxu0
    %v5181 = vadd.f32 %v5092, %v5180
    %v5182 = vpop.f32.mrf.mxu0
    %v5183 = vadd.f32 %v5094, %v5182
    %5184 = vmatmul.bf16.gmra.mxu0 %v1196
    %v5185 = vpop.f32.mrf.mxu0
    %v5186 = vadd.f32 %v5097, %v5185
    %v5187 = vpop.f32.mrf.mxu0
    %v5188 = vadd.f32 %v5099, %v5187
    %5189 = vmatmul.bf16.gmra.mxu0 %v1204
    %v5190 = vpop.f32.mrf.mxu0
    %v5191 = vadd.f32 %v5102, %v5190
    %v5192 = vpop.f32.mrf.mxu0
    %v5193 = vadd.f32 %v5104, %v5192
    %5194 = vmatmul.bf16.gmra.mxu0 %v1212
    %v5195 = vpop.f32.mrf.mxu0
    %v5196 = vadd.f32 %v5107, %v5195
    %v5197 = vpop.f32.mrf.mxu0
    %v5198 = vadd.f32 %v5109, %v5197
    %5199 = vmatmul.bf16.gmra.mxu0 %v1220
    %v5200 = vpop.f32.mrf.mxu0
    %v5201 = vadd.f32 %v5112, %v5200
    %v5202 = vpop.f32.mrf.mxu0
    %v5203 = vadd.f32 %v5114, %v5202
    %5204 = vmatmul.bf16.gmra.mxu0 %v1228
    %v5205 = vpop.f32.mrf.mxu0
    %v5206 = vadd.f32 %v5117, %v5205
    %v5207 = vpop.f32.mrf.mxu0
    %v5208 = vadd.f32 %v5119, %v5207
    %5209 = vmatmul.bf16.gmra.mxu0 %v1236
    %v5210 = vpop.f32.mrf.mxu0
    %v5211 = vadd.f32 %v5122, %v5210
    %v5212 = vpop.f32.mrf.mxu0
    %v5213 = vadd.f32 %v5124, %v5212
    %5214 = vmatmul.bf16.gmra.mxu0 %v1244
    %v5215 = vpop.f32.mrf.mxu0
    %v5216 = vadd.f32 %v5127, %v5215
    %v5217 = vpop.f32.mrf.mxu0
    %v5218 = vadd.f32 %v5129, %v5217
    %5219 = vmatmul.bf16.gmra.mxu0 %v1252
    %v5220 = vpop.f32.mrf.mxu0
    %v5221 = vadd.f32 %v5132, %v5220
    %v5222 = vpop.f32.mrf.mxu0
    %v5223 = vadd.f32 %v5134, %v5222
    %5224 = vmatmul.bf16.gmra.mxu0 %v1260
    %v5225 = vpop.f32.mrf.mxu0
    %v5226 = vadd.f32 %v5137, %v5225
    %v5227 = vpop.f32.mrf.mxu0
    %v5228 = vadd.f32 %v5139, %v5227
    %5229 = vmatmul.bf16.gmra.mxu0 %v1268
    %v5230 = vpop.f32.mrf.mxu0
    %v5231 = vadd.f32 %v5142, %v5230
    %v5232 = vpop.f32.mrf.mxu0
    %v5233 = vadd.f32 %v5144, %v5232
    %5234 = vmatmul.bf16.gmra.mxu0 %v1276
    %v5235 = vpop.f32.mrf.mxu0
    %v5236 = vadd.f32 %v5147, %v5235
    %v5237 = vpop.f32.mrf.mxu0
    %v5238 = vadd.f32 %v5149, %v5237
    %5239 = vmatmul.bf16.gmra.mxu0 %v1284
    %v5240 = vpop.f32.mrf.mxu0
    %v5241 = vadd.f32 %v5152, %v5240
    %v5242 = vpop.f32.mrf.mxu0
    %v5243 = vadd.f32 %v5154, %v5242
    %5244 = vmatmul.bf16.gmra.mxu0 %v1292
    %v5245 = vpop.f32.mrf.mxu0
    %v5246 = vadd.f32 %v5157, %v5245
    %v5247 = vpop.f32.mrf.mxu0
    %v5248 = vadd.f32 %v5159, %v5247
    %5249 = vmatmul.bf16.gmra.mxu0 %v1300
    %v5250 = vpop.f32.mrf.mxu0
    %v5251 = vadd.f32 %v5162, %v5250
    %v5252 = vpop.f32.mrf.mxu0
    %v5253 = vadd.f32 %v5164, %v5252
    %5254 = vdwg.mxu0
    %5255 = vmatpush.bf16.msra.mxu0 %v2467
    %5256 = vmatpush.bf16.msra.mxu0 %v2463
    %5257 = vmatpush.bf16.msra.mxu0 %v2459
    %5258 = vmatpush.bf16.msra.mxu0 %v2455
    %5259 = vmatpush.bf16.msra.mxu0 %v2451
    %5260 = vmatpush.bf16.msra.mxu0 %v2447
    %5261 = vmatpush.bf16.msra.mxu0 %v2443
    %5262 = vmatpush.bf16.msra.mxu0 %v2439
    %5263 = vmatmul.bf16.gmra.mxu0 %v1181
    %v5264 = vpop.f32.mrf.mxu0
    %v5265 = vadd.f32 %v5176, %v5264
    %v5266 = vpop.f32.mrf.mxu0
    %v5267 = vadd.f32 %v5178, %v5266
    %5268 = vmatmul.bf16.gmra.mxu0 %v1189
    %v5269 = vpop.f32.mrf.mxu0
    %v5270 = vadd.f32 %v5181, %v5269
    %v5271 = vpop.f32.mrf.mxu0
    %v5272 = vadd.f32 %v5183, %v5271
    %5273 = vmatmul.bf16.gmra.mxu0 %v1197
    %v5274 = vpop.f32.mrf.mxu0
    %v5275 = vadd.f32 %v5186, %v5274
    %v5276 = vpop.f32.mrf.mxu0
    %v5277 = vadd.f32 %v5188, %v5276
    %5278 = vmatmul.bf16.gmra.mxu0 %v1205
    %v5279 = vpop.f32.mrf.mxu0
    %v5280 = vadd.f32 %v5191, %v5279
    %v5281 = vpop.f32.mrf.mxu0
    %v5282 = vadd.f32 %v5193, %v5281
    %5283 = vmatmul.bf16.gmra.mxu0 %v1213
    %v5284 = vpop.f32.mrf.mxu0
    %v5285 = vadd.f32 %v5196, %v5284
    %v5286 = vpop.f32.mrf.mxu0
    %v5287 = vadd.f32 %v5198, %v5286
    %5288 = vmatmul.bf16.gmra.mxu0 %v1221
    %v5289 = vpop.f32.mrf.mxu0
    %v5290 = vadd.f32 %v5201, %v5289
    %v5291 = vpop.f32.mrf.mxu0
    %v5292 = vadd.f32 %v5203, %v5291
    %5293 = vmatmul.bf16.gmra.mxu0 %v1229
    %v5294 = vpop.f32.mrf.mxu0
    %v5295 = vadd.f32 %v5206, %v5294
    %v5296 = vpop.f32.mrf.mxu0
    %v5297 = vadd.f32 %v5208, %v5296
    %5298 = vmatmul.bf16.gmra.mxu0 %v1237
    %v5299 = vpop.f32.mrf.mxu0
    %v5300 = vadd.f32 %v5211, %v5299
    %v5301 = vpop.f32.mrf.mxu0
    %v5302 = vadd.f32 %v5213, %v5301
    %5303 = vmatmul.bf16.gmra.mxu0 %v1245
    %v5304 = vpop.f32.mrf.mxu0
    %v5305 = vadd.f32 %v5216, %v5304
    %v5306 = vpop.f32.mrf.mxu0
    %v5307 = vadd.f32 %v5218, %v5306
    %5308 = vmatmul.bf16.gmra.mxu0 %v1253
    %v5309 = vpop.f32.mrf.mxu0
    %v5310 = vadd.f32 %v5221, %v5309
    %v5311 = vpop.f32.mrf.mxu0
    %v5312 = vadd.f32 %v5223, %v5311
    %5313 = vmatmul.bf16.gmra.mxu0 %v1261
    %v5314 = vpop.f32.mrf.mxu0
    %v5315 = vadd.f32 %v5226, %v5314
    %v5316 = vpop.f32.mrf.mxu0
    %v5317 = vadd.f32 %v5228, %v5316
    %5318 = vmatmul.bf16.gmra.mxu0 %v1269
    %v5319 = vpop.f32.mrf.mxu0
    %v5320 = vadd.f32 %v5231, %v5319
    %v5321 = vpop.f32.mrf.mxu0
    %v5322 = vadd.f32 %v5233, %v5321
    %5323 = vmatmul.bf16.gmra.mxu0 %v1277
    %v5324 = vpop.f32.mrf.mxu0
    %v5325 = vadd.f32 %v5236, %v5324
    %v5326 = vpop.f32.mrf.mxu0
    %v5327 = vadd.f32 %v5238, %v5326
    %5328 = vmatmul.bf16.gmra.mxu0 %v1285
    %v5329 = vpop.f32.mrf.mxu0
    %v5330 = vadd.f32 %v5241, %v5329
    %v5331 = vpop.f32.mrf.mxu0
    %v5332 = vadd.f32 %v5243, %v5331
    %5333 = vmatmul.bf16.gmra.mxu0 %v1293
    %v5334 = vpop.f32.mrf.mxu0
    %v5335 = vadd.f32 %v5246, %v5334
    %v5336 = vpop.f32.mrf.mxu0
    %v5337 = vadd.f32 %v5248, %v5336
    %5338 = vmatmul.bf16.gmra.mxu0 %v1301
    %v5339 = vpop.f32.mrf.mxu0
    %v5340 = vadd.f32 %v5251, %v5339
    %v5341 = vpop.f32.mrf.mxu0
    %v5342 = vadd.f32 %v5253, %v5341
    %5343 = vdwg.mxu0
    %5344 = vmatpush.bf16.msra.mxu0 %v2499
    %5345 = vmatpush.bf16.msra.mxu0 %v2495
    %5346 = vmatpush.bf16.msra.mxu0 %v2491
    %5347 = vmatpush.bf16.msra.mxu0 %v2487
    %5348 = vmatpush.bf16.msra.mxu0 %v2483
    %5349 = vmatpush.bf16.msra.mxu0 %v2479
    %5350 = vmatpush.bf16.msra.mxu0 %v2475
    %5351 = vmatpush.bf16.msra.mxu0 %v2471
    %5352 = vmatmul.bf16.gmra.mxu0 %v1182
    %v5353 = vpop.f32.mrf.mxu0
    %v5354 = vadd.f32 %v5265, %v5353
    %v5355 = vpop.f32.mrf.mxu0
    %v5356 = vadd.f32 %v5267, %v5355
    %5357 = vmatmul.bf16.gmra.mxu0 %v1190
    %v5358 = vpop.f32.mrf.mxu0
    %v5359 = vadd.f32 %v5270, %v5358
    %v5360 = vpop.f32.mrf.mxu0
    %v5361 = vadd.f32 %v5272, %v5360
    %5362 = vmatmul.bf16.gmra.mxu0 %v1198
    %v5363 = vpop.f32.mrf.mxu0
    %v5364 = vadd.f32 %v5275, %v5363
    %v5365 = vpop.f32.mrf.mxu0
    %v5366 = vadd.f32 %v5277, %v5365
    %5367 = vmatmul.bf16.gmra.mxu0 %v1206
    %v5368 = vpop.f32.mrf.mxu0
    %v5369 = vadd.f32 %v5280, %v5368
    %v5370 = vpop.f32.mrf.mxu0
    %v5371 = vadd.f32 %v5282, %v5370
    %5372 = vmatmul.bf16.gmra.mxu0 %v1214
    %v5373 = vpop.f32.mrf.mxu0
    %v5374 = vadd.f32 %v5285, %v5373
    %v5375 = vpop.f32.mrf.mxu0
    %v5376 = vadd.f32 %v5287, %v5375
    %5377 = vmatmul.bf16.gmra.mxu0 %v1222
    %v5378 = vpop.f32.mrf.mxu0
    %v5379 = vadd.f32 %v5290, %v5378
    %v5380 = vpop.f32.mrf.mxu0
    %v5381 = vadd.f32 %v5292, %v5380
    %5382 = vmatmul.bf16.gmra.mxu0 %v1230
    %v5383 = vpop.f32.mrf.mxu0
    %v5384 = vadd.f32 %v5295, %v5383
    %v5385 = vpop.f32.mrf.mxu0
    %v5386 = vadd.f32 %v5297, %v5385
    %5387 = vmatmul.bf16.gmra.mxu0 %v1238
    %v5388 = vpop.f32.mrf.mxu0
    %v5389 = vadd.f32 %v5300, %v5388
    %v5390 = vpop.f32.mrf.mxu0
    %v5391 = vadd.f32 %v5302, %v5390
    %5392 = vmatmul.bf16.gmra.mxu0 %v1246
    %v5393 = vpop.f32.mrf.mxu0
    %v5394 = vadd.f32 %v5305, %v5393
    %v5395 = vpop.f32.mrf.mxu0
    %v5396 = vadd.f32 %v5307, %v5395
    %5397 = vmatmul.bf16.gmra.mxu0 %v1254
    %v5398 = vpop.f32.mrf.mxu0
    %v5399 = vadd.f32 %v5310, %v5398
    %v5400 = vpop.f32.mrf.mxu0
    %v5401 = vadd.f32 %v5312, %v5400
    %5402 = vmatmul.bf16.gmra.mxu0 %v1262
    %v5403 = vpop.f32.mrf.mxu0
    %v5404 = vadd.f32 %v5315, %v5403
    %v5405 = vpop.f32.mrf.mxu0
    %v5406 = vadd.f32 %v5317, %v5405
    %5407 = vmatmul.bf16.gmra.mxu0 %v1270
    %v5408 = vpop.f32.mrf.mxu0
    %v5409 = vadd.f32 %v5320, %v5408
    %v5410 = vpop.f32.mrf.mxu0
    %v5411 = vadd.f32 %v5322, %v5410
    %5412 = vmatmul.bf16.gmra.mxu0 %v1278
    %v5413 = vpop.f32.mrf.mxu0
    %v5414 = vadd.f32 %v5325, %v5413
    %v5415 = vpop.f32.mrf.mxu0
    %v5416 = vadd.f32 %v5327, %v5415
    %5417 = vmatmul.bf16.gmra.mxu0 %v1286
    %v5418 = vpop.f32.mrf.mxu0
    %v5419 = vadd.f32 %v5330, %v5418
    %v5420 = vpop.f32.mrf.mxu0
    %v5421 = vadd.f32 %v5332, %v5420
    %5422 = vmatmul.bf16.gmra.mxu0 %v1294
    %v5423 = vpop.f32.mrf.mxu0
    %v5424 = vadd.f32 %v5335, %v5423
    %v5425 = vpop.f32.mrf.mxu0
    %v5426 = vadd.f32 %v5337, %v5425
    %5427 = vmatmul.bf16.gmra.mxu0 %v1302
    %v5428 = vpop.f32.mrf.mxu0
    %v5429 = vadd.f32 %v5340, %v5428
    %v5430 = vpop.f32.mrf.mxu0
    %v5431 = vadd.f32 %v5342, %v5430
    %5432 = vdwg.mxu0
    %5433 = vmatpush.bf16.msra.mxu0 %v2531
    %5434 = vmatpush.bf16.msra.mxu0 %v2527
    %5435 = vmatpush.bf16.msra.mxu0 %v2523
    %5436 = vmatpush.bf16.msra.mxu0 %v2519
    %5437 = vmatpush.bf16.msra.mxu0 %v2515
    %5438 = vmatpush.bf16.msra.mxu0 %v2511
    %5439 = vmatpush.bf16.msra.mxu0 %v2507
    %5440 = vmatpush.bf16.msra.mxu0 %v2503
    %5441 = vmatmul.bf16.gmra.mxu0 %v1183
    %v5442 = vpop.f32.mrf.mxu0
    %v5443 = vadd.f32 %v5354, %v5442
    %v5444 = vpop.f32.mrf.mxu0
    %v5445 = vadd.f32 %v5356, %v5444
    %5446 = vmatmul.bf16.gmra.mxu0 %v1191
    %v5447 = vpop.f32.mrf.mxu0
    %v5448 = vadd.f32 %v5359, %v5447
    %v5449 = vpop.f32.mrf.mxu0
    %v5450 = vadd.f32 %v5361, %v5449
    %5451 = vmatmul.bf16.gmra.mxu0 %v1199
    %v5452 = vpop.f32.mrf.mxu0
    %v5453 = vadd.f32 %v5364, %v5452
    %v5454 = vpop.f32.mrf.mxu0
    %v5455 = vadd.f32 %v5366, %v5454
    %5456 = vmatmul.bf16.gmra.mxu0 %v1207
    %v5457 = vpop.f32.mrf.mxu0
    %v5458 = vadd.f32 %v5369, %v5457
    %v5459 = vpop.f32.mrf.mxu0
    %v5460 = vadd.f32 %v5371, %v5459
    %5461 = vmatmul.bf16.gmra.mxu0 %v1215
    %v5462 = vpop.f32.mrf.mxu0
    %v5463 = vadd.f32 %v5374, %v5462
    %v5464 = vpop.f32.mrf.mxu0
    %v5465 = vadd.f32 %v5376, %v5464
    %5466 = vmatmul.bf16.gmra.mxu0 %v1223
    %v5467 = vpop.f32.mrf.mxu0
    %v5468 = vadd.f32 %v5379, %v5467
    %v5469 = vpop.f32.mrf.mxu0
    %v5470 = vadd.f32 %v5381, %v5469
    %5471 = vmatmul.bf16.gmra.mxu0 %v1231
    %v5472 = vpop.f32.mrf.mxu0
    %v5473 = vadd.f32 %v5384, %v5472
    %v5474 = vpop.f32.mrf.mxu0
    %v5475 = vadd.f32 %v5386, %v5474
    %5476 = vmatmul.bf16.gmra.mxu0 %v1239
    %v5477 = vpop.f32.mrf.mxu0
    %v5478 = vadd.f32 %v5389, %v5477
    %v5479 = vpop.f32.mrf.mxu0
    %v5480 = vadd.f32 %v5391, %v5479
    %5481 = vmatmul.bf16.gmra.mxu0 %v1247
    %v5482 = vpop.f32.mrf.mxu0
    %v5483 = vadd.f32 %v5394, %v5482
    %v5484 = vpop.f32.mrf.mxu0
    %v5485 = vadd.f32 %v5396, %v5484
    %5486 = vmatmul.bf16.gmra.mxu0 %v1255
    %v5487 = vpop.f32.mrf.mxu0
    %v5488 = vadd.f32 %v5399, %v5487
    %v5489 = vpop.f32.mrf.mxu0
    %v5490 = vadd.f32 %v5401, %v5489
    %5491 = vmatmul.bf16.gmra.mxu0 %v1263
    %v5492 = vpop.f32.mrf.mxu0
    %v5493 = vadd.f32 %v5404, %v5492
    %v5494 = vpop.f32.mrf.mxu0
    %v5495 = vadd.f32 %v5406, %v5494
    %5496 = vmatmul.bf16.gmra.mxu0 %v1271
    %v5497 = vpop.f32.mrf.mxu0
    %v5498 = vadd.f32 %v5409, %v5497
    %v5499 = vpop.f32.mrf.mxu0
    %v5500 = vadd.f32 %v5411, %v5499
    %5501 = vmatmul.bf16.gmra.mxu0 %v1279
    %v5502 = vpop.f32.mrf.mxu0
    %v5503 = vadd.f32 %v5414, %v5502
    %v5504 = vpop.f32.mrf.mxu0
    %v5505 = vadd.f32 %v5416, %v5504
    %5506 = vmatmul.bf16.gmra.mxu0 %v1287
    %v5507 = vpop.f32.mrf.mxu0
    %v5508 = vadd.f32 %v5419, %v5507
    %v5509 = vpop.f32.mrf.mxu0
    %v5510 = vadd.f32 %v5421, %v5509
    %5511 = vmatmul.bf16.gmra.mxu0 %v1295
    %v5512 = vpop.f32.mrf.mxu0
    %v5513 = vadd.f32 %v5424, %v5512
    %v5514 = vpop.f32.mrf.mxu0
    %v5515 = vadd.f32 %v5426, %v5514
    %5516 = vmatmul.bf16.gmra.mxu0 %v1303
    %v5517 = vpop.f32.mrf.mxu0
    %v5518 = vadd.f32 %v5429, %v5517
    %v5519 = vpop.f32.mrf.mxu0
    %v5520 = vadd.f32 %v5431, %v5519
    %5521 = vdwg.mxu0
    %5522 = vmatpush.bf16.msra.mxu0 %v2563
    %5523 = vmatpush.bf16.msra.mxu0 %v2559
    %5524 = vmatpush.bf16.msra.mxu0 %v2555
    %5525 = vmatpush.bf16.msra.mxu0 %v2551
    %5526 = vmatpush.bf16.msra.mxu0 %v2547
    %5527 = vmatpush.bf16.msra.mxu0 %v2543
    %5528 = vmatpush.bf16.msra.mxu0 %v2539
    %5529 = vmatpush.bf16.msra.mxu0 %v2535
    %5530 = vmatmul.bf16.gmra.mxu0 %v1184
    %v5531 = vpop.f32.mrf.mxu0
    %v5532 = vadd.f32 %v5443, %v5531
    %v5533 = vpop.f32.mrf.mxu0
    %v5534 = vadd.f32 %v5445, %v5533
    %5535 = vmatmul.bf16.gmra.mxu0 %v1192
    %v5536 = vpop.f32.mrf.mxu0
    %v5537 = vadd.f32 %v5448, %v5536
    %v5538 = vpop.f32.mrf.mxu0
    %v5539 = vadd.f32 %v5450, %v5538
    %5540 = vmatmul.bf16.gmra.mxu0 %v1200
    %v5541 = vpop.f32.mrf.mxu0
    %v5542 = vadd.f32 %v5453, %v5541
    %v5543 = vpop.f32.mrf.mxu0
    %v5544 = vadd.f32 %v5455, %v5543
    %5545 = vmatmul.bf16.gmra.mxu0 %v1208
    %v5546 = vpop.f32.mrf.mxu0
    %v5547 = vadd.f32 %v5458, %v5546
    %v5548 = vpop.f32.mrf.mxu0
    %v5549 = vadd.f32 %v5460, %v5548
    %5550 = vmatmul.bf16.gmra.mxu0 %v1216
    %v5551 = vpop.f32.mrf.mxu0
    %v5552 = vadd.f32 %v5463, %v5551
    %v5553 = vpop.f32.mrf.mxu0
    %v5554 = vadd.f32 %v5465, %v5553
    %5555 = vmatmul.bf16.gmra.mxu0 %v1224
    %v5556 = vpop.f32.mrf.mxu0
    %v5557 = vadd.f32 %v5468, %v5556
    %v5558 = vpop.f32.mrf.mxu0
    %v5559 = vadd.f32 %v5470, %v5558
    %5560 = vmatmul.bf16.gmra.mxu0 %v1232
    %v5561 = vpop.f32.mrf.mxu0
    %v5562 = vadd.f32 %v5473, %v5561
    %v5563 = vpop.f32.mrf.mxu0
    %v5564 = vadd.f32 %v5475, %v5563
    %5565 = vmatmul.bf16.gmra.mxu0 %v1240
    %v5566 = vpop.f32.mrf.mxu0
    %v5567 = vadd.f32 %v5478, %v5566
    %v5568 = vpop.f32.mrf.mxu0
    %v5569 = vadd.f32 %v5480, %v5568
    %5570 = vmatmul.bf16.gmra.mxu0 %v1248
    %v5571 = vpop.f32.mrf.mxu0
    %v5572 = vadd.f32 %v5483, %v5571
    %v5573 = vpop.f32.mrf.mxu0
    %v5574 = vadd.f32 %v5485, %v5573
    %5575 = vmatmul.bf16.gmra.mxu0 %v1256
    %v5576 = vpop.f32.mrf.mxu0
    %v5577 = vadd.f32 %v5488, %v5576
    %v5578 = vpop.f32.mrf.mxu0
    %v5579 = vadd.f32 %v5490, %v5578
    %5580 = vmatmul.bf16.gmra.mxu0 %v1264
    %v5581 = vpop.f32.mrf.mxu0
    %v5582 = vadd.f32 %v5493, %v5581
    %v5583 = vpop.f32.mrf.mxu0
    %v5584 = vadd.f32 %v5495, %v5583
    %5585 = vmatmul.bf16.gmra.mxu0 %v1272
    %v5586 = vpop.f32.mrf.mxu0
    %v5587 = vadd.f32 %v5498, %v5586
    %v5588 = vpop.f32.mrf.mxu0
    %v5589 = vadd.f32 %v5500, %v5588
    %5590 = vmatmul.bf16.gmra.mxu0 %v1280
    %v5591 = vpop.f32.mrf.mxu0
    %v5592 = vadd.f32 %v5503, %v5591
    %v5593 = vpop.f32.mrf.mxu0
    %v5594 = vadd.f32 %v5505, %v5593
    %5595 = vmatmul.bf16.gmra.mxu0 %v1288
    %v5596 = vpop.f32.mrf.mxu0
    %v5597 = vadd.f32 %v5508, %v5596
    %v5598 = vpop.f32.mrf.mxu0
    %v5599 = vadd.f32 %v5510, %v5598
    %5600 = vmatmul.bf16.gmra.mxu0 %v1296
    %v5601 = vpop.f32.mrf.mxu0
    %v5602 = vadd.f32 %v5513, %v5601
    %v5603 = vpop.f32.mrf.mxu0
    %v5604 = vadd.f32 %v5515, %v5603
    %5605 = vmatmul.bf16.gmra.mxu0 %v1304
    %v5606 = vpop.f32.mrf.mxu0
    %v5607 = vadd.f32 %v5518, %v5606
    %v5608 = vpop.f32.mrf.mxu0
    %v5609 = vadd.f32 %v5520, %v5608
    %5610 = vdwg.mxu0
    %5611 = vmatpush.bf16.msra.mxu0 %v2595
    %5612 = vmatpush.bf16.msra.mxu0 %v2591
    %5613 = vmatpush.bf16.msra.mxu0 %v2587
    %5614 = vmatpush.bf16.msra.mxu0 %v2583
    %5615 = vmatpush.bf16.msra.mxu0 %v2579
    %5616 = vmatpush.bf16.msra.mxu0 %v2575
    %5617 = vmatpush.bf16.msra.mxu0 %v2571
    %5618 = vmatpush.bf16.msra.mxu0 %v2567
    %5619 = vmatmul.bf16.gmra.mxu0 %v1185
    %v5620 = vpop.f32.mrf.mxu0
    %v5621 = vadd.f32 %v5532, %v5620
    %v5622 = vpop.f32.mrf.mxu0
    %v5623 = vadd.f32 %v5534, %v5622
    %5624 = vmatmul.bf16.gmra.mxu0 %v1193
    %v5625 = vpop.f32.mrf.mxu0
    %v5626 = vadd.f32 %v5537, %v5625
    %v5627 = vpop.f32.mrf.mxu0
    %v5628 = vadd.f32 %v5539, %v5627
    %5629 = vmatmul.bf16.gmra.mxu0 %v1201
    %v5630 = vpop.f32.mrf.mxu0
    %v5631 = vadd.f32 %v5542, %v5630
    %v5632 = vpop.f32.mrf.mxu0
    %v5633 = vadd.f32 %v5544, %v5632
    %5634 = vmatmul.bf16.gmra.mxu0 %v1209
    %v5635 = vpop.f32.mrf.mxu0
    %v5636 = vadd.f32 %v5547, %v5635
    %v5637 = vpop.f32.mrf.mxu0
    %v5638 = vadd.f32 %v5549, %v5637
    %5639 = vmatmul.bf16.gmra.mxu0 %v1217
    %v5640 = vpop.f32.mrf.mxu0
    %v5641 = vadd.f32 %v5552, %v5640
    %v5642 = vpop.f32.mrf.mxu0
    %v5643 = vadd.f32 %v5554, %v5642
    %5644 = vmatmul.bf16.gmra.mxu0 %v1225
    %v5645 = vpop.f32.mrf.mxu0
    %v5646 = vadd.f32 %v5557, %v5645
    %v5647 = vpop.f32.mrf.mxu0
    %v5648 = vadd.f32 %v5559, %v5647
    %5649 = vmatmul.bf16.gmra.mxu0 %v1233
    %v5650 = vpop.f32.mrf.mxu0
    %v5651 = vadd.f32 %v5562, %v5650
    %v5652 = vpop.f32.mrf.mxu0
    %v5653 = vadd.f32 %v5564, %v5652
    %5654 = vmatmul.bf16.gmra.mxu0 %v1241
    %v5655 = vpop.f32.mrf.mxu0
    %v5656 = vadd.f32 %v5567, %v5655
    %v5657 = vpop.f32.mrf.mxu0
    %v5658 = vadd.f32 %v5569, %v5657
    %5659 = vmatmul.bf16.gmra.mxu0 %v1249
    %v5660 = vpop.f32.mrf.mxu0
    %v5661 = vadd.f32 %v5572, %v5660
    %v5662 = vpop.f32.mrf.mxu0
    %v5663 = vadd.f32 %v5574, %v5662
    %5664 = vmatmul.bf16.gmra.mxu0 %v1257
    %v5665 = vpop.f32.mrf.mxu0
    %v5666 = vadd.f32 %v5577, %v5665
    %v5667 = vpop.f32.mrf.mxu0
    %v5668 = vadd.f32 %v5579, %v5667
    %5669 = vmatmul.bf16.gmra.mxu0 %v1265
    %v5670 = vpop.f32.mrf.mxu0
    %v5671 = vadd.f32 %v5582, %v5670
    %v5672 = vpop.f32.mrf.mxu0
    %v5673 = vadd.f32 %v5584, %v5672
    %5674 = vmatmul.bf16.gmra.mxu0 %v1273
    %v5675 = vpop.f32.mrf.mxu0
    %v5676 = vadd.f32 %v5587, %v5675
    %v5677 = vpop.f32.mrf.mxu0
    %v5678 = vadd.f32 %v5589, %v5677
    %5679 = vmatmul.bf16.gmra.mxu0 %v1281
    %v5680 = vpop.f32.mrf.mxu0
    %v5681 = vadd.f32 %v5592, %v5680
    %v5682 = vpop.f32.mrf.mxu0
    %v5683 = vadd.f32 %v5594, %v5682
    %5684 = vmatmul.bf16.gmra.mxu0 %v1289
    %v5685 = vpop.f32.mrf.mxu0
    %v5686 = vadd.f32 %v5597, %v5685
    %v5687 = vpop.f32.mrf.mxu0
    %v5688 = vadd.f32 %v5599, %v5687
    %5689 = vmatmul.bf16.gmra.mxu0 %v1297
    %v5690 = vpop.f32.mrf.mxu0
    %v5691 = vadd.f32 %v5602, %v5690
    %v5692 = vpop.f32.mrf.mxu0
    %v5693 = vadd.f32 %v5604, %v5692
    %5694 = vmatmul.bf16.gmra.mxu0 %v1305
    %v5695 = vpop.f32.mrf.mxu0
    %v5696 = vadd.f32 %v5607, %v5695
    %v5697 = vpop.f32.mrf.mxu0
    %v5698 = vadd.f32 %v5609, %v5697
    %5699 = vdwg.mxu0
    %v5700 = vmax.f32 %v3485, 0.0
    %v5701 = vmax.f32 %v4197, 0.0
    %v5702 = vmax.f32 %v4909, 0.0
    %v5703 = vmax.f32 %v5621, 0.0
    %v5704 = vmax.f32 %v3487, 0.0
    %v5705 = vmax.f32 %v4199, 0.0
    %v5706 = vmax.f32 %v4911, 0.0
    %v5707 = vmax.f32 %v5623, 0.0
    %v5708 = vmax.f32 %v3490, 0.0
    %v5709 = vmax.f32 %v4202, 0.0
    %v5710 = vmax.f32 %v4914, 0.0
    %v5711 = vmax.f32 %v5626, 0.0
    %v5712 = vmax.f32 %v3492, 0.0
    %v5713 = vmax.f32 %v4204, 0.0
    %v5714 = vmax.f32 %v4916, 0.0
    %v5715 = vmax.f32 %v5628, 0.0
    %v5716 = vmax.f32 %v3495, 0.0
    %v5717 = vmax.f32 %v4207, 0.0
    %v5718 = vmax.f32 %v4919, 0.0
    %v5719 = vmax.f32 %v5631, 0.0
    %v5720 = vmax.f32 %v3497, 0.0
    %v5721 = vmax.f32 %v4209, 0.0
    %v5722 = vmax.f32 %v4921, 0.0
    %v5723 = vmax.f32 %v5633, 0.0
    %v5724 = vmax.f32 %v3500, 0.0
    %v5725 = vmax.f32 %v4212, 0.0
    %v5726 = vmax.f32 %v4924, 0.0
    %v5727 = vmax.f32 %v5636, 0.0
    %v5728 = vmax.f32 %v3502, 0.0
    %v5729 = vmax.f32 %v4214, 0.0
    %v5730 = vmax.f32 %v4926, 0.0
    %v5731 = vmax.f32 %v5638, 0.0
    %v5732 = vmax.f32 %v3505, 0.0
    %v5733 = vmax.f32 %v4217, 0.0
    %v5734 = vmax.f32 %v4929, 0.0
    %v5735 = vmax.f32 %v5641, 0.0
    %v5736 = vmax.f32 %v3507, 0.0
    %v5737 = vmax.f32 %v4219, 0.0
    %v5738 = vmax.f32 %v4931, 0.0
    %v5739 = vmax.f32 %v5643, 0.0
    %v5740 = vmax.f32 %v3510, 0.0
    %v5741 = vmax.f32 %v4222, 0.0
    %v5742 = vmax.f32 %v4934, 0.0
    %v5743 = vmax.f32 %v5646, 0.0
    %v5744 = vmax.f32 %v3512, 0.0
    %v5745 = vmax.f32 %v4224, 0.0
    %v5746 = vmax.f32 %v4936, 0.0
    %v5747 = vmax.f32 %v5648, 0.0
    %v5748 = vmax.f32 %v3515, 0.0
    %v5749 = vmax.f32 %v4227, 0.0
    %v5750 = vmax.f32 %v4939, 0.0
    %v5751 = vmax.f32 %v5651, 0.0
    %v5752 = vmax.f32 %v3517, 0.0
    %v5753 = vmax.f32 %v4229, 0.0
    %v5754 = vmax.f32 %v4941, 0.0
    %v5755 = vmax.f32 %v5653, 0.0
    %v5756 = vmax.f32 %v3520, 0.0
    %v5757 = vmax.f32 %v4232, 0.0
    %v5758 = vmax.f32 %v4944, 0.0
    %v5759 = vmax.f32 %v5656, 0.0
    %v5760 = vmax.f32 %v3522, 0.0
    %v5761 = vmax.f32 %v4234, 0.0
    %v5762 = vmax.f32 %v4946, 0.0
    %v5763 = vmax.f32 %v5658, 0.0
    %v5764 = vmax.f32 %v3525, 0.0
    %v5765 = vmax.f32 %v4237, 0.0
    %v5766 = vmax.f32 %v4949, 0.0
    %v5767 = vmax.f32 %v5661, 0.0
    %v5768 = vmax.f32 %v3527, 0.0
    %v5769 = vmax.f32 %v4239, 0.0
    %v5770 = vmax.f32 %v4951, 0.0
    %v5771 = vmax.f32 %v5663, 0.0
    %v5772 = vmax.f32 %v3530, 0.0
    %v5773 = vmax.f32 %v4242, 0.0
    %v5774 = vmax.f32 %v4954, 0.0
    %v5775 = vmax.f32 %v5666, 0.0
    %v5776 = vmax.f32 %v3532, 0.0
    %v5777 = vmax.f32 %v4244, 0.0
    %v5778 = vmax.f32 %v4956, 0.0
    %v5779 = vmax.f32 %v5668, 0.0
    %v5780 = vmax.f32 %v3535, 0.0
    %v5781 = vmax.f32 %v4247, 0.0
    %v5782 = vmax.f32 %v4959, 0.0
    %v5783 = vmax.f32 %v5671, 0.0
    %v5784 = vmax.f32 %v3537, 0.0
    %v5785 = vmax.f32 %v4249, 0.0
    %v5786 = vmax.f32 %v4961, 0.0
    %v5787 = vmax.f32 %v5673, 0.0
    %v5788 = vmax.f32 %v3540, 0.0
    %v5789 = vmax.f32 %v4252, 0.0
    %v5790 = vmax.f32 %v4964, 0.0
    %v5791 = vmax.f32 %v5676, 0.0
    %v5792 = vmax.f32 %v3542, 0.0
    %v5793 = vmax.f32 %v4254, 0.0
    %v5794 = vmax.f32 %v4966, 0.0
    %v5795 = vmax.f32 %v5678, 0.0
    %v5796 = vmax.f32 %v3545, 0.0
    %v5797 = vmax.f32 %v4257, 0.0
    %v5798 = vmax.f32 %v4969, 0.0
    %v5799 = vmax.f32 %v5681, 0.0
    %v5800 = vmax.f32 %v3547, 0.0
    %v5801 = vmax.f32 %v4259, 0.0
    %v5802 = vmax.f32 %v4971, 0.0
    %v5803 = vmax.f32 %v5683, 0.0
    %v5804 = vmax.f32 %v3550, 0.0
    %v5805 = vmax.f32 %v4262, 0.0
    %v5806 = vmax.f32 %v4974, 0.0
    %v5807 = vmax.f32 %v5686, 0.0
    %v5808 = vmax.f32 %v3552, 0.0
    %v5809 = vmax.f32 %v4264, 0.0
    %v5810 = vmax.f32 %v4976, 0.0
    %v5811 = vmax.f32 %v5688, 0.0
    %v5812 = vmax.f32 %v3555, 0.0
    %v5813 = vmax.f32 %v4267, 0.0
    %v5814 = vmax.f32 %v4979, 0.0
    %v5815 = vmax.f32 %v5691, 0.0
    %v5816 = vmax.f32 %v3557, 0.0
    %v5817 = vmax.f32 %v4269, 0.0
    %v5818 = vmax.f32 %v4981, 0.0
    %v5819 = vmax.f32 %v5693, 0.0
    %v5820 = vmax.f32 %v3560, 0.0
    %v5821 = vmax.f32 %v4272, 0.0
    %v5822 = vmax.f32 %v4984, 0.0
    %v5823 = vmax.f32 %v5696, 0.0
    %v5824 = vmax.f32 %v3562, 0.0
    %v5825 = vmax.f32 %v4274, 0.0
    %v5826 = vmax.f32 %v4986, 0.0
    %v5827 = vmax.f32 %v5698, 0.0
    %v5828 = vld [vmem:[%s5] sm:$0xf]
    %v5829 = vld [vmem:[#allocation2] sm:$0x1]
    %5831 = vset.pattern.permute.xlu0 0
    %5832 = vperm.xlu0 %5831, %v5829
    %v5833 = vpop.permute.xlu0 %5832
    %v5835 = vperm.slane %v5833, 0
    %v5837 = vperm.slane %v5828, 0
    %v5838 = vperm.slane %v5828, 1
    %v5839 = vperm.slane %v5828, 2
    %v5840 = vperm.slane %v5828, 3
    %5845 = vmatpush.xpose.msra.mxu0 %v5760
    %5846 = vmatpush.xpose.msra.mxu0 %v5756
    %5847 = vmatpush.xpose.msra.mxu0 %v5752
    %5848 = vmatpush.xpose.msra.mxu0 %v5748
    %5849 = vmatpush.xpose.msra.mxu0 %v5744
    %5850 = vmatpush.xpose.msra.mxu0 %v5740
    %5851 = vmatpush.xpose.msra.mxu0 %v5736
    %5852 = vmatpush.xpose.msra.mxu0 %v5732
    %5853 = vmatpush.xpose.msra.mxu0 %v5728
    %5854 = vmatpush.xpose.msra.mxu0 %v5724
    %5855 = vmatpush.xpose.msra.mxu0 %v5720
    %5856 = vmatpush.xpose.msra.mxu0 %v5716
    %5857 = vmatpush.xpose.msra.mxu0 %v5712
    %5858 = vmatpush.xpose.msra.mxu0 %v5708
    %5859 = vmatpush.xpose.msra.mxu0 %v5704
    %5860 = vmatpush.xpose.msra.mxu0 %v5700
    %5861 = vmatmul.f32.gmra.mxu0 %v5837
    %v5862 = vpop.f32.mrf.mxu0
    %v5863 = vadd.f32 %v5835, %v5862
    %5864 = vdwg.mxu0
    %5865 = vmatpush.xpose.msra.mxu0 %v5761
    %5866 = vmatpush.xpose.msra.mxu0 %v5757
    %5867 = vmatpush.xpose.msra.mxu0 %v5753
    %5868 = vmatpush.xpose.msra.mxu0 %v5749
    %5869 = vmatpush.xpose.msra.mxu0 %v5745
    %5870 = vmatpush.xpose.msra.mxu0 %v5741
    %5871 = vmatpush.xpose.msra.mxu0 %v5737
    %5872 = vmatpush.xpose.msra.mxu0 %v5733
    %5873 = vmatpush.xpose.msra.mxu0 %v5729
    %5874 = vmatpush.xpose.msra.mxu0 %v5725
    %5875 = vmatpush.xpose.msra.mxu0 %v5721
    %5876 = vmatpush.xpose.msra.mxu0 %v5717
    %5877 = vmatpush.xpose.msra.mxu0 %v5713
    %5878 = vmatpush.xpose.msra.mxu0 %v5709
    %5879 = vmatpush.xpose.msra.mxu0 %v5705
    %5880 = vmatpush.xpose.msra.mxu0 %v5701
    %5881 = vmatmul.f32.gmra.mxu0 %v5838
    %v5882 = vpop.f32.mrf.mxu0
    %v5883 = vadd.f32 %v5863, %v5882
    %5884 = vdwg.mxu0
    %5885 = vmatpush.xpose.msra.mxu0 %v5762
    %5886 = vmatpush.xpose.msra.mxu0 %v5758
    %5887 = vmatpush.xpose.msra.mxu0 %v5754
    %5888 = vmatpush.xpose.msra.mxu0 %v5750
    %5889 = vmatpush.xpose.msra.mxu0 %v5746
    %5890 = vmatpush.xpose.msra.mxu0 %v5742
    %5891 = vmatpush.xpose.msra.mxu0 %v5738
    %5892 = vmatpush.xpose.msra.mxu0 %v5734
    %5893 = vmatpush.xpose.msra.mxu0 %v5730
    %5894 = vmatpush.xpose.msra.mxu0 %v5726
    %5895 = vmatpush.xpose.msra.mxu0 %v5722
    %5896 = vmatpush.xpose.msra.mxu0 %v5718
    %5897 = vmatpush.xpose.msra.mxu0 %v5714
    %5898 = vmatpush.xpose.msra.mxu0 %v5710
    %5899 = vmatpush.xpose.msra.mxu0 %v5706
    %5900 = vmatpush.xpose.msra.mxu0 %v5702
    %5901 = vmatmul.f32.gmra.mxu0 %v5839
    %v5902 = vpop.f32.mrf.mxu0
    %v5903 = vadd.f32 %v5883, %v5902
    %5904 = vdwg.mxu0
    %5905 = vmatpush.xpose.msra.mxu0 %v5763
    %5906 = vmatpush.xpose.msra.mxu0 %v5759
    %5907 = vmatpush.xpose.msra.mxu0 %v5755
    %5908 = vmatpush.xpose.msra.mxu0 %v5751
    %5909 = vmatpush.xpose.msra.mxu0 %v5747
    %5910 = vmatpush.xpose.msra.mxu0 %v5743
    %5911 = vmatpush.xpose.msra.mxu0 %v5739
    %5912 = vmatpush.xpose.msra.mxu0 %v5735
    %5913 = vmatpush.xpose.msra.mxu0 %v5731
    %5914 = vmatpush.xpose.msra.mxu0 %v5727
    %5915 = vmatpush.xpose.msra.mxu0 %v5723
    %5916 = vmatpush.xpose.msra.mxu0 %v5719
    %5917 = vmatpush.xpose.msra.mxu0 %v5715
    %5918 = vmatpush.xpose.msra.mxu0 %v5711
    %5919 = vmatpush.xpose.msra.mxu0 %v5707
    %5920 = vmatpush.xpose.msra.mxu0 %v5703
    %5921 = vmatmul.f32.gmra.mxu0 %v5840
    %v5922 = vpop.f32.mrf.mxu0
    %v5923 = vadd.f32 %v5903, %v5922
    %5924 = vdwg.mxu0
    %5925 = vmatpush.xpose.msra.mxu0 %v5824
    %5926 = vmatpush.xpose.msra.mxu0 %v5820
    %5927 = vmatpush.xpose.msra.mxu0 %v5816
    %5928 = vmatpush.xpose.msra.mxu0 %v5812
    %5929 = vmatpush.xpose.msra.mxu0 %v5808
    %5930 = vmatpush.xpose.msra.mxu0 %v5804
    %5931 = vmatpush.xpose.msra.mxu0 %v5800
    %5932 = vmatpush.xpose.msra.mxu0 %v5796
    %5933 = vmatpush.xpose.msra.mxu0 %v5792
    %5934 = vmatpush.xpose.msra.mxu0 %v5788
    %5935 = vmatpush.xpose.msra.mxu0 %v5784
    %5936 = vmatpush.xpose.msra.mxu0 %v5780
    %5937 = vmatpush.xpose.msra.mxu0 %v5776
    %5938 = vmatpush.xpose.msra.mxu0 %v5772
    %5939 = vmatpush.xpose.msra.mxu0 %v5768
    %5940 = vmatpush.xpose.msra.mxu0 %v5764
    %5941 = vmatmul.f32.gmra.mxu0 %v5837
    %v5942 = vpop.f32.mrf.mxu0
    %v5943 = vadd.f32 %v5835, %v5942
    %5944 = vdwg.mxu0
    %5945 = vmatpush.xpose.msra.mxu0 %v5825
    %5946 = vmatpush.xpose.msra.mxu0 %v5821
    %5947 = vmatpush.xpose.msra.mxu0 %v5817
    %5948 = vmatpush.xpose.msra.mxu0 %v5813
    %5949 = vmatpush.xpose.msra.mxu0 %v5809
    %5950 = vmatpush.xpose.msra.mxu0 %v5805
    %5951 = vmatpush.xpose.msra.mxu0 %v5801
    %5952 = vmatpush.xpose.msra.mxu0 %v5797
    %5953 = vmatpush.xpose.msra.mxu0 %v5793
    %5954 = vmatpush.xpose.msra.mxu0 %v5789
    %5955 = vmatpush.xpose.msra.mxu0 %v5785
    %5956 = vmatpush.xpose.msra.mxu0 %v5781
    %5957 = vmatpush.xpose.msra.mxu0 %v5777
    %5958 = vmatpush.xpose.msra.mxu0 %v5773
    %5959 = vmatpush.xpose.msra.mxu0 %v5769
    %5960 = vmatpush.xpose.msra.mxu0 %v5765
    %5961 = vmatmul.f32.gmra.mxu0 %v5838
    %v5962 = vpop.f32.mrf.mxu0
    %v5963 = vadd.f32 %v5943, %v5962
    %5964 = vdwg.mxu0
    %5965 = vmatpush.xpose.msra.mxu0 %v5826
    %5966 = vmatpush.xpose.msra.mxu0 %v5822
    %5967 = vmatpush.xpose.msra.mxu0 %v5818
    %5968 = vmatpush.xpose.msra.mxu0 %v5814
    %5969 = vmatpush.xpose.msra.mxu0 %v5810
    %5970 = vmatpush.xpose.msra.mxu0 %v5806
    %5971 = vmatpush.xpose.msra.mxu0 %v5802
    %5972 = vmatpush.xpose.msra.mxu0 %v5798
    %5973 = vmatpush.xpose.msra.mxu0 %v5794
    %5974 = vmatpush.xpose.msra.mxu0 %v5790
    %5975 = vmatpush.xpose.msra.mxu0 %v5786
    %5976 = vmatpush.xpose.msra.mxu0 %v5782
    %5977 = vmatpush.xpose.msra.mxu0 %v5778
    %5978 = vmatpush.xpose.msra.mxu0 %v5774
    %5979 = vmatpush.xpose.msra.mxu0 %v5770
    %5980 = vmatpush.xpose.msra.mxu0 %v5766
    %5981 = vmatmul.f32.gmra.mxu0 %v5839
    %v5982 = vpop.f32.mrf.mxu0
    %v5983 = vadd.f32 %v5963, %v5982
    %5984 = vdwg.mxu0
    %5985 = vmatpush.xpose.msra.mxu0 %v5827
    %5986 = vmatpush.xpose.msra.mxu0 %v5823
    %5987 = vmatpush.xpose.msra.mxu0 %v5819
    %5988 = vmatpush.xpose.msra.mxu0 %v5815
    %5989 = vmatpush.xpose.msra.mxu0 %v5811
    %5990 = vmatpush.xpose.msra.mxu0 %v5807
    %5991 = vmatpush.xpose.msra.mxu0 %v5803
    %5992 = vmatpush.xpose.msra.mxu0 %v5799
    %5993 = vmatpush.xpose.msra.mxu0 %v5795
    %5994 = vmatpush.xpose.msra.mxu0 %v5791
    %5995 = vmatpush.xpose.msra.mxu0 %v5787
    %5996 = vmatpush.xpose.msra.mxu0 %v5783
    %5997 = vmatpush.xpose.msra.mxu0 %v5779
    %5998 = vmatpush.xpose.msra.mxu0 %v5775
    %5999 = vmatpush.xpose.msra.mxu0 %v5771
    %6000 = vmatpush.xpose.msra.mxu0 %v5767
    %6001 = vmatmul.f32.gmra.mxu0 %v5840
    %v6002 = vpop.f32.mrf.mxu0
    %v6003 = vadd.f32 %v5983, %v6002
    %6004 = vdwg.mxu0
    %v6007 = vrot.slane %v6003, 7
    %vm6008 = vcmask 1040384
    %v6009 = vsel %vm6008, %v5923, %v6007
    %v6011 = vlaneseq
    %vm6012 = vcmp.ge.s32.totalorder %v6011, 0
    %vm6013 = vcmp.lt.s32.totalorder %v6011, 256
    %vm6014 = vmand %vm6012, %vm6013
    %6015 = vst.msk [vmem:[#allocation6] sm:$0x3] %vm6014, %v6009
    // Predicated region
    $region34: #{tpu_custom_call.1} parent=1 // pred_check
      _
    $region35: #{tpu_custom_call.1} parent=1 // pred_check_branch
      %6017 = sbr.rel (0) target = $region37
    $region36: #{tpu_custom_call.1} parent=1 // pred_region
      %6019 = vsyncadd [#allocation5], 0
      %s6021 = sshll.u32 [#allocation6], 4
      %s6022 = int_to_ptr.vmem [resolvable:$true] %s6021
      %s6023 = sshll.u32 %s7, 4
      %s6024 = int_to_ptr.hbm [resolvable:$true] %s6023
      %6026 = dma.vmem_to_hbm [thread:$0]  %s6022, 32, %s6024, [#allocation5]
    $region37: #{tpu_custom_call.1} parent=1 // pred_fallthru
      _
    // Predicated region
    $region38: #{tpu_custom_call.1} parent=1 // pred_check
      _
    $region39: #{tpu_custom_call.1} parent=1 // pred_check_branch
      %6028 = sbr.rel (0) target = $region41
    $region40: #{tpu_custom_call.1} parent=1 // pred_region
      %6030 = dma.done [#allocation5], 32
    $region41: #{tpu_custom_call.1} parent=1 // pred_fallthru
      _
    %6031 = vsyncpa [#allocation4], 1
    %6032 = vsyncpa [#allocation5], 1

</llo_original>
